<compile_context>
chip_gen: v5e
topology: v5e:2x2
jax: 0.10.0
libtpu: 0.0.40
codegen_flags: <defaults>
</compile_context>

<pallas_src>
import functools

import jax
import jax.numpy as jnp
from jax.experimental import pallas as pl
from jax.experimental.pallas import tpu as pltpu


N_HIDDEN = 512      # n
N_LAYERS = 3        # n_layers (extra hidden Linear+Tanh blocks)
IN_DIM = 3          # in_dim
BATCH = 128         # small example batch
MAX_TILE_B = 256    # largest batch tile per grid step


def mlp_kernel(x_ref, w1_ref, b1_ref, wh_ref, bh_ref, wo_ref, bo_ref, o_ref,
               *, n_layers, in_dim):
    # x_ref : (tile_b, in_dim)          f32
    # w1_ref: (in_dim, n)   f32   b1_ref: (1, n) f32
    # wh_ref: (n_layers, n, n) bf16     bh_ref: (n_layers, 1, n) f32
    # wo_ref: (1, n) f32                bo_ref: (1, 1) f32
    # o_ref : (tile_b, 1)   f32
    x = x_ref[...].astype(jnp.float32)

    # ---- First layer on the VPU (K=3 would waste an entire MXU pass). ----
    h = b1_ref[...]                                   # (1, n)
    for k in range(in_dim):                           # static unroll (in_dim=3)
        h = h + x[:, k:k + 1] * w1_ref[k:k + 1, :]    # (tile_b, n)
    h = jnp.tanh(h)                                   # f32 tanh (v5e-safe)

    # ---- Hidden layers: bf16 MXU operands, f32 accumulation. ----
    for l in range(n_layers):                         # static unroll
        hb = h.astype(jnp.bfloat16)
        z = jnp.dot(hb, wh_ref[l], preferred_element_type=jnp.float32)
        h = jnp.tanh(z + bh_ref[l])                   # bh_ref[l] is (1, n)

    # ---- Output projection (N=1) as a lane reduction on the XLU/VPU. ----
    out = jnp.sum(h * wo_ref[...], axis=-1, keepdims=True) + bo_ref[...]
    o_ref[...] = out.astype(o_ref.dtype)


def mlp_forward(x, params, *, tile_b=None):
    B, in_dim = x.shape
    w1, b1, wh, bh, wo, bo = params
    n = w1.shape[1]
    n_layers = wh.shape[0]

    if tile_b is None:
        tile_b = min(B, MAX_TILE_B)
    assert B % tile_b == 0, "batch must be divisible by tile_b"
    num_tiles = B // tile_b

    kernel = functools.partial(mlp_kernel, n_layers=n_layers, in_dim=in_dim)

    # Weights use a constant index_map, so Pallas fetches them once (block
    # index never changes across the 1-D grid); with the default tile_b the
    # grid is a single step anyway, so there is no redundant weight DMA.
    return pl.pallas_call(
        kernel,
        out_shape=jax.ShapeDtypeStruct((B, 1), jnp.float32),
        grid_spec=pltpu.PrefetchScalarGridSpec(
            num_scalar_prefetch=0,
            grid=(num_tiles,),
            in_specs=[
                pl.BlockSpec((tile_b, in_dim), lambda i: (i, 0)),      # x (batch-tiled)
                pl.BlockSpec((in_dim, n), lambda i: (0, 0)),           # w1
                pl.BlockSpec((1, n), lambda i: (0, 0)),                # b1
                pl.BlockSpec((n_layers, n, n), lambda i: (0, 0, 0)),   # wh (bf16)
                pl.BlockSpec((n_layers, 1, n), lambda i: (0, 0, 0)),   # bh
                pl.BlockSpec((1, n), lambda i: (0, 0)),                # wo (row)
                pl.BlockSpec((1, 1), lambda i: (0, 0)),                # bo
            ],
            out_specs=pl.BlockSpec((tile_b, 1), lambda i: (i, 0)),
        ),
        compiler_params=pltpu.CompilerParams(
            dimension_semantics=("parallel",),
        ),
    )(x, w1, b1, wh, bh, wo, bo)


def init_params(key, n=N_HIDDEN, n_layers=N_LAYERS, in_dim=IN_DIM):
    """Init mimicking the torch module: xavier-uniform weights,
    U(-1/sqrt(fan_in), 1/sqrt(fan_in)) biases (nn.Linear default)."""
    keys = jax.random.split(key, 2 * (n_layers + 2))

    def xavier(k, fan_in, fan_out):
        limit = (6.0 / (fan_in + fan_out)) ** 0.5
        # stored (in, out) — see layout note at top
        return jax.random.uniform(k, (fan_in, fan_out), jnp.float32, -limit, limit)

    def bias(k, fan_in, fan_out):
        limit = 1.0 / (fan_in ** 0.5)
        return jax.random.uniform(k, (fan_out,), jnp.float32, -limit, limit)

    ki = iter(keys)
    w1 = xavier(next(ki), in_dim, n)                        # (in_dim, n) f32
    b1 = bias(next(ki), in_dim, n).reshape(1, n)            # (1, n) f32

    wh_list, bh_list = [], []
    for _ in range(n_layers):
        wh_list.append(xavier(next(ki), n, n))
        bh_list.append(bias(next(ki), n, n).reshape(1, n))
    wh = jnp.stack(wh_list, axis=0).astype(jnp.bfloat16)    # (n_layers, n, n) bf16 at rest
    bh = jnp.stack(bh_list, axis=0)                         # (n_layers, 1, n) f32

    wo = xavier(next(ki), n, 1).reshape(1, n)               # (1, n) f32 (row of torch (1, n))
    bo = bias(next(ki), n, 1).reshape(1, 1)                 # (1, 1) f32
    return (w1, b1, wh, bh, wo, bo)


def mlp_reference(x, params):
    """Pure-JAX reference with the same numerics (bf16 hidden matmul operands,
    f32 accumulation) as the kernel."""
    w1, b1, wh, bh, wo, bo = params
    h = jnp.tanh(x @ w1 + b1)
    for l in range(wh.shape[0]):
        z = jnp.dot(h.astype(jnp.bfloat16), wh[l],
                    preferred_element_type=jnp.float32)
        h = jnp.tanh(z + bh[l])
    return jnp.sum(h * wo, axis=-1, keepdims=True) + bo


if __name__ == "__main__":
    key = jax.random.PRNGKey(0)
    k_x, k_p = jax.random.split(key)

    x = jax.random.normal(k_x, (BATCH, IN_DIM), jnp.float32)
    params = init_params(k_p)

    out = mlp_forward(x, params)
    out = jax.block_until_ready(out)

    ref = mlp_reference(x, params)
    assert out.shape == (BATCH, 1)
    assert jnp.allclose(out, ref, atol=1e-2, rtol=1e-2), (
        float(jnp.max(jnp.abs(out - ref))))

    print("KERNEL_OK")
</pallas_src>

<mosaic_0001>
module attributes {stable_mosaic.version = 11 : i64} {
  func.func @mlp_kernel(%arg0: i32, %arg1: memref<128x3xf32, #tpu.memory_space<vmem>>, %arg2: memref<3x512xf32, #tpu.memory_space<vmem>>, %arg3: memref<1x512xf32, #tpu.memory_space<vmem>>, %arg4: memref<3x512x512xbf16, #tpu.memory_space<vmem>>, %arg5: memref<3x1x512xf32, #tpu.memory_space<vmem>>, %arg6: memref<1x512xf32, #tpu.memory_space<vmem>>, %arg7: memref<1x1xf32, #tpu.memory_space<vmem>>, %arg8: memref<128x1xf32, #tpu.memory_space<vmem>>) attributes {dimension_semantics = [#tpu.dimension_semantics<parallel>], iteration_bounds = array<i64: 1>, scalar_prefetch = 0 : i64, scratch_operands = 0 : i64, tpu.core_type = #tpu.core_type<tc>, window_params = [{transform_indices = @transform_0, window_bounds = array<i64: 128, 3>}, {pipeline_mode = #tpu.pipeline_mode<synchronous>, transform_indices = @transform_1, window_bounds = array<i64: 3, 512>}, {pipeline_mode = #tpu.pipeline_mode<synchronous>, transform_indices = @transform_2, window_bounds = array<i64: 1, 512>}, {pipeline_mode = #tpu.pipeline_mode<synchronous>, transform_indices = @transform_3, window_bounds = array<i64: 3, 512, 512>}, {pipeline_mode = #tpu.pipeline_mode<synchronous>, transform_indices = @transform_4, window_bounds = array<i64: 3, 1, 512>}, {pipeline_mode = #tpu.pipeline_mode<synchronous>, transform_indices = @transform_5, window_bounds = array<i64: 1, 512>}, {pipeline_mode = #tpu.pipeline_mode<synchronous>, transform_indices = @transform_6, window_bounds = array<i64: 1, 1>}, {transform_indices = @transform_7, window_bounds = array<i64: 128, 1>}]} {
    %c0 = arith.constant 0 : index
    %c0_0 = arith.constant 0 : index
    %0 = vector.load %arg1[%c0, %c0_0] : memref<128x3xf32, #tpu.memory_space<vmem>>, vector<128x3xf32>
    %c0_1 = arith.constant 0 : index
    %c0_2 = arith.constant 0 : index
    %1 = vector.load %arg3[%c0_1, %c0_2] : memref<1x512xf32, #tpu.memory_space<vmem>>, vector<1x512xf32>
    %2 = vector.extract_strided_slice %0 {offsets = [0, 0], sizes = [128, 1], strides = [1, 1]} : vector<128x3xf32> to vector<128x1xf32>
    %c0_3 = arith.constant 0 : index
    %c0_4 = arith.constant 0 : index
    %3 = vector.load %arg2[%c0_3, %c0_4] : memref<3x512xf32, #tpu.memory_space<vmem>>, vector<1x512xf32>
    %4 = vector.broadcast %2 : vector<128x1xf32> to vector<128x512xf32>
    %5 = vector.broadcast %3 : vector<1x512xf32> to vector<128x512xf32>
    %6 = arith.mulf %4, %5 : vector<128x512xf32>
    %7 = vector.broadcast %1 : vector<1x512xf32> to vector<128x512xf32>
    %8 = arith.addf %7, %6 : vector<128x512xf32>
    %9 = vector.extract_strided_slice %0 {offsets = [0, 1], sizes = [128, 1], strides = [1, 1]} : vector<128x3xf32> to vector<128x1xf32>
    %c1 = arith.constant 1 : index
    %c0_5 = arith.constant 0 : index
    %10 = vector.load %arg2[%c1, %c0_5] : memref<3x512xf32, #tpu.memory_space<vmem>>, vector<1x512xf32>
    %11 = vector.broadcast %9 : vector<128x1xf32> to vector<128x512xf32>
    %12 = vector.broadcast %10 : vector<1x512xf32> to vector<128x512xf32>
    %13 = arith.mulf %11, %12 : vector<128x512xf32>
    %14 = arith.addf %8, %13 : vector<128x512xf32>
    %15 = vector.extract_strided_slice %0 {offsets = [0, 2], sizes = [128, 1], strides = [1, 1]} : vector<128x3xf32> to vector<128x1xf32>
    %c2 = arith.constant 2 : index
    %c0_6 = arith.constant 0 : index
    %16 = vector.load %arg2[%c2, %c0_6] : memref<3x512xf32, #tpu.memory_space<vmem>>, vector<1x512xf32>
    %17 = vector.broadcast %15 : vector<128x1xf32> to vector<128x512xf32>
    %18 = vector.broadcast %16 : vector<1x512xf32> to vector<128x512xf32>
    %19 = arith.mulf %17, %18 : vector<128x512xf32>
    %20 = arith.addf %14, %19 : vector<128x512xf32>
    %21 = math.tanh %20 : vector<128x512xf32>
    %22 = arith.truncf %21 : vector<128x512xf32> to vector<128x512xbf16>
    %c0_7 = arith.constant 0 : index
    %c0_8 = arith.constant 0 : index
    %c0_9 = arith.constant 0 : index
    %23 = vector.load %arg4[%c0_7, %c0_8, %c0_9] : memref<3x512x512xbf16, #tpu.memory_space<vmem>>, vector<1x512x512xbf16>
    %24 = vector.shape_cast %23 : vector<1x512x512xbf16> to vector<512x512xbf16>
    %cst = arith.constant dense<0.000000e+00> : vector<128x512xf32>
    %25 = tpu.matmul %22, %24, %cst {dimension_numbers = #tpu.dot_dimension_numbers<[1], [0], [0], [1], [0, 0, 1, 1], [], []>} : vector<128x512xbf16>, vector<512x512xbf16>, vector<128x512xf32> -> vector<128x512xf32>
    %c0_10 = arith.constant 0 : index
    %c0_11 = arith.constant 0 : index
    %c0_12 = arith.constant 0 : index
    %26 = vector.load %arg5[%c0_10, %c0_11, %c0_12] : memref<3x1x512xf32, #tpu.memory_space<vmem>>, vector<1x1x512xf32>
    %27 = vector.shape_cast %26 : vector<1x1x512xf32> to vector<1x512xf32>
    %28 = vector.broadcast %27 : vector<1x512xf32> to vector<128x512xf32>
    %29 = arith.addf %25, %28 : vector<128x512xf32>
    %30 = math.tanh %29 : vector<128x512xf32>
    %31 = arith.truncf %30 : vector<128x512xf32> to vector<128x512xbf16>
    %c1_13 = arith.constant 1 : index
    %c0_14 = arith.constant 0 : index
    %c0_15 = arith.constant 0 : index
    %32 = vector.load %arg4[%c1_13, %c0_14, %c0_15] : memref<3x512x512xbf16, #tpu.memory_space<vmem>>, vector<1x512x512xbf16>
    %33 = vector.shape_cast %32 : vector<1x512x512xbf16> to vector<512x512xbf16>
    %cst_16 = arith.constant dense<0.000000e+00> : vector<128x512xf32>
    %34 = tpu.matmul %31, %33, %cst_16 {dimension_numbers = #tpu.dot_dimension_numbers<[1], [0], [0], [1], [0, 0, 1, 1], [], []>} : vector<128x512xbf16>, vector<512x512xbf16>, vector<128x512xf32> -> vector<128x512xf32>
    %c1_17 = arith.constant 1 : index
    %c0_18 = arith.constant 0 : index
    %c0_19 = arith.constant 0 : index
    %35 = vector.load %arg5[%c1_17, %c0_18, %c0_19] : memref<3x1x512xf32, #tpu.memory_space<vmem>>, vector<1x1x512xf32>
    %36 = vector.shape_cast %35 : vector<1x1x512xf32> to vector<1x512xf32>
    %37 = vector.broadcast %36 : vector<1x512xf32> to vector<128x512xf32>
    %38 = arith.addf %34, %37 : vector<128x512xf32>
    %39 = math.tanh %38 : vector<128x512xf32>
    %40 = arith.truncf %39 : vector<128x512xf32> to vector<128x512xbf16>
    %c2_20 = arith.constant 2 : index
    %c0_21 = arith.constant 0 : index
    %c0_22 = arith.constant 0 : index
    %41 = vector.load %arg4[%c2_20, %c0_21, %c0_22] : memref<3x512x512xbf16, #tpu.memory_space<vmem>>, vector<1x512x512xbf16>
    %42 = vector.shape_cast %41 : vector<1x512x512xbf16> to vector<512x512xbf16>
    %cst_23 = arith.constant dense<0.000000e+00> : vector<128x512xf32>
    %43 = tpu.matmul %40, %42, %cst_23 {dimension_numbers = #tpu.dot_dimension_numbers<[1], [0], [0], [1], [0, 0, 1, 1], [], []>} : vector<128x512xbf16>, vector<512x512xbf16>, vector<128x512xf32> -> vector<128x512xf32>
    %c2_24 = arith.constant 2 : index
    %c0_25 = arith.constant 0 : index
    %c0_26 = arith.constant 0 : index
    %44 = vector.load %arg5[%c2_24, %c0_25, %c0_26] : memref<3x1x512xf32, #tpu.memory_space<vmem>>, vector<1x1x512xf32>
    %45 = vector.shape_cast %44 : vector<1x1x512xf32> to vector<1x512xf32>
    %46 = vector.broadcast %45 : vector<1x512xf32> to vector<128x512xf32>
    %47 = arith.addf %43, %46 : vector<128x512xf32>
    %48 = math.tanh %47 : vector<128x512xf32>
    %c0_27 = arith.constant 0 : index
    %c0_28 = arith.constant 0 : index
    %49 = vector.load %arg6[%c0_27, %c0_28] : memref<1x512xf32, #tpu.memory_space<vmem>>, vector<1x512xf32>
    %50 = vector.broadcast %49 : vector<1x512xf32> to vector<128x512xf32>
    %51 = arith.mulf %48, %50 : vector<128x512xf32>
    %cst_29 = arith.constant dense<0.000000e+00> : vector<128xf32>
    %52 = vector.multi_reduction <add>, %51, %cst_29 [1] : vector<128x512xf32> to vector<128xf32>
    %53 = vector.shape_cast %52 : vector<128xf32> to vector<128x1xf32>
    %c0_30 = arith.constant 0 : index
    %c0_31 = arith.constant 0 : index
    %54 = vector.load %arg7[%c0_30, %c0_31] : memref<1x1xf32, #tpu.memory_space<vmem>>, vector<1x1xf32>
    %55 = vector.broadcast %54 : vector<1x1xf32> to vector<128x1xf32>
    %56 = arith.addf %53, %55 : vector<128x1xf32>
    %c0_32 = arith.constant 0 : index
    %c0_33 = arith.constant 0 : index
    %57 = vector.load %arg8[%c0_32, %c0_33] : memref<128x1xf32, #tpu.memory_space<vmem>>, vector<128x1xf32>
    tpu.vector_store %arg8[%c0_32, %c0_33], %56 {strides = array<i32>} : memref<128x1xf32, #tpu.memory_space<vmem>>, vector<128x1xf32>,
    return
  }
  func.func @transform_0(%arg0: i32) -> (i32, i32) {
    %c0_i32 = arith.constant 0 : i32
    %c0_i32_0 = arith.constant 0 : i32
    return %arg0, %c0_i32 : i32, i32
  }
  func.func @transform_1(%arg0: i32) -> (i32, i32) {
    %c0_i32 = arith.constant 0 : i32
    %c0_i32_0 = arith.constant 0 : i32
    %c0_i32_1 = arith.constant 0 : i32
    return %c0_i32, %c0_i32_0 : i32, i32
  }
  func.func @transform_2(%arg0: i32) -> (i32, i32) {
    %c0_i32 = arith.constant 0 : i32
    %c0_i32_0 = arith.constant 0 : i32
    %c0_i32_1 = arith.constant 0 : i32
    return %c0_i32, %c0_i32_0 : i32, i32
  }
  func.func @transform_3(%arg0: i32) -> (i32, i32, i32) {
    %c0_i32 = arith.constant 0 : i32
    %c0_i32_0 = arith.constant 0 : i32
    %c0_i32_1 = arith.constant 0 : i32
    %c0_i32_2 = arith.constant 0 : i32
    return %c0_i32, %c0_i32_0, %c0_i32_1 : i32, i32, i32
  }
  func.func @transform_4(%arg0: i32) -> (i32, i32, i32) {
    %c0_i32 = arith.constant 0 : i32
    %c0_i32_0 = arith.constant 0 : i32
    %c0_i32_1 = arith.constant 0 : i32
    %c0_i32_2 = arith.constant 0 : i32
    return %c0_i32, %c0_i32_0, %c0_i32_1 : i32, i32, i32
  }
  func.func @transform_5(%arg0: i32) -> (i32, i32) {
    %c0_i32 = arith.constant 0 : i32
    %c0_i32_0 = arith.constant 0 : i32
    %c0_i32_1 = arith.constant 0 : i32
    return %c0_i32, %c0_i32_0 : i32, i32
  }
  func.func @transform_6(%arg0: i32) -> (i32, i32) {
    %c0_i32 = arith.constant 0 : i32
    %c0_i32_0 = arith.constant 0 : i32
    %c0_i32_1 = arith.constant 0 : i32
    return %c0_i32, %c0_i32_0 : i32, i32
  }
  func.func @transform_7(%arg0: i32) -> (i32, i32) {
    %c0_i32 = arith.constant 0 : i32
    %c0_i32_0 = arith.constant 0 : i32
    return %arg0, %c0_i32 : i32, i32
  }
}

</mosaic_0001>

<llo_original>
// kernel: tpu_custom_call.1
$region0: #{tpu_custom_call.1}
  #allocation0 [shape = 'u32[]', space=smem, size = 0x4, offset = 0x4, fixed_abs, tag = 'smem constant byte address 0x4 - core index']
  #allocation1 [shape = 'u32[72,128]{1,0:T(1,128)}', space=vmem, size = 0x9000, scoped, tag = 'internal scratch']
  #allocation2 [shape = 'f32[1,1]{1,0:T(1,128)S(1)}', space=vmem, size = 0x200, scoped, tag = 'scoped memory for tpu_custom_call.1']
  %s0 = inlined_call_operand.vmem [shape: f32[128,3], index: 0, kind: input, shape index: {}]
  %s1 = inlined_call_operand.hbm [shape: f32[3,512], index: 1, kind: input, shape index: {}]
  %s2 = inlined_call_operand.hbm [shape: f32[1,512], index: 2, kind: input, shape index: {}]
  %s3 = inlined_call_operand.hbm [shape: bf16[3,512,512], index: 3, kind: input, shape index: {}]
  %s4 = inlined_call_operand.hbm [shape: f32[3,1,512], index: 4, kind: input, shape index: {}]
  %s5 = inlined_call_operand.hbm [shape: f32[1,512], index: 5, kind: input, shape index: {}]
  %s6 = inlined_call_operand.<no memory space> [shape: f32[1,1], index: 6, kind: input, shape index: {}]
  %s7 = inlined_call_operand.vmem [shape: f32[128,1], index: 7, kind: output, shape index: {}]
  %s8 = sld [smem:[#allocation0]]
  $region58: #{tpu_custom_call.1} parent=0
    _
  %s10 = ssub.s32 1, %s8
  %s11 = scalar_select 0, %s10, %s8
  %v12 = vstv %s6
  %13 = vst [vmem:[#allocation2] sm:$0x1] %v12
  $region1: #{tpu_custom_call.1} parent=0
    #allocation3 [shape = 'u8[8192]{0}', space=vmem, size = 0x2000, scoped, tag = 'input window, operand 1, single buffered']
    #allocation4 [shape = 's32[1]{0}', space=sflag, size = 0x4, scoped, tag = 'scoped memory for tpu_custom_call.1']
    #allocation5 [shape = 'u8[2048]{0}', space=vmem, size = 0x800, scoped, tag = 'input window, operand 2, single buffered']
    #allocation6 [shape = 's32[1]{0}', space=sflag, size = 0x4, scoped, tag = 'scoped memory for tpu_custom_call.1']
    #allocation7 [shape = 'u8[1572864]{0}', space=vmem, size = 0x180000, scoped, tag = 'input window, operand 3, single buffered']
    #allocation8 [shape = 'u8[6144]{0}', space=vmem, size = 0x1800, scoped, tag = 'input window, operand 4, single buffered']
    #allocation9 [shape = 's32[1]{0}', space=sflag, size = 0x4, scoped, tag = 'scoped memory for tpu_custom_call.1']
    #allocation10 [shape = 'u8[2048]{0}', space=vmem, size = 0x800, scoped, tag = 'input window, operand 5, single buffered']
    %14 = vsyncpa [#allocation4], 0
    %15 = vsyncpa [#allocation6], 0
    %16 = vsyncpa [#allocation9], 0
    // Predicated region
    $region2: #{tpu_custom_call.1} parent=1 // pred_check
      _
    $region3: #{tpu_custom_call.1} parent=1 // pred_check_branch
      %18 = sbr.rel (0) target = $region5
    $region4: #{tpu_custom_call.1} parent=1 // pred_region
      _
    $region5: #{tpu_custom_call.1} parent=1 // pred_fallthru
      _
    // Predicated region
    $region6: #{tpu_custom_call.1} parent=1 // pred_check
      _
    $region7: #{tpu_custom_call.1} parent=1 // pred_check_branch
      %20 = sbr.rel (0) target = $region9
    $region8: #{tpu_custom_call.1} parent=1 // pred_region
      %22 = vsyncadd [#allocation4], 0
      %s24 = sshll.u32 %s1, 4
      %s25 = int_to_ptr.hbm [resolvable:$true] %s24
      %s26 = sshll.u32 [#allocation3], 4
      %s27 = int_to_ptr.vmem [resolvable:$true] %s26
      %29 = dma.hbm_to_vmem [thread:$0]  %s25, 256, %s27, [#allocation4]
    $region9: #{tpu_custom_call.1} parent=1 // pred_fallthru
      _
    // Predicated region
    $region10: #{tpu_custom_call.1} parent=1 // pred_check
      _
    $region11: #{tpu_custom_call.1} parent=1 // pred_check_branch
      %31 = sbr.rel (0) target = $region13
    $region12: #{tpu_custom_call.1} parent=1 // pred_region
      %33 = vsyncadd [#allocation6], 0
      %s35 = sshll.u32 %s2, 4
      %s36 = int_to_ptr.hbm [resolvable:$true] %s35
      %s37 = sshll.u32 [#allocation5], 4
      %s38 = int_to_ptr.vmem [resolvable:$true] %s37
      %40 = dma.hbm_to_vmem [thread:$0]  %s36, 64, %s38, [#allocation6]
    $region13: #{tpu_custom_call.1} parent=1 // pred_fallthru
      _
    // Predicated region
    $region14: #{tpu_custom_call.1} parent=1 // pred_check
      _
    $region15: #{tpu_custom_call.1} parent=1 // pred_check_branch
      %42 = sbr.rel (0) target = $region17
    $region16: #{tpu_custom_call.1} parent=1 // pred_region
      %44 = vsyncadd [#allocation6], 0
      %s45 = sshll.u32 %s3, 4
      %s46 = int_to_ptr.hbm [resolvable:$true] %s45
      %s47 = sshll.u32 [#allocation7], 4
      %s48 = int_to_ptr.vmem [resolvable:$true] %s47
      %53 = dma.hbm_to_vmem [thread:$0]  %s46, 49152, %s48, [#allocation6], 256, 256, 16
    $region17: #{tpu_custom_call.1} parent=1 // pred_fallthru
      _
    // Predicated region
    $region18: #{tpu_custom_call.1} parent=1 // pred_check
      _
    $region19: #{tpu_custom_call.1} parent=1 // pred_check_branch
      %55 = sbr.rel (0) target = $region21
    $region20: #{tpu_custom_call.1} parent=1 // pred_region
      %57 = vsyncadd [#allocation9], 0
      %s58 = sshll.u32 %s4, 4
      %s59 = int_to_ptr.hbm [resolvable:$true] %s58
      %s60 = sshll.u32 [#allocation8], 4
      %s61 = int_to_ptr.vmem [resolvable:$true] %s60
      %66 = dma.hbm_to_vmem [thread:$0]  %s59, 192, %s61, [#allocation9], 64, 64, 4
    $region21: #{tpu_custom_call.1} parent=1 // pred_fallthru
      _
    // Predicated region
    $region22: #{tpu_custom_call.1} parent=1 // pred_check
      _
    $region23: #{tpu_custom_call.1} parent=1 // pred_check_branch
      %68 = sbr.rel (0) target = $region25
    $region24: #{tpu_custom_call.1} parent=1 // pred_region
      %70 = vsyncadd [#allocation9], 0
      %s72 = sshll.u32 %s5, 4
      %s73 = int_to_ptr.hbm [resolvable:$true] %s72
      %s74 = sshll.u32 [#allocation10], 4
      %s75 = int_to_ptr.vmem [resolvable:$true] %s74
      %77 = dma.hbm_to_vmem [thread:$0]  %s73, 64, %s75, [#allocation9]
    $region25: #{tpu_custom_call.1} parent=1 // pred_fallthru
      _
    // Predicated region
    $region26: #{tpu_custom_call.1} parent=1 // pred_check
      _
    $region27: #{tpu_custom_call.1} parent=1 // pred_check_branch
      %79 = sbr.rel (0) target = $region29
    $region28: #{tpu_custom_call.1} parent=1 // pred_region
      _
    $region29: #{tpu_custom_call.1} parent=1 // pred_fallthru
      _
    // Predicated region
    $region30: #{tpu_custom_call.1} parent=1 // pred_check
      _
    $region31: #{tpu_custom_call.1} parent=1 // pred_check_branch
      %81 = sbr.rel (0) target = $region33
    $region32: #{tpu_custom_call.1} parent=1 // pred_region
      %83 = dma.done [#allocation4], 256
    $region33: #{tpu_custom_call.1} parent=1 // pred_fallthru
      _
    // Predicated region
    $region34: #{tpu_custom_call.1} parent=1 // pred_check
      _
    $region35: #{tpu_custom_call.1} parent=1 // pred_check_branch
      %85 = sbr.rel (0) target = $region37
    $region36: #{tpu_custom_call.1} parent=1 // pred_region
      %87 = dma.done [#allocation6], 64
    $region37: #{tpu_custom_call.1} parent=1 // pred_fallthru
      _
    // Predicated region
    $region38: #{tpu_custom_call.1} parent=1 // pred_check
      _
    $region39: #{tpu_custom_call.1} parent=1 // pred_check_branch
      %89 = sbr.rel (0) target = $region41
    $region40: #{tpu_custom_call.1} parent=1 // pred_region
      %91 = dma.done [#allocation6], 49152
    $region41: #{tpu_custom_call.1} parent=1 // pred_fallthru
      _
    // Predicated region
    $region42: #{tpu_custom_call.1} parent=1 // pred_check
      _
    $region43: #{tpu_custom_call.1} parent=1 // pred_check_branch
      %93 = sbr.rel (0) target = $region45
    $region44: #{tpu_custom_call.1} parent=1 // pred_region
      %95 = dma.done [#allocation9], 192
    $region45: #{tpu_custom_call.1} parent=1 // pred_fallthru
      _
    // Predicated region
    $region46: #{tpu_custom_call.1} parent=1 // pred_check
      _
    $region47: #{tpu_custom_call.1} parent=1 // pred_check_branch
      %97 = sbr.rel (0) target = $region49
    $region48: #{tpu_custom_call.1} parent=1 // pred_region
      %99 = dma.done [#allocation9], 64
    $region49: #{tpu_custom_call.1} parent=1 // pred_fallthru
      _
    %v100 = vld [vmem:[%s0] sm:$0xff]
    %v101 = vld [vmem:[%s0 + $0x8] sm:$0xff]
    %v102 = vld [vmem:[%s0 + $0x10] sm:$0xff]
    %v103 = vld [vmem:[%s0 + $0x18] sm:$0xff]
    %v104 = vld [vmem:[%s0 + $0x20] sm:$0xff]
    %v105 = vld [vmem:[%s0 + $0x28] sm:$0xff]
    %v106 = vld [vmem:[%s0 + $0x30] sm:$0xff]
    %v107 = vld [vmem:[%s0 + $0x38] sm:$0xff]
    %v108 = vld [vmem:[%s0 + $0x40] sm:$0xff]
    %v109 = vld [vmem:[%s0 + $0x48] sm:$0xff]
    %v110 = vld [vmem:[%s0 + $0x50] sm:$0xff]
    %v111 = vld [vmem:[%s0 + $0x58] sm:$0xff]
    %v112 = vld [vmem:[%s0 + $0x60] sm:$0xff]
    %v113 = vld [vmem:[%s0 + $0x68] sm:$0xff]
    %v114 = vld [vmem:[%s0 + $0x70] sm:$0xff]
    %v115 = vld [vmem:[%s0 + $0x78] sm:$0xff]
    %v116 = vld [vmem:[#allocation5] sm:$0xf]
    %v117 = vld [vmem:[#allocation3] ss:$4 sm:$0xf]
    %119 = vset.pattern.permute.xlu0 0
    %120 = vperm.xlu0 %119, %v100
    %v121 = vpop.permute.xlu0 %120
    %124 = vset.pattern.permute.xlu0 0
    %125 = vperm.xlu0 %124, %v101
    %v126 = vpop.permute.xlu0 %125
    %129 = vset.pattern.permute.xlu0 0
    %130 = vperm.xlu0 %129, %v102
    %v131 = vpop.permute.xlu0 %130
    %134 = vset.pattern.permute.xlu0 0
    %135 = vperm.xlu0 %134, %v103
    %v136 = vpop.permute.xlu0 %135
    %139 = vset.pattern.permute.xlu0 0
    %140 = vperm.xlu0 %139, %v104
    %v141 = vpop.permute.xlu0 %140
    %144 = vset.pattern.permute.xlu0 0
    %145 = vperm.xlu0 %144, %v105
    %v146 = vpop.permute.xlu0 %145
    %149 = vset.pattern.permute.xlu0 0
    %150 = vperm.xlu0 %149, %v106
    %v151 = vpop.permute.xlu0 %150
    %154 = vset.pattern.permute.xlu0 0
    %155 = vperm.xlu0 %154, %v107
    %v156 = vpop.permute.xlu0 %155
    %159 = vset.pattern.permute.xlu0 0
    %160 = vperm.xlu0 %159, %v108
    %v161 = vpop.permute.xlu0 %160
    %164 = vset.pattern.permute.xlu0 0
    %165 = vperm.xlu0 %164, %v109
    %v166 = vpop.permute.xlu0 %165
    %169 = vset.pattern.permute.xlu0 0
    %170 = vperm.xlu0 %169, %v110
    %v171 = vpop.permute.xlu0 %170
    %174 = vset.pattern.permute.xlu0 0
    %175 = vperm.xlu0 %174, %v111
    %v176 = vpop.permute.xlu0 %175
    %179 = vset.pattern.permute.xlu0 0
    %180 = vperm.xlu0 %179, %v112
    %v181 = vpop.permute.xlu0 %180
    %184 = vset.pattern.permute.xlu0 0
    %185 = vperm.xlu0 %184, %v113
    %v186 = vpop.permute.xlu0 %185
    %189 = vset.pattern.permute.xlu0 0
    %190 = vperm.xlu0 %189, %v114
    %v191 = vpop.permute.xlu0 %190
    %194 = vset.pattern.permute.xlu0 0
    %195 = vperm.xlu0 %194, %v115
    %v196 = vpop.permute.xlu0 %195
    %v199 = vperm.slane %v117, 0
    %v200 = vperm.slane %v117, 1
    %v201 = vperm.slane %v117, 2
    %v202 = vperm.slane %v117, 3
    %v207 = vmul.f32 %v121, %v199
    %v208 = vmul.f32 %v121, %v200
    %v209 = vmul.f32 %v121, %v201
    %v210 = vmul.f32 %v121, %v202
    %v211 = vmul.f32 %v126, %v199
    %v212 = vmul.f32 %v126, %v200
    %v213 = vmul.f32 %v126, %v201
    %v214 = vmul.f32 %v126, %v202
    %v215 = vmul.f32 %v131, %v199
    %v216 = vmul.f32 %v131, %v200
    %v217 = vmul.f32 %v131, %v201
    %v218 = vmul.f32 %v131, %v202
    %v219 = vmul.f32 %v136, %v199
    %v220 = vmul.f32 %v136, %v200
    %v221 = vmul.f32 %v136, %v201
    %v222 = vmul.f32 %v136, %v202
    %v223 = vmul.f32 %v141, %v199
    %v224 = vmul.f32 %v141, %v200
    %v225 = vmul.f32 %v141, %v201
    %v226 = vmul.f32 %v141, %v202
    %v227 = vmul.f32 %v146, %v199
    %v228 = vmul.f32 %v146, %v200
    %v229 = vmul.f32 %v146, %v201
    %v230 = vmul.f32 %v146, %v202
    %v231 = vmul.f32 %v151, %v199
    %v232 = vmul.f32 %v151, %v200
    %v233 = vmul.f32 %v151, %v201
    %v234 = vmul.f32 %v151, %v202
    %v235 = vmul.f32 %v156, %v199
    %v236 = vmul.f32 %v156, %v200
    %v237 = vmul.f32 %v156, %v201
    %v238 = vmul.f32 %v156, %v202
    %v239 = vmul.f32 %v161, %v199
    %v240 = vmul.f32 %v161, %v200
    %v241 = vmul.f32 %v161, %v201
    %v242 = vmul.f32 %v161, %v202
    %v243 = vmul.f32 %v166, %v199
    %v244 = vmul.f32 %v166, %v200
    %v245 = vmul.f32 %v166, %v201
    %v246 = vmul.f32 %v166, %v202
    %v247 = vmul.f32 %v171, %v199
    %v248 = vmul.f32 %v171, %v200
    %v249 = vmul.f32 %v171, %v201
    %v250 = vmul.f32 %v171, %v202
    %v251 = vmul.f32 %v176, %v199
    %v252 = vmul.f32 %v176, %v200
    %v253 = vmul.f32 %v176, %v201
    %v254 = vmul.f32 %v176, %v202
    %v255 = vmul.f32 %v181, %v199
    %v256 = vmul.f32 %v181, %v200
    %v257 = vmul.f32 %v181, %v201
    %v258 = vmul.f32 %v181, %v202
    %v259 = vmul.f32 %v186, %v199
    %v260 = vmul.f32 %v186, %v200
    %v261 = vmul.f32 %v186, %v201
    %v262 = vmul.f32 %v186, %v202
    %v263 = vmul.f32 %v191, %v199
    %v264 = vmul.f32 %v191, %v200
    %v265 = vmul.f32 %v191, %v201
    %v266 = vmul.f32 %v191, %v202
    %v267 = vmul.f32 %v196, %v199
    %v268 = vmul.f32 %v196, %v200
    %v269 = vmul.f32 %v196, %v201
    %v270 = vmul.f32 %v196, %v202
    %v272 = vperm.slane %v116, 0
    %v273 = vperm.slane %v116, 1
    %v274 = vperm.slane %v116, 2
    %v275 = vperm.slane %v116, 3
    %v280 = vadd.f32 %v272, %v207
    %v281 = vadd.f32 %v273, %v208
    %v282 = vadd.f32 %v274, %v209
    %v283 = vadd.f32 %v275, %v210
    %v284 = vadd.f32 %v272, %v211
    %v285 = vadd.f32 %v273, %v212
    %v286 = vadd.f32 %v274, %v213
    %v287 = vadd.f32 %v275, %v214
    %v288 = vadd.f32 %v272, %v215
    %v289 = vadd.f32 %v273, %v216
    %v290 = vadd.f32 %v274, %v217
    %v291 = vadd.f32 %v275, %v218
    %v292 = vadd.f32 %v272, %v219
    %v293 = vadd.f32 %v273, %v220
    %v294 = vadd.f32 %v274, %v221
    %v295 = vadd.f32 %v275, %v222
    %v296 = vadd.f32 %v272, %v223
    %v297 = vadd.f32 %v273, %v224
    %v298 = vadd.f32 %v274, %v225
    %v299 = vadd.f32 %v275, %v226
    %v300 = vadd.f32 %v272, %v227
    %v301 = vadd.f32 %v273, %v228
    %v302 = vadd.f32 %v274, %v229
    %v303 = vadd.f32 %v275, %v230
    %v304 = vadd.f32 %v272, %v231
    %v305 = vadd.f32 %v273, %v232
    %v306 = vadd.f32 %v274, %v233
    %v307 = vadd.f32 %v275, %v234
    %v308 = vadd.f32 %v272, %v235
    %v309 = vadd.f32 %v273, %v236
    %v310 = vadd.f32 %v274, %v237
    %v311 = vadd.f32 %v275, %v238
    %v312 = vadd.f32 %v272, %v239
    %v313 = vadd.f32 %v273, %v240
    %v314 = vadd.f32 %v274, %v241
    %v315 = vadd.f32 %v275, %v242
    %v316 = vadd.f32 %v272, %v243
    %v317 = vadd.f32 %v273, %v244
    %v318 = vadd.f32 %v274, %v245
    %v319 = vadd.f32 %v275, %v246
    %v320 = vadd.f32 %v272, %v247
    %v321 = vadd.f32 %v273, %v248
    %v322 = vadd.f32 %v274, %v249
    %v323 = vadd.f32 %v275, %v250
    %v324 = vadd.f32 %v272, %v251
    %v325 = vadd.f32 %v273, %v252
    %v326 = vadd.f32 %v274, %v253
    %v327 = vadd.f32 %v275, %v254
    %v328 = vadd.f32 %v272, %v255
    %v329 = vadd.f32 %v273, %v256
    %v330 = vadd.f32 %v274, %v257
    %v331 = vadd.f32 %v275, %v258
    %v332 = vadd.f32 %v272, %v259
    %v333 = vadd.f32 %v273, %v260
    %v334 = vadd.f32 %v274, %v261
    %v335 = vadd.f32 %v275, %v262
    %v336 = vadd.f32 %v272, %v263
    %v337 = vadd.f32 %v273, %v264
    %v338 = vadd.f32 %v274, %v265
    %v339 = vadd.f32 %v275, %v266
    %v340 = vadd.f32 %v272, %v267
    %v341 = vadd.f32 %v273, %v268
    %v342 = vadd.f32 %v274, %v269
    %v343 = vadd.f32 %v275, %v270
    %s344 = scalar_lea.vmem [#allocation3], 1
    %v345 = vld [vmem:[%s344] ss:$4 sm:$0xf]
    %346 = vset.pattern.permute.xlu0 1
    %347 = vperm.xlu0 %346, %v100
    %v348 = vpop.permute.xlu0 %347
    %350 = vset.pattern.permute.xlu0 1
    %351 = vperm.xlu0 %350, %v101
    %v352 = vpop.permute.xlu0 %351
    %354 = vset.pattern.permute.xlu0 1
    %355 = vperm.xlu0 %354, %v102
    %v356 = vpop.permute.xlu0 %355
    %358 = vset.pattern.permute.xlu0 1
    %359 = vperm.xlu0 %358, %v103
    %v360 = vpop.permute.xlu0 %359
    %362 = vset.pattern.permute.xlu0 1
    %363 = vperm.xlu0 %362, %v104
    %v364 = vpop.permute.xlu0 %363
    %366 = vset.pattern.permute.xlu0 1
    %367 = vperm.xlu0 %366, %v105
    %v368 = vpop.permute.xlu0 %367
    %370 = vset.pattern.permute.xlu0 1
    %371 = vperm.xlu0 %370, %v106
    %v372 = vpop.permute.xlu0 %371
    %374 = vset.pattern.permute.xlu0 1
    %375 = vperm.xlu0 %374, %v107
    %v376 = vpop.permute.xlu0 %375
    %378 = vset.pattern.permute.xlu0 1
    %379 = vperm.xlu0 %378, %v108
    %v380 = vpop.permute.xlu0 %379
    %382 = vset.pattern.permute.xlu0 1
    %383 = vperm.xlu0 %382, %v109
    %v384 = vpop.permute.xlu0 %383
    %386 = vset.pattern.permute.xlu0 1
    %387 = vperm.xlu0 %386, %v110
    %v388 = vpop.permute.xlu0 %387
    %390 = vset.pattern.permute.xlu0 1
    %391 = vperm.xlu0 %390, %v111
    %v392 = vpop.permute.xlu0 %391
    %394 = vset.pattern.permute.xlu0 1
    %395 = vperm.xlu0 %394, %v112
    %v396 = vpop.permute.xlu0 %395
    %398 = vset.pattern.permute.xlu0 1
    %399 = vperm.xlu0 %398, %v113
    %v400 = vpop.permute.xlu0 %399
    %402 = vset.pattern.permute.xlu0 1
    %403 = vperm.xlu0 %402, %v114
    %v404 = vpop.permute.xlu0 %403
    %406 = vset.pattern.permute.xlu0 1
    %407 = vperm.xlu0 %406, %v115
    %v408 = vpop.permute.xlu0 %407
    %v411 = vperm.slane %v345, 0
    %v412 = vperm.slane %v345, 1
    %v413 = vperm.slane %v345, 2
    %v414 = vperm.slane %v345, 3
    %v419 = vmul.f32 %v348, %v411
    %v420 = vmul.f32 %v348, %v412
    %v421 = vmul.f32 %v348, %v413
    %v422 = vmul.f32 %v348, %v414
    %v423 = vmul.f32 %v352, %v411
    %v424 = vmul.f32 %v352, %v412
    %v425 = vmul.f32 %v352, %v413
    %v426 = vmul.f32 %v352, %v414
    %v427 = vmul.f32 %v356, %v411
    %v428 = vmul.f32 %v356, %v412
    %v429 = vmul.f32 %v356, %v413
    %v430 = vmul.f32 %v356, %v414
    %v431 = vmul.f32 %v360, %v411
    %v432 = vmul.f32 %v360, %v412
    %v433 = vmul.f32 %v360, %v413
    %v434 = vmul.f32 %v360, %v414
    %v435 = vmul.f32 %v364, %v411
    %v436 = vmul.f32 %v364, %v412
    %v437 = vmul.f32 %v364, %v413
    %v438 = vmul.f32 %v364, %v414
    %v439 = vmul.f32 %v368, %v411
    %v440 = vmul.f32 %v368, %v412
    %v441 = vmul.f32 %v368, %v413
    %v442 = vmul.f32 %v368, %v414
    %v443 = vmul.f32 %v372, %v411
    %v444 = vmul.f32 %v372, %v412
    %v445 = vmul.f32 %v372, %v413
    %v446 = vmul.f32 %v372, %v414
    %v447 = vmul.f32 %v376, %v411
    %v448 = vmul.f32 %v376, %v412
    %v449 = vmul.f32 %v376, %v413
    %v450 = vmul.f32 %v376, %v414
    %v451 = vmul.f32 %v380, %v411
    %v452 = vmul.f32 %v380, %v412
    %v453 = vmul.f32 %v380, %v413
    %v454 = vmul.f32 %v380, %v414
    %v455 = vmul.f32 %v384, %v411
    %v456 = vmul.f32 %v384, %v412
    %v457 = vmul.f32 %v384, %v413
    %v458 = vmul.f32 %v384, %v414
    %v459 = vmul.f32 %v388, %v411
    %v460 = vmul.f32 %v388, %v412
    %v461 = vmul.f32 %v388, %v413
    %v462 = vmul.f32 %v388, %v414
    %v463 = vmul.f32 %v392, %v411
    %v464 = vmul.f32 %v392, %v412
    %v465 = vmul.f32 %v392, %v413
    %v466 = vmul.f32 %v392, %v414
    %v467 = vmul.f32 %v396, %v411
    %v468 = vmul.f32 %v396, %v412
    %v469 = vmul.f32 %v396, %v413
    %v470 = vmul.f32 %v396, %v414
    %v471 = vmul.f32 %v400, %v411
    %v472 = vmul.f32 %v400, %v412
    %v473 = vmul.f32 %v400, %v413
    %v474 = vmul.f32 %v400, %v414
    %v475 = vmul.f32 %v404, %v411
    %v476 = vmul.f32 %v404, %v412
    %v477 = vmul.f32 %v404, %v413
    %v478 = vmul.f32 %v404, %v414
    %v479 = vmul.f32 %v408, %v411
    %v480 = vmul.f32 %v408, %v412
    %v481 = vmul.f32 %v408, %v413
    %v482 = vmul.f32 %v408, %v414
    %v483 = vadd.f32 %v280, %v419
    %v484 = vadd.f32 %v281, %v420
    %v485 = vadd.f32 %v282, %v421
    %v486 = vadd.f32 %v283, %v422
    %v487 = vadd.f32 %v284, %v423
    %v488 = vadd.f32 %v285, %v424
    %v489 = vadd.f32 %v286, %v425
    %v490 = vadd.f32 %v287, %v426
    %v491 = vadd.f32 %v288, %v427
    %v492 = vadd.f32 %v289, %v428
    %v493 = vadd.f32 %v290, %v429
    %v494 = vadd.f32 %v291, %v430
    %v495 = vadd.f32 %v292, %v431
    %v496 = vadd.f32 %v293, %v432
    %v497 = vadd.f32 %v294, %v433
    %v498 = vadd.f32 %v295, %v434
    %v499 = vadd.f32 %v296, %v435
    %v500 = vadd.f32 %v297, %v436
    %v501 = vadd.f32 %v298, %v437
    %v502 = vadd.f32 %v299, %v438
    %v503 = vadd.f32 %v300, %v439
    %v504 = vadd.f32 %v301, %v440
    %v505 = vadd.f32 %v302, %v441
    %v506 = vadd.f32 %v303, %v442
    %v507 = vadd.f32 %v304, %v443
    %v508 = vadd.f32 %v305, %v444
    %v509 = vadd.f32 %v306, %v445
    %v510 = vadd.f32 %v307, %v446
    %v511 = vadd.f32 %v308, %v447
    %v512 = vadd.f32 %v309, %v448
    %v513 = vadd.f32 %v310, %v449
    %v514 = vadd.f32 %v311, %v450
    %v515 = vadd.f32 %v312, %v451
    %v516 = vadd.f32 %v313, %v452
    %v517 = vadd.f32 %v314, %v453
    %v518 = vadd.f32 %v315, %v454
    %v519 = vadd.f32 %v316, %v455
    %v520 = vadd.f32 %v317, %v456
    %v521 = vadd.f32 %v318, %v457
    %v522 = vadd.f32 %v319, %v458
    %v523 = vadd.f32 %v320, %v459
    %v524 = vadd.f32 %v321, %v460
    %v525 = vadd.f32 %v322, %v461
    %v526 = vadd.f32 %v323, %v462
    %v527 = vadd.f32 %v324, %v463
    %v528 = vadd.f32 %v325, %v464
    %v529 = vadd.f32 %v326, %v465
    %v530 = vadd.f32 %v327, %v466
    %v531 = vadd.f32 %v328, %v467
    %v532 = vadd.f32 %v329, %v468
    %v533 = vadd.f32 %v330, %v469
    %v534 = vadd.f32 %v331, %v470
    %v535 = vadd.f32 %v332, %v471
    %v536 = vadd.f32 %v333, %v472
    %v537 = vadd.f32 %v334, %v473
    %v538 = vadd.f32 %v335, %v474
    %v539 = vadd.f32 %v336, %v475
    %v540 = vadd.f32 %v337, %v476
    %v541 = vadd.f32 %v338, %v477
    %v542 = vadd.f32 %v339, %v478
    %v543 = vadd.f32 %v340, %v479
    %v544 = vadd.f32 %v341, %v480
    %v545 = vadd.f32 %v342, %v481
    %v546 = vadd.f32 %v343, %v482
    %s547 = scalar_lea.vmem [#allocation3], 2
    %v548 = vld [vmem:[%s547] ss:$4 sm:$0xf]
    %549 = vset.pattern.permute.xlu0 2
    %550 = vperm.xlu0 %549, %v100
    %v551 = vpop.permute.xlu0 %550
    %553 = vset.pattern.permute.xlu0 2
    %554 = vperm.xlu0 %553, %v101
    %v555 = vpop.permute.xlu0 %554
    %557 = vset.pattern.permute.xlu0 2
    %558 = vperm.xlu0 %557, %v102
    %v559 = vpop.permute.xlu0 %558
    %561 = vset.pattern.permute.xlu0 2
    %562 = vperm.xlu0 %561, %v103
    %v563 = vpop.permute.xlu0 %562
    %565 = vset.pattern.permute.xlu0 2
    %566 = vperm.xlu0 %565, %v104
    %v567 = vpop.permute.xlu0 %566
    %569 = vset.pattern.permute.xlu0 2
    %570 = vperm.xlu0 %569, %v105
    %v571 = vpop.permute.xlu0 %570
    %573 = vset.pattern.permute.xlu0 2
    %574 = vperm.xlu0 %573, %v106
    %v575 = vpop.permute.xlu0 %574
    %577 = vset.pattern.permute.xlu0 2
    %578 = vperm.xlu0 %577, %v107
    %v579 = vpop.permute.xlu0 %578
    %581 = vset.pattern.permute.xlu0 2
    %582 = vperm.xlu0 %581, %v108
    %v583 = vpop.permute.xlu0 %582
    %585 = vset.pattern.permute.xlu0 2
    %586 = vperm.xlu0 %585, %v109
    %v587 = vpop.permute.xlu0 %586
    %589 = vset.pattern.permute.xlu0 2
    %590 = vperm.xlu0 %589, %v110
    %v591 = vpop.permute.xlu0 %590
    %593 = vset.pattern.permute.xlu0 2
    %594 = vperm.xlu0 %593, %v111
    %v595 = vpop.permute.xlu0 %594
    %597 = vset.pattern.permute.xlu0 2
    %598 = vperm.xlu0 %597, %v112
    %v599 = vpop.permute.xlu0 %598
    %601 = vset.pattern.permute.xlu0 2
    %602 = vperm.xlu0 %601, %v113
    %v603 = vpop.permute.xlu0 %602
    %605 = vset.pattern.permute.xlu0 2
    %606 = vperm.xlu0 %605, %v114
    %v607 = vpop.permute.xlu0 %606
    %609 = vset.pattern.permute.xlu0 2
    %610 = vperm.xlu0 %609, %v115
    %v611 = vpop.permute.xlu0 %610
    %v614 = vperm.slane %v548, 0
    %v615 = vperm.slane %v548, 1
    %v616 = vperm.slane %v548, 2
    %v617 = vperm.slane %v548, 3
    %v622 = vmul.f32 %v551, %v614
    %v623 = vmul.f32 %v551, %v615
    %v624 = vmul.f32 %v551, %v616
    %v625 = vmul.f32 %v551, %v617
    %v626 = vmul.f32 %v555, %v614
    %v627 = vmul.f32 %v555, %v615
    %v628 = vmul.f32 %v555, %v616
    %v629 = vmul.f32 %v555, %v617
    %v630 = vmul.f32 %v559, %v614
    %v631 = vmul.f32 %v559, %v615
    %v632 = vmul.f32 %v559, %v616
    %v633 = vmul.f32 %v559, %v617
    %v634 = vmul.f32 %v563, %v614
    %v635 = vmul.f32 %v563, %v615
    %v636 = vmul.f32 %v563, %v616
    %v637 = vmul.f32 %v563, %v617
    %v638 = vmul.f32 %v567, %v614
    %v639 = vmul.f32 %v567, %v615
    %v640 = vmul.f32 %v567, %v616
    %v641 = vmul.f32 %v567, %v617
    %v642 = vmul.f32 %v571, %v614
    %v643 = vmul.f32 %v571, %v615
    %v644 = vmul.f32 %v571, %v616
    %v645 = vmul.f32 %v571, %v617
    %v646 = vmul.f32 %v575, %v614
    %v647 = vmul.f32 %v575, %v615
    %v648 = vmul.f32 %v575, %v616
    %v649 = vmul.f32 %v575, %v617
    %v650 = vmul.f32 %v579, %v614
    %v651 = vmul.f32 %v579, %v615
    %v652 = vmul.f32 %v579, %v616
    %v653 = vmul.f32 %v579, %v617
    %v654 = vmul.f32 %v583, %v614
    %v655 = vmul.f32 %v583, %v615
    %v656 = vmul.f32 %v583, %v616
    %v657 = vmul.f32 %v583, %v617
    %v658 = vmul.f32 %v587, %v614
    %v659 = vmul.f32 %v587, %v615
    %v660 = vmul.f32 %v587, %v616
    %v661 = vmul.f32 %v587, %v617
    %v662 = vmul.f32 %v591, %v614
    %v663 = vmul.f32 %v591, %v615
    %v664 = vmul.f32 %v591, %v616
    %v665 = vmul.f32 %v591, %v617
    %v666 = vmul.f32 %v595, %v614
    %v667 = vmul.f32 %v595, %v615
    %v668 = vmul.f32 %v595, %v616
    %v669 = vmul.f32 %v595, %v617
    %v670 = vmul.f32 %v599, %v614
    %v671 = vmul.f32 %v599, %v615
    %v672 = vmul.f32 %v599, %v616
    %v673 = vmul.f32 %v599, %v617
    %v674 = vmul.f32 %v603, %v614
    %v675 = vmul.f32 %v603, %v615
    %v676 = vmul.f32 %v603, %v616
    %v677 = vmul.f32 %v603, %v617
    %v678 = vmul.f32 %v607, %v614
    %v679 = vmul.f32 %v607, %v615
    %v680 = vmul.f32 %v607, %v616
    %v681 = vmul.f32 %v607, %v617
    %v682 = vmul.f32 %v611, %v614
    %v683 = vmul.f32 %v611, %v615
    %v684 = vmul.f32 %v611, %v616
    %v685 = vmul.f32 %v611, %v617
    %v686 = vadd.f32 %v483, %v622
    %v687 = vadd.f32 %v484, %v623
    %v688 = vadd.f32 %v485, %v624
    %v689 = vadd.f32 %v486, %v625
    %v690 = vadd.f32 %v487, %v626
    %v691 = vadd.f32 %v488, %v627
    %v692 = vadd.f32 %v489, %v628
    %v693 = vadd.f32 %v490, %v629
    %v694 = vadd.f32 %v491, %v630
    %v695 = vadd.f32 %v492, %v631
    %v696 = vadd.f32 %v493, %v632
    %v697 = vadd.f32 %v494, %v633
    %v698 = vadd.f32 %v495, %v634
    %v699 = vadd.f32 %v496, %v635
    %v700 = vadd.f32 %v497, %v636
    %v701 = vadd.f32 %v498, %v637
    %v702 = vadd.f32 %v499, %v638
    %v703 = vadd.f32 %v500, %v639
    %v704 = vadd.f32 %v501, %v640
    %v705 = vadd.f32 %v502, %v641
    %v706 = vadd.f32 %v503, %v642
    %v707 = vadd.f32 %v504, %v643
    %v708 = vadd.f32 %v505, %v644
    %v709 = vadd.f32 %v506, %v645
    %v710 = vadd.f32 %v507, %v646
    %v711 = vadd.f32 %v508, %v647
    %v712 = vadd.f32 %v509, %v648
    %v713 = vadd.f32 %v510, %v649
    %v714 = vadd.f32 %v511, %v650
    %v715 = vadd.f32 %v512, %v651
    %v716 = vadd.f32 %v513, %v652
    %v717 = vadd.f32 %v514, %v653
    %v718 = vadd.f32 %v515, %v654
    %v719 = vadd.f32 %v516, %v655
    %v720 = vadd.f32 %v517, %v656
    %v721 = vadd.f32 %v518, %v657
    %v722 = vadd.f32 %v519, %v658
    %v723 = vadd.f32 %v520, %v659
    %v724 = vadd.f32 %v521, %v660
    %v725 = vadd.f32 %v522, %v661
    %v726 = vadd.f32 %v523, %v662
    %v727 = vadd.f32 %v524, %v663
    %v728 = vadd.f32 %v525, %v664
    %v729 = vadd.f32 %v526, %v665
    %v730 = vadd.f32 %v527, %v666
    %v731 = vadd.f32 %v528, %v667
    %v732 = vadd.f32 %v529, %v668
    %v733 = vadd.f32 %v530, %v669
    %v734 = vadd.f32 %v531, %v670
    %v735 = vadd.f32 %v532, %v671
    %v736 = vadd.f32 %v533, %v672
    %v737 = vadd.f32 %v534, %v673
    %v738 = vadd.f32 %v535, %v674
    %v739 = vadd.f32 %v536, %v675
    %v740 = vadd.f32 %v537, %v676
    %v741 = vadd.f32 %v538, %v677
    %v742 = vadd.f32 %v539, %v678
    %v743 = vadd.f32 %v540, %v679
    %v744 = vadd.f32 %v541, %v680
    %v745 = vadd.f32 %v542, %v681
    %v746 = vadd.f32 %v543, %v682
    %v747 = vadd.f32 %v544, %v683
    %v748 = vadd.f32 %v545, %v684
    %v749 = vadd.f32 %v546, %v685
    %v750 = vtanh.pop %v686
    %v751 = vtanh.pop %v687
    %v752 = vtanh.pop %v688
    %v753 = vtanh.pop %v689
    %v754 = vtanh.pop %v690
    %v755 = vtanh.pop %v691
    %v756 = vtanh.pop %v692
    %v757 = vtanh.pop %v693
    %v758 = vtanh.pop %v694
    %v759 = vtanh.pop %v695
    %v760 = vtanh.pop %v696
    %v761 = vtanh.pop %v697
    %v762 = vtanh.pop %v698
    %v763 = vtanh.pop %v699
    %v764 = vtanh.pop %v700
    %v765 = vtanh.pop %v701
    %v766 = vtanh.pop %v702
    %v767 = vtanh.pop %v703
    %v768 = vtanh.pop %v704
    %v769 = vtanh.pop %v705
    %v770 = vtanh.pop %v706
    %v771 = vtanh.pop %v707
    %v772 = vtanh.pop %v708
    %v773 = vtanh.pop %v709
    %v774 = vtanh.pop %v710
    %v775 = vtanh.pop %v711
    %v776 = vtanh.pop %v712
    %v777 = vtanh.pop %v713
    %v778 = vtanh.pop %v714
    %v779 = vtanh.pop %v715
    %v780 = vtanh.pop %v716
    %v781 = vtanh.pop %v717
    %v782 = vtanh.pop %v718
    %v783 = vtanh.pop %v719
    %v784 = vtanh.pop %v720
    %v785 = vtanh.pop %v721
    %v786 = vtanh.pop %v722
    %v787 = vtanh.pop %v723
    %v788 = vtanh.pop %v724
    %v789 = vtanh.pop %v725
    %v790 = vtanh.pop %v726
    %v791 = vtanh.pop %v727
    %v792 = vtanh.pop %v728
    %v793 = vtanh.pop %v729
    %v794 = vtanh.pop %v730
    %v795 = vtanh.pop %v731
    %v796 = vtanh.pop %v732
    %v797 = vtanh.pop %v733
    %v798 = vtanh.pop %v734
    %v799 = vtanh.pop %v735
    %v800 = vtanh.pop %v736
    %v801 = vtanh.pop %v737
    %v802 = vtanh.pop %v738
    %v803 = vtanh.pop %v739
    %v804 = vtanh.pop %v740
    %v805 = vtanh.pop %v741
    %v806 = vtanh.pop %v742
    %v807 = vtanh.pop %v743
    %v808 = vtanh.pop %v744
    %v809 = vtanh.pop %v745
    %v810 = vtanh.pop %v746
    %v811 = vtanh.pop %v747
    %v812 = vtanh.pop %v748
    %v813 = vtanh.pop %v749
    %v814 = vpack.c.bf16 %v754, %v750
    %v815 = vpack.c.bf16 %v755, %v751
    %v816 = vpack.c.bf16 %v756, %v752
    %v817 = vpack.c.bf16 %v757, %v753
    %v818 = vpack.c.bf16 %v762, %v758
    %v819 = vpack.c.bf16 %v763, %v759
    %v820 = vpack.c.bf16 %v764, %v760
    %v821 = vpack.c.bf16 %v765, %v761
    %v822 = vpack.c.bf16 %v770, %v766
    %v823 = vpack.c.bf16 %v771, %v767
    %v824 = vpack.c.bf16 %v772, %v768
    %v825 = vpack.c.bf16 %v773, %v769
    %v826 = vpack.c.bf16 %v778, %v774
    %v827 = vpack.c.bf16 %v779, %v775
    %v828 = vpack.c.bf16 %v780, %v776
    %v829 = vpack.c.bf16 %v781, %v777
    %v830 = vpack.c.bf16 %v786, %v782
    %v831 = vpack.c.bf16 %v787, %v783
    %v832 = vpack.c.bf16 %v788, %v784
    %v833 = vpack.c.bf16 %v789, %v785
    %v834 = vpack.c.bf16 %v794, %v790
    %v835 = vpack.c.bf16 %v795, %v791
    %v836 = vpack.c.bf16 %v796, %v792
    %v837 = vpack.c.bf16 %v797, %v793
    %v838 = vpack.c.bf16 %v802, %v798
    %v839 = vpack.c.bf16 %v803, %v799
    %v840 = vpack.c.bf16 %v804, %v800
    %v841 = vpack.c.bf16 %v805, %v801
    %v842 = vpack.c.bf16 %v810, %v806
    %v843 = vpack.c.bf16 %v811, %v807
    %v844 = vpack.c.bf16 %v812, %v808
    %v845 = vpack.c.bf16 %v813, %v809
    %v846 = vld [vmem:[#allocation7] sm:$0xff]
    %v847 = vld [vmem:[#allocation7 + $0x8] sm:$0xff]
    %v848 = vld [vmem:[#allocation7 + $0x10] sm:$0xff]
    %v849 = vld [vmem:[#allocation7 + $0x18] sm:$0xff]
    %v850 = vld [vmem:[#allocation7 + $0x20] sm:$0xff]
    %v851 = vld [vmem:[#allocation7 + $0x28] sm:$0xff]
    %v852 = vld [vmem:[#allocation7 + $0x30] sm:$0xff]
    %v853 = vld [vmem:[#allocation7 + $0x38] sm:$0xff]
    %v854 = vld [vmem:[#allocation7 + $0x40] sm:$0xff]
    %v855 = vld [vmem:[#allocation7 + $0x48] sm:$0xff]
    %v856 = vld [vmem:[#allocation7 + $0x50] sm:$0xff]
    %v857 = vld [vmem:[#allocation7 + $0x58] sm:$0xff]
    %v858 = vld [vmem:[#allocation7 + $0x60] sm:$0xff]
    %v859 = vld [vmem:[#allocation7 + $0x68] sm:$0xff]
    %v860 = vld [vmem:[#allocation7 + $0x70] sm:$0xff]
    %v861 = vld [vmem:[#allocation7 + $0x78] sm:$0xff]
    %v862 = vld [vmem:[#allocation7 + $0x80] sm:$0xff]
    %v863 = vld [vmem:[#allocation7 + $0x88] sm:$0xff]
    %v864 = vld [vmem:[#allocation7 + $0x90] sm:$0xff]
    %v865 = vld [vmem:[#allocation7 + $0x98] sm:$0xff]
    %v866 = vld [vmem:[#allocation7 + $0xa0] sm:$0xff]
    %v867 = vld [vmem:[#allocation7 + $0xa8] sm:$0xff]
    %v868 = vld [vmem:[#allocation7 + $0xb0] sm:$0xff]
    %v869 = vld [vmem:[#allocation7 + $0xb8] sm:$0xff]
    %v870 = vld [vmem:[#allocation7 + $0xc0] sm:$0xff]
    %v871 = vld [vmem:[#allocation7 + $0xc8] sm:$0xff]
    %v872 = vld [vmem:[#allocation7 + $0xd0] sm:$0xff]
    %v873 = vld [vmem:[#allocation7 + $0xd8] sm:$0xff]
    %v874 = vld [vmem:[#allocation7 + $0xe0] sm:$0xff]
    %v875 = vld [vmem:[#allocation7 + $0xe8] sm:$0xff]
    %v876 = vld [vmem:[#allocation7 + $0xf0] sm:$0xff]
    %v877 = vld [vmem:[#allocation7 + $0xf8] sm:$0xff]
    %v878 = vld [vmem:[#allocation7 + $0x100] sm:$0xff]
    %v879 = vld [vmem:[#allocation7 + $0x108] sm:$0xff]
    %v880 = vld [vmem:[#allocation7 + $0x110] sm:$0xff]
    %v881 = vld [vmem:[#allocation7 + $0x118] sm:$0xff]
    %v882 = vld [vmem:[#allocation7 + $0x120] sm:$0xff]
    %v883 = vld [vmem:[#allocation7 + $0x128] sm:$0xff]
    %v884 = vld [vmem:[#allocation7 + $0x130] sm:$0xff]
    %v885 = vld [vmem:[#allocation7 + $0x138] sm:$0xff]
    %v886 = vld [vmem:[#allocation7 + $0x140] sm:$0xff]
    %v887 = vld [vmem:[#allocation7 + $0x148] sm:$0xff]
    %v888 = vld [vmem:[#allocation7 + $0x150] sm:$0xff]
    %v889 = vld [vmem:[#allocation7 + $0x158] sm:$0xff]
    %v890 = vld [vmem:[#allocation7 + $0x160] sm:$0xff]
    %v891 = vld [vmem:[#allocation7 + $0x168] sm:$0xff]
    %v892 = vld [vmem:[#allocation7 + $0x170] sm:$0xff]
    %v893 = vld [vmem:[#allocation7 + $0x178] sm:$0xff]
    %v894 = vld [vmem:[#allocation7 + $0x180] sm:$0xff]
    %v895 = vld [vmem:[#allocation7 + $0x188] sm:$0xff]
    %v896 = vld [vmem:[#allocation7 + $0x190] sm:$0xff]
    %v897 = vld [vmem:[#allocation7 + $0x198] sm:$0xff]
    %v898 = vld [vmem:[#allocation7 + $0x1a0] sm:$0xff]
    %v899 = vld [vmem:[#allocation7 + $0x1a8] sm:$0xff]
    %v900 = vld [vmem:[#allocation7 + $0x1b0] sm:$0xff]
    %v901 = vld [vmem:[#allocation7 + $0x1b8] sm:$0xff]
    %v902 = vld [vmem:[#allocation7 + $0x1c0] sm:$0xff]
    %v903 = vld [vmem:[#allocation7 + $0x1c8] sm:$0xff]
    %v904 = vld [vmem:[#allocation7 + $0x1d0] sm:$0xff]
    %v905 = vld [vmem:[#allocation7 + $0x1d8] sm:$0xff]
    %v906 = vld [vmem:[#allocation7 + $0x1e0] sm:$0xff]
    %v907 = vld [vmem:[#allocation7 + $0x1e8] sm:$0xff]
    %v908 = vld [vmem:[#allocation7 + $0x1f0] sm:$0xff]
    %v909 = vld [vmem:[#allocation7 + $0x1f8] sm:$0xff]
    %v910 = vld [vmem:[#allocation7 + $0x200] sm:$0xff]
    %v911 = vld [vmem:[#allocation7 + $0x208] sm:$0xff]
    %v912 = vld [vmem:[#allocation7 + $0x210] sm:$0xff]
    %v913 = vld [vmem:[#allocation7 + $0x218] sm:$0xff]
    %v914 = vld [vmem:[#allocation7 + $0x220] sm:$0xff]
    %v915 = vld [vmem:[#allocation7 + $0x228] sm:$0xff]
    %v916 = vld [vmem:[#allocation7 + $0x230] sm:$0xff]
    %v917 = vld [vmem:[#allocation7 + $0x238] sm:$0xff]
    %v918 = vld [vmem:[#allocation7 + $0x240] sm:$0xff]
    %v919 = vld [vmem:[#allocation7 + $0x248] sm:$0xff]
    %v920 = vld [vmem:[#allocation7 + $0x250] sm:$0xff]
    %v921 = vld [vmem:[#allocation7 + $0x258] sm:$0xff]
    %v922 = vld [vmem:[#allocation7 + $0x260] sm:$0xff]
    %v923 = vld [vmem:[#allocation7 + $0x268] sm:$0xff]
    %v924 = vld [vmem:[#allocation7 + $0x270] sm:$0xff]
    %v925 = vld [vmem:[#allocation7 + $0x278] sm:$0xff]
    %v926 = vld [vmem:[#allocation7 + $0x280] sm:$0xff]
    %v927 = vld [vmem:[#allocation7 + $0x288] sm:$0xff]
    %v928 = vld [vmem:[#allocation7 + $0x290] sm:$0xff]
    %v929 = vld [vmem:[#allocation7 + $0x298] sm:$0xff]
    %v930 = vld [vmem:[#allocation7 + $0x2a0] sm:$0xff]
    %v931 = vld [vmem:[#allocation7 + $0x2a8] sm:$0xff]
    %v932 = vld [vmem:[#allocation7 + $0x2b0] sm:$0xff]
    %v933 = vld [vmem:[#allocation7 + $0x2b8] sm:$0xff]
    %v934 = vld [vmem:[#allocation7 + $0x2c0] sm:$0xff]
    %v935 = vld [vmem:[#allocation7 + $0x2c8] sm:$0xff]
    %v936 = vld [vmem:[#allocation7 + $0x2d0] sm:$0xff]
    %v937 = vld [vmem:[#allocation7 + $0x2d8] sm:$0xff]
    %v938 = vld [vmem:[#allocation7 + $0x2e0] sm:$0xff]
    %v939 = vld [vmem:[#allocation7 + $0x2e8] sm:$0xff]
    %v940 = vld [vmem:[#allocation7 + $0x2f0] sm:$0xff]
    %v941 = vld [vmem:[#allocation7 + $0x2f8] sm:$0xff]
    %v942 = vld [vmem:[#allocation7 + $0x300] sm:$0xff]
    %v943 = vld [vmem:[#allocation7 + $0x308] sm:$0xff]
    %v944 = vld [vmem:[#allocation7 + $0x310] sm:$0xff]
    %v945 = vld [vmem:[#allocation7 + $0x318] sm:$0xff]
    %v946 = vld [vmem:[#allocation7 + $0x320] sm:$0xff]
    %v947 = vld [vmem:[#allocation7 + $0x328] sm:$0xff]
    %v948 = vld [vmem:[#allocation7 + $0x330] sm:$0xff]
    %v949 = vld [vmem:[#allocation7 + $0x338] sm:$0xff]
    %v950 = vld [vmem:[#allocation7 + $0x340] sm:$0xff]
    %v951 = vld [vmem:[#allocation7 + $0x348] sm:$0xff]
    %v952 = vld [vmem:[#allocation7 + $0x350] sm:$0xff]
    %v953 = vld [vmem:[#allocation7 + $0x358] sm:$0xff]
    %v954 = vld [vmem:[#allocation7 + $0x360] sm:$0xff]
    %v955 = vld [vmem:[#allocation7 + $0x368] sm:$0xff]
    %v956 = vld [vmem:[#allocation7 + $0x370] sm:$0xff]
    %v957 = vld [vmem:[#allocation7 + $0x378] sm:$0xff]
    %v958 = vld [vmem:[#allocation7 + $0x380] sm:$0xff]
    %v959 = vld [vmem:[#allocation7 + $0x388] sm:$0xff]
    %v960 = vld [vmem:[#allocation7 + $0x390] sm:$0xff]
    %v961 = vld [vmem:[#allocation7 + $0x398] sm:$0xff]
    %v962 = vld [vmem:[#allocation7 + $0x3a0] sm:$0xff]
    %v963 = vld [vmem:[#allocation7 + $0x3a8] sm:$0xff]
    %v964 = vld [vmem:[#allocation7 + $0x3b0] sm:$0xff]
    %v965 = vld [vmem:[#allocation7 + $0x3b8] sm:$0xff]
    %v966 = vld [vmem:[#allocation7 + $0x3c0] sm:$0xff]
    %v967 = vld [vmem:[#allocation7 + $0x3c8] sm:$0xff]
    %v968 = vld [vmem:[#allocation7 + $0x3d0] sm:$0xff]
    %v969 = vld [vmem:[#allocation7 + $0x3d8] sm:$0xff]
    %v970 = vld [vmem:[#allocation7 + $0x3e0] sm:$0xff]
    %v971 = vld [vmem:[#allocation7 + $0x3e8] sm:$0xff]
    %v972 = vld [vmem:[#allocation7 + $0x3f0] sm:$0xff]
    %v973 = vld [vmem:[#allocation7 + $0x3f8] sm:$0xff]
    %v974 = vld [vmem:[#allocation8] sm:$0xf]
    %v976 = vperm.slane %v974, 0
    %v977 = vperm.slane %v974, 1
    %v978 = vperm.slane %v974, 2
    %v979 = vperm.slane %v974, 3
    %v1112 = vunpack.c.l.b16 %v846
    %v1113 = vunpack.c.h.b16 %v846
    %v1114 = vunpack.c.l.b16 %v847
    %v1115 = vunpack.c.h.b16 %v847
    %v1116 = vunpack.c.l.b16 %v848
    %v1117 = vunpack.c.h.b16 %v848
    %v1118 = vunpack.c.l.b16 %v849
    %v1119 = vunpack.c.h.b16 %v849
    %v1120 = vunpack.c.l.b16 %v850
    %v1121 = vunpack.c.h.b16 %v850
    %v1122 = vunpack.c.l.b16 %v851
    %v1123 = vunpack.c.h.b16 %v851
    %v1124 = vunpack.c.l.b16 %v852
    %v1125 = vunpack.c.h.b16 %v852
    %v1126 = vunpack.c.l.b16 %v853
    %v1127 = vunpack.c.h.b16 %v853
    %v1128 = vunpack.c.l.b16 %v854
    %v1129 = vunpack.c.h.b16 %v854
    %v1130 = vunpack.c.l.b16 %v855
    %v1131 = vunpack.c.h.b16 %v855
    %v1132 = vunpack.c.l.b16 %v856
    %v1133 = vunpack.c.h.b16 %v856
    %v1134 = vunpack.c.l.b16 %v857
    %v1135 = vunpack.c.h.b16 %v857
    %v1136 = vunpack.c.l.b16 %v858
    %v1137 = vunpack.c.h.b16 %v858
    %v1138 = vunpack.c.l.b16 %v859
    %v1139 = vunpack.c.h.b16 %v859
    %v1140 = vunpack.c.l.b16 %v860
    %v1141 = vunpack.c.h.b16 %v860
    %v1142 = vunpack.c.l.b16 %v861
    %v1143 = vunpack.c.h.b16 %v861
    %v1144 = vunpack.c.l.b16 %v862
    %v1145 = vunpack.c.h.b16 %v862
    %v1146 = vunpack.c.l.b16 %v863
    %v1147 = vunpack.c.h.b16 %v863
    %v1148 = vunpack.c.l.b16 %v864
    %v1149 = vunpack.c.h.b16 %v864
    %v1150 = vunpack.c.l.b16 %v865
    %v1151 = vunpack.c.h.b16 %v865
    %v1152 = vunpack.c.l.b16 %v866
    %v1153 = vunpack.c.h.b16 %v866
    %v1154 = vunpack.c.l.b16 %v867
    %v1155 = vunpack.c.h.b16 %v867
    %v1156 = vunpack.c.l.b16 %v868
    %v1157 = vunpack.c.h.b16 %v868
    %v1158 = vunpack.c.l.b16 %v869
    %v1159 = vunpack.c.h.b16 %v869
    %v1160 = vunpack.c.l.b16 %v870
    %v1161 = vunpack.c.h.b16 %v870
    %v1162 = vunpack.c.l.b16 %v871
    %v1163 = vunpack.c.h.b16 %v871
    %v1164 = vunpack.c.l.b16 %v872
    %v1165 = vunpack.c.h.b16 %v872
    %v1166 = vunpack.c.l.b16 %v873
    %v1167 = vunpack.c.h.b16 %v873
    %v1168 = vunpack.c.l.b16 %v874
    %v1169 = vunpack.c.h.b16 %v874
    %v1170 = vunpack.c.l.b16 %v875
    %v1171 = vunpack.c.h.b16 %v875
    %v1172 = vunpack.c.l.b16 %v876
    %v1173 = vunpack.c.h.b16 %v876
    %v1174 = vunpack.c.l.b16 %v877
    %v1175 = vunpack.c.h.b16 %v877
    %v1176 = vunpack.c.l.b16 %v878
    %v1177 = vunpack.c.h.b16 %v878
    %v1178 = vunpack.c.l.b16 %v879
    %v1179 = vunpack.c.h.b16 %v879
    %v1180 = vunpack.c.l.b16 %v880
    %v1181 = vunpack.c.h.b16 %v880
    %v1182 = vunpack.c.l.b16 %v881
    %v1183 = vunpack.c.h.b16 %v881
    %v1184 = vunpack.c.l.b16 %v882
    %v1185 = vunpack.c.h.b16 %v882
    %v1186 = vunpack.c.l.b16 %v883
    %v1187 = vunpack.c.h.b16 %v883
    %v1188 = vunpack.c.l.b16 %v884
    %v1189 = vunpack.c.h.b16 %v884
    %v1190 = vunpack.c.l.b16 %v885
    %v1191 = vunpack.c.h.b16 %v885
    %v1192 = vunpack.c.l.b16 %v886
    %v1193 = vunpack.c.h.b16 %v886
    %v1194 = vunpack.c.l.b16 %v887
    %v1195 = vunpack.c.h.b16 %v887
    %v1196 = vunpack.c.l.b16 %v888
    %v1197 = vunpack.c.h.b16 %v888
    %v1198 = vunpack.c.l.b16 %v889
    %v1199 = vunpack.c.h.b16 %v889
    %v1200 = vunpack.c.l.b16 %v890
    %v1201 = vunpack.c.h.b16 %v890
    %v1202 = vunpack.c.l.b16 %v891
    %v1203 = vunpack.c.h.b16 %v891
    %v1204 = vunpack.c.l.b16 %v892
    %v1205 = vunpack.c.h.b16 %v892
    %v1206 = vunpack.c.l.b16 %v893
    %v1207 = vunpack.c.h.b16 %v893
    %v1208 = vunpack.c.l.b16 %v894
    %v1209 = vunpack.c.h.b16 %v894
    %v1210 = vunpack.c.l.b16 %v895
    %v1211 = vunpack.c.h.b16 %v895
    %v1212 = vunpack.c.l.b16 %v896
    %v1213 = vunpack.c.h.b16 %v896
    %v1214 = vunpack.c.l.b16 %v897
    %v1215 = vunpack.c.h.b16 %v897
    %v1216 = vunpack.c.l.b16 %v898
    %v1217 = vunpack.c.h.b16 %v898
    %v1218 = vunpack.c.l.b16 %v899
    %v1219 = vunpack.c.h.b16 %v899
    %v1220 = vunpack.c.l.b16 %v900
    %v1221 = vunpack.c.h.b16 %v900
    %v1222 = vunpack.c.l.b16 %v901
    %v1223 = vunpack.c.h.b16 %v901
    %v1224 = vunpack.c.l.b16 %v902
    %v1225 = vunpack.c.h.b16 %v902
    %v1226 = vunpack.c.l.b16 %v903
    %v1227 = vunpack.c.h.b16 %v903
    %v1228 = vunpack.c.l.b16 %v904
    %v1229 = vunpack.c.h.b16 %v904
    %v1230 = vunpack.c.l.b16 %v905
    %v1231 = vunpack.c.h.b16 %v905
    %v1232 = vunpack.c.l.b16 %v906
    %v1233 = vunpack.c.h.b16 %v906
    %v1234 = vunpack.c.l.b16 %v907
    %v1235 = vunpack.c.h.b16 %v907
    %v1236 = vunpack.c.l.b16 %v908
    %v1237 = vunpack.c.h.b16 %v908
    %v1238 = vunpack.c.l.b16 %v909
    %v1239 = vunpack.c.h.b16 %v909
    %v1240 = vunpack.c.l.b16 %v910
    %v1241 = vunpack.c.h.b16 %v910
    %v1242 = vunpack.c.l.b16 %v911
    %v1243 = vunpack.c.h.b16 %v911
    %v1244 = vunpack.c.l.b16 %v912
    %v1245 = vunpack.c.h.b16 %v912
    %v1246 = vunpack.c.l.b16 %v913
    %v1247 = vunpack.c.h.b16 %v913
    %v1248 = vunpack.c.l.b16 %v914
    %v1249 = vunpack.c.h.b16 %v914
    %v1250 = vunpack.c.l.b16 %v915
    %v1251 = vunpack.c.h.b16 %v915
    %v1252 = vunpack.c.l.b16 %v916
    %v1253 = vunpack.c.h.b16 %v916
    %v1254 = vunpack.c.l.b16 %v917
    %v1255 = vunpack.c.h.b16 %v917
    %v1256 = vunpack.c.l.b16 %v918
    %v1257 = vunpack.c.h.b16 %v918
    %v1258 = vunpack.c.l.b16 %v919
    %v1259 = vunpack.c.h.b16 %v919
    %v1260 = vunpack.c.l.b16 %v920
    %v1261 = vunpack.c.h.b16 %v920
    %v1262 = vunpack.c.l.b16 %v921
    %v1263 = vunpack.c.h.b16 %v921
    %v1264 = vunpack.c.l.b16 %v922
    %v1265 = vunpack.c.h.b16 %v922
    %v1266 = vunpack.c.l.b16 %v923
    %v1267 = vunpack.c.h.b16 %v923
    %v1268 = vunpack.c.l.b16 %v924
    %v1269 = vunpack.c.h.b16 %v924
    %v1270 = vunpack.c.l.b16 %v925
    %v1271 = vunpack.c.h.b16 %v925
    %v1272 = vunpack.c.l.b16 %v926
    %v1273 = vunpack.c.h.b16 %v926
    %v1274 = vunpack.c.l.b16 %v927
    %v1275 = vunpack.c.h.b16 %v927
    %v1276 = vunpack.c.l.b16 %v928
    %v1277 = vunpack.c.h.b16 %v928
    %v1278 = vunpack.c.l.b16 %v929
    %v1279 = vunpack.c.h.b16 %v929
    %v1280 = vunpack.c.l.b16 %v930
    %v1281 = vunpack.c.h.b16 %v930
    %v1282 = vunpack.c.l.b16 %v931
    %v1283 = vunpack.c.h.b16 %v931
    %v1284 = vunpack.c.l.b16 %v932
    %v1285 = vunpack.c.h.b16 %v932
    %v1286 = vunpack.c.l.b16 %v933
    %v1287 = vunpack.c.h.b16 %v933
    %v1288 = vunpack.c.l.b16 %v934
    %v1289 = vunpack.c.h.b16 %v934
    %v1290 = vunpack.c.l.b16 %v935
    %v1291 = vunpack.c.h.b16 %v935
    %v1292 = vunpack.c.l.b16 %v936
    %v1293 = vunpack.c.h.b16 %v936
    %v1294 = vunpack.c.l.b16 %v937
    %v1295 = vunpack.c.h.b16 %v937
    %v1296 = vunpack.c.l.b16 %v938
    %v1297 = vunpack.c.h.b16 %v938
    %v1298 = vunpack.c.l.b16 %v939
    %v1299 = vunpack.c.h.b16 %v939
    %v1300 = vunpack.c.l.b16 %v940
    %v1301 = vunpack.c.h.b16 %v940
    %v1302 = vunpack.c.l.b16 %v941
    %v1303 = vunpack.c.h.b16 %v941
    %v1304 = vunpack.c.l.b16 %v942
    %v1305 = vunpack.c.h.b16 %v942
    %v1306 = vunpack.c.l.b16 %v943
    %v1307 = vunpack.c.h.b16 %v943
    %v1308 = vunpack.c.l.b16 %v944
    %v1309 = vunpack.c.h.b16 %v944
    %v1310 = vunpack.c.l.b16 %v945
    %v1311 = vunpack.c.h.b16 %v945
    %v1312 = vunpack.c.l.b16 %v946
    %v1313 = vunpack.c.h.b16 %v946
    %v1314 = vunpack.c.l.b16 %v947
    %v1315 = vunpack.c.h.b16 %v947
    %v1316 = vunpack.c.l.b16 %v948
    %v1317 = vunpack.c.h.b16 %v948
    %v1318 = vunpack.c.l.b16 %v949
    %v1319 = vunpack.c.h.b16 %v949
    %v1320 = vunpack.c.l.b16 %v950
    %v1321 = vunpack.c.h.b16 %v950
    %v1322 = vunpack.c.l.b16 %v951
    %v1323 = vunpack.c.h.b16 %v951
    %v1324 = vunpack.c.l.b16 %v952
    %v1325 = vunpack.c.h.b16 %v952
    %v1326 = vunpack.c.l.b16 %v953
    %v1327 = vunpack.c.h.b16 %v953
    %v1328 = vunpack.c.l.b16 %v954
    %v1329 = vunpack.c.h.b16 %v954
    %v1330 = vunpack.c.l.b16 %v955
    %v1331 = vunpack.c.h.b16 %v955
    %v1332 = vunpack.c.l.b16 %v956
    %v1333 = vunpack.c.h.b16 %v956
    %v1334 = vunpack.c.l.b16 %v957
    %v1335 = vunpack.c.h.b16 %v957
    %v1336 = vunpack.c.l.b16 %v958
    %v1337 = vunpack.c.h.b16 %v958
    %v1338 = vunpack.c.l.b16 %v959
    %v1339 = vunpack.c.h.b16 %v959
    %v1340 = vunpack.c.l.b16 %v960
    %v1341 = vunpack.c.h.b16 %v960
    %v1342 = vunpack.c.l.b16 %v961
    %v1343 = vunpack.c.h.b16 %v961
    %v1344 = vunpack.c.l.b16 %v962
    %v1345 = vunpack.c.h.b16 %v962
    %v1346 = vunpack.c.l.b16 %v963
    %v1347 = vunpack.c.h.b16 %v963
    %v1348 = vunpack.c.l.b16 %v964
    %v1349 = vunpack.c.h.b16 %v964
    %v1350 = vunpack.c.l.b16 %v965
    %v1351 = vunpack.c.h.b16 %v965
    %v1352 = vunpack.c.l.b16 %v966
    %v1353 = vunpack.c.h.b16 %v966
    %v1354 = vunpack.c.l.b16 %v967
    %v1355 = vunpack.c.h.b16 %v967
    %v1356 = vunpack.c.l.b16 %v968
    %v1357 = vunpack.c.h.b16 %v968
    %v1358 = vunpack.c.l.b16 %v969
    %v1359 = vunpack.c.h.b16 %v969
    %v1360 = vunpack.c.l.b16 %v970
    %v1361 = vunpack.c.h.b16 %v970
    %v1362 = vunpack.c.l.b16 %v971
    %v1363 = vunpack.c.h.b16 %v971
    %v1364 = vunpack.c.l.b16 %v972
    %v1365 = vunpack.c.h.b16 %v972
    %v1366 = vunpack.c.l.b16 %v973
    %v1367 = vunpack.c.h.b16 %v973
    %v1368 = vpack.c.b16 %v1116, %v1112
    %v1369 = vpack.c.b16 %v1117, %v1113
    %v1370 = vpack.c.b16 %v1118, %v1114
    %v1371 = vpack.c.b16 %v1119, %v1115
    %v1372 = vpack.c.b16 %v1124, %v1120
    %v1373 = vpack.c.b16 %v1125, %v1121
    %v1374 = vpack.c.b16 %v1126, %v1122
    %v1375 = vpack.c.b16 %v1127, %v1123
    %v1376 = vpack.c.b16 %v1132, %v1128
    %v1377 = vpack.c.b16 %v1133, %v1129
    %v1378 = vpack.c.b16 %v1134, %v1130
    %v1379 = vpack.c.b16 %v1135, %v1131
    %v1380 = vpack.c.b16 %v1140, %v1136
    %v1381 = vpack.c.b16 %v1141, %v1137
    %v1382 = vpack.c.b16 %v1142, %v1138
    %v1383 = vpack.c.b16 %v1143, %v1139
    %v1384 = vpack.c.b16 %v1148, %v1144
    %v1385 = vpack.c.b16 %v1149, %v1145
    %v1386 = vpack.c.b16 %v1150, %v1146
    %v1387 = vpack.c.b16 %v1151, %v1147
    %v1388 = vpack.c.b16 %v1156, %v1152
    %v1389 = vpack.c.b16 %v1157, %v1153
    %v1390 = vpack.c.b16 %v1158, %v1154
    %v1391 = vpack.c.b16 %v1159, %v1155
    %v1392 = vpack.c.b16 %v1164, %v1160
    %v1393 = vpack.c.b16 %v1165, %v1161
    %v1394 = vpack.c.b16 %v1166, %v1162
    %v1395 = vpack.c.b16 %v1167, %v1163
    %v1396 = vpack.c.b16 %v1172, %v1168
    %v1397 = vpack.c.b16 %v1173, %v1169
    %v1398 = vpack.c.b16 %v1174, %v1170
    %v1399 = vpack.c.b16 %v1175, %v1171
    %v1400 = vpack.c.b16 %v1180, %v1176
    %v1401 = vpack.c.b16 %v1181, %v1177
    %v1402 = vpack.c.b16 %v1182, %v1178
    %v1403 = vpack.c.b16 %v1183, %v1179
    %v1404 = vpack.c.b16 %v1188, %v1184
    %v1405 = vpack.c.b16 %v1189, %v1185
    %v1406 = vpack.c.b16 %v1190, %v1186
    %v1407 = vpack.c.b16 %v1191, %v1187
    %v1408 = vpack.c.b16 %v1196, %v1192
    %v1409 = vpack.c.b16 %v1197, %v1193
    %v1410 = vpack.c.b16 %v1198, %v1194
    %v1411 = vpack.c.b16 %v1199, %v1195
    %v1412 = vpack.c.b16 %v1204, %v1200
    %v1413 = vpack.c.b16 %v1205, %v1201
    %v1414 = vpack.c.b16 %v1206, %v1202
    %v1415 = vpack.c.b16 %v1207, %v1203
    %v1416 = vpack.c.b16 %v1212, %v1208
    %v1417 = vpack.c.b16 %v1213, %v1209
    %v1418 = vpack.c.b16 %v1214, %v1210
    %v1419 = vpack.c.b16 %v1215, %v1211
    %v1420 = vpack.c.b16 %v1220, %v1216
    %v1421 = vpack.c.b16 %v1221, %v1217
    %v1422 = vpack.c.b16 %v1222, %v1218
    %v1423 = vpack.c.b16 %v1223, %v1219
    %v1424 = vpack.c.b16 %v1228, %v1224
    %v1425 = vpack.c.b16 %v1229, %v1225
    %v1426 = vpack.c.b16 %v1230, %v1226
    %v1427 = vpack.c.b16 %v1231, %v1227
    %v1428 = vpack.c.b16 %v1236, %v1232
    %v1429 = vpack.c.b16 %v1237, %v1233
    %v1430 = vpack.c.b16 %v1238, %v1234
    %v1431 = vpack.c.b16 %v1239, %v1235
    %v1432 = vpack.c.b16 %v1244, %v1240
    %v1433 = vpack.c.b16 %v1245, %v1241
    %v1434 = vpack.c.b16 %v1246, %v1242
    %v1435 = vpack.c.b16 %v1247, %v1243
    %v1436 = vpack.c.b16 %v1252, %v1248
    %v1437 = vpack.c.b16 %v1253, %v1249
    %v1438 = vpack.c.b16 %v1254, %v1250
    %v1439 = vpack.c.b16 %v1255, %v1251
    %v1440 = vpack.c.b16 %v1260, %v1256
    %v1441 = vpack.c.b16 %v1261, %v1257
    %v1442 = vpack.c.b16 %v1262, %v1258
    %v1443 = vpack.c.b16 %v1263, %v1259
    %v1444 = vpack.c.b16 %v1268, %v1264
    %v1445 = vpack.c.b16 %v1269, %v1265
    %v1446 = vpack.c.b16 %v1270, %v1266
    %v1447 = vpack.c.b16 %v1271, %v1267
    %v1448 = vpack.c.b16 %v1276, %v1272
    %v1449 = vpack.c.b16 %v1277, %v1273
    %v1450 = vpack.c.b16 %v1278, %v1274
    %v1451 = vpack.c.b16 %v1279, %v1275
    %v1452 = vpack.c.b16 %v1284, %v1280
    %v1453 = vpack.c.b16 %v1285, %v1281
    %v1454 = vpack.c.b16 %v1286, %v1282
    %v1455 = vpack.c.b16 %v1287, %v1283
    %v1456 = vpack.c.b16 %v1292, %v1288
    %v1457 = vpack.c.b16 %v1293, %v1289
    %v1458 = vpack.c.b16 %v1294, %v1290
    %v1459 = vpack.c.b16 %v1295, %v1291
    %v1460 = vpack.c.b16 %v1300, %v1296
    %v1461 = vpack.c.b16 %v1301, %v1297
    %v1462 = vpack.c.b16 %v1302, %v1298
    %v1463 = vpack.c.b16 %v1303, %v1299
    %v1464 = vpack.c.b16 %v1308, %v1304
    %v1465 = vpack.c.b16 %v1309, %v1305
    %v1466 = vpack.c.b16 %v1310, %v1306
    %v1467 = vpack.c.b16 %v1311, %v1307
    %v1468 = vpack.c.b16 %v1316, %v1312
    %v1469 = vpack.c.b16 %v1317, %v1313
    %v1470 = vpack.c.b16 %v1318, %v1314
    %v1471 = vpack.c.b16 %v1319, %v1315
    %v1472 = vpack.c.b16 %v1324, %v1320
    %v1473 = vpack.c.b16 %v1325, %v1321
    %v1474 = vpack.c.b16 %v1326, %v1322
    %v1475 = vpack.c.b16 %v1327, %v1323
    %v1476 = vpack.c.b16 %v1332, %v1328
    %v1477 = vpack.c.b16 %v1333, %v1329
    %v1478 = vpack.c.b16 %v1334, %v1330
    %v1479 = vpack.c.b16 %v1335, %v1331
    %v1480 = vpack.c.b16 %v1340, %v1336
    %v1481 = vpack.c.b16 %v1341, %v1337
    %v1482 = vpack.c.b16 %v1342, %v1338
    %v1483 = vpack.c.b16 %v1343, %v1339
    %v1484 = vpack.c.b16 %v1348, %v1344
    %v1485 = vpack.c.b16 %v1349, %v1345
    %v1486 = vpack.c.b16 %v1350, %v1346
    %v1487 = vpack.c.b16 %v1351, %v1347
    %v1488 = vpack.c.b16 %v1356, %v1352
    %v1489 = vpack.c.b16 %v1357, %v1353
    %v1490 = vpack.c.b16 %v1358, %v1354
    %v1491 = vpack.c.b16 %v1359, %v1355
    %v1492 = vpack.c.b16 %v1364, %v1360
    %v1493 = vpack.c.b16 %v1365, %v1361
    %v1494 = vpack.c.b16 %v1366, %v1362
    %v1495 = vpack.c.b16 %v1367, %v1363
    %1624 = vmatpush.bf16.msra.mxu0 %v1396
    %1625 = vmatpush.bf16.msra.mxu0 %v1392
    %1626 = vmatpush.bf16.msra.mxu0 %v1388
    %1627 = vmatpush.bf16.msra.mxu0 %v1384
    %1628 = vmatpush.bf16.msra.mxu0 %v1380
    %1629 = vmatpush.bf16.msra.mxu0 %v1376
    %1630 = vmatpush.bf16.msra.mxu0 %v1372
    %1631 = vmatpush.bf16.msra.mxu0 %v1368
    %1632 = vmatmul.bf16.gmra.mxu0 %v814
    %v1633 = vpop.f32.mrf.mxu0
    %v1634 = vadd.f32 %v976, %v1633
    %v1635 = vpop.f32.mrf.mxu0
    %v1636 = vadd.f32 %v976, %v1635
    %1637 = vmatmul.bf16.gmra.mxu0 %v818
    %v1638 = vpop.f32.mrf.mxu0
    %v1639 = vadd.f32 %v976, %v1638
    %v1640 = vpop.f32.mrf.mxu0
    %v1641 = vadd.f32 %v976, %v1640
    %1642 = vmatmul.bf16.gmra.mxu0 %v822
    %v1643 = vpop.f32.mrf.mxu0
    %v1644 = vadd.f32 %v976, %v1643
    %v1645 = vpop.f32.mrf.mxu0
    %v1646 = vadd.f32 %v976, %v1645
    %1647 = vmatmul.bf16.gmra.mxu0 %v826
    %v1648 = vpop.f32.mrf.mxu0
    %v1649 = vadd.f32 %v976, %v1648
    %v1650 = vpop.f32.mrf.mxu0
    %v1651 = vadd.f32 %v976, %v1650
    %1652 = vmatmul.bf16.gmra.mxu0 %v830
    %v1653 = vpop.f32.mrf.mxu0
    %v1654 = vadd.f32 %v976, %v1653
    %v1655 = vpop.f32.mrf.mxu0
    %v1656 = vadd.f32 %v976, %v1655
    %1657 = vmatmul.bf16.gmra.mxu0 %v834
    %v1658 = vpop.f32.mrf.mxu0
    %v1659 = vadd.f32 %v976, %v1658
    %v1660 = vpop.f32.mrf.mxu0
    %v1661 = vadd.f32 %v976, %v1660
    %1662 = vmatmul.bf16.gmra.mxu0 %v838
    %v1663 = vpop.f32.mrf.mxu0
    %v1664 = vadd.f32 %v976, %v1663
    %v1665 = vpop.f32.mrf.mxu0
    %v1666 = vadd.f32 %v976, %v1665
    %1667 = vmatmul.bf16.gmra.mxu0 %v842
    %v1668 = vpop.f32.mrf.mxu0
    %v1669 = vadd.f32 %v976, %v1668
    %v1670 = vpop.f32.mrf.mxu0
    %v1671 = vadd.f32 %v976, %v1670
    %1672 = vdwg.mxu0
    %1673 = vmatpush.bf16.msra.mxu0 %v1428
    %1674 = vmatpush.bf16.msra.mxu0 %v1424
    %1675 = vmatpush.bf16.msra.mxu0 %v1420
    %1676 = vmatpush.bf16.msra.mxu0 %v1416
    %1677 = vmatpush.bf16.msra.mxu0 %v1412
    %1678 = vmatpush.bf16.msra.mxu0 %v1408
    %1679 = vmatpush.bf16.msra.mxu0 %v1404
    %1680 = vmatpush.bf16.msra.mxu0 %v1400
    %1681 = vmatmul.bf16.gmra.mxu0 %v815
    %v1682 = vpop.f32.mrf.mxu0
    %v1683 = vadd.f32 %v1634, %v1682
    %v1684 = vpop.f32.mrf.mxu0
    %v1685 = vadd.f32 %v1636, %v1684
    %1686 = vmatmul.bf16.gmra.mxu0 %v819
    %v1687 = vpop.f32.mrf.mxu0
    %v1688 = vadd.f32 %v1639, %v1687
    %v1689 = vpop.f32.mrf.mxu0
    %v1690 = vadd.f32 %v1641, %v1689
    %1691 = vmatmul.bf16.gmra.mxu0 %v823
    %v1692 = vpop.f32.mrf.mxu0
    %v1693 = vadd.f32 %v1644, %v1692
    %v1694 = vpop.f32.mrf.mxu0
    %v1695 = vadd.f32 %v1646, %v1694
    %1696 = vmatmul.bf16.gmra.mxu0 %v827
    %v1697 = vpop.f32.mrf.mxu0
    %v1698 = vadd.f32 %v1649, %v1697
    %v1699 = vpop.f32.mrf.mxu0
    %v1700 = vadd.f32 %v1651, %v1699
    %1701 = vmatmul.bf16.gmra.mxu0 %v831
    %v1702 = vpop.f32.mrf.mxu0
    %v1703 = vadd.f32 %v1654, %v1702
    %v1704 = vpop.f32.mrf.mxu0
    %v1705 = vadd.f32 %v1656, %v1704
    %1706 = vmatmul.bf16.gmra.mxu0 %v835
    %v1707 = vpop.f32.mrf.mxu0
    %v1708 = vadd.f32 %v1659, %v1707
    %v1709 = vpop.f32.mrf.mxu0
    %v1710 = vadd.f32 %v1661, %v1709
    %1711 = vmatmul.bf16.gmra.mxu0 %v839
    %v1712 = vpop.f32.mrf.mxu0
    %v1713 = vadd.f32 %v1664, %v1712
    %v1714 = vpop.f32.mrf.mxu0
    %v1715 = vadd.f32 %v1666, %v1714
    %1716 = vmatmul.bf16.gmra.mxu0 %v843
    %v1717 = vpop.f32.mrf.mxu0
    %v1718 = vadd.f32 %v1669, %v1717
    %v1719 = vpop.f32.mrf.mxu0
    %v1720 = vadd.f32 %v1671, %v1719
    %1721 = vdwg.mxu0
    %1722 = vmatpush.bf16.msra.mxu0 %v1460
    %1723 = vmatpush.bf16.msra.mxu0 %v1456
    %1724 = vmatpush.bf16.msra.mxu0 %v1452
    %1725 = vmatpush.bf16.msra.mxu0 %v1448
    %1726 = vmatpush.bf16.msra.mxu0 %v1444
    %1727 = vmatpush.bf16.msra.mxu0 %v1440
    %1728 = vmatpush.bf16.msra.mxu0 %v1436
    %1729 = vmatpush.bf16.msra.mxu0 %v1432
    %1730 = vmatmul.bf16.gmra.mxu0 %v816
    %v1731 = vpop.f32.mrf.mxu0
    %v1732 = vadd.f32 %v1683, %v1731
    %v1733 = vpop.f32.mrf.mxu0
    %v1734 = vadd.f32 %v1685, %v1733
    %1735 = vmatmul.bf16.gmra.mxu0 %v820
    %v1736 = vpop.f32.mrf.mxu0
    %v1737 = vadd.f32 %v1688, %v1736
    %v1738 = vpop.f32.mrf.mxu0
    %v1739 = vadd.f32 %v1690, %v1738
    %1740 = vmatmul.bf16.gmra.mxu0 %v824
    %v1741 = vpop.f32.mrf.mxu0
    %v1742 = vadd.f32 %v1693, %v1741
    %v1743 = vpop.f32.mrf.mxu0
    %v1744 = vadd.f32 %v1695, %v1743
    %1745 = vmatmul.bf16.gmra.mxu0 %v828
    %v1746 = vpop.f32.mrf.mxu0
    %v1747 = vadd.f32 %v1698, %v1746
    %v1748 = vpop.f32.mrf.mxu0
    %v1749 = vadd.f32 %v1700, %v1748
    %1750 = vmatmul.bf16.gmra.mxu0 %v832
    %v1751 = vpop.f32.mrf.mxu0
    %v1752 = vadd.f32 %v1703, %v1751
    %v1753 = vpop.f32.mrf.mxu0
    %v1754 = vadd.f32 %v1705, %v1753
    %1755 = vmatmul.bf16.gmra.mxu0 %v836
    %v1756 = vpop.f32.mrf.mxu0
    %v1757 = vadd.f32 %v1708, %v1756
    %v1758 = vpop.f32.mrf.mxu0
    %v1759 = vadd.f32 %v1710, %v1758
    %1760 = vmatmul.bf16.gmra.mxu0 %v840
    %v1761 = vpop.f32.mrf.mxu0
    %v1762 = vadd.f32 %v1713, %v1761
    %v1763 = vpop.f32.mrf.mxu0
    %v1764 = vadd.f32 %v1715, %v1763
    %1765 = vmatmul.bf16.gmra.mxu0 %v844
    %v1766 = vpop.f32.mrf.mxu0
    %v1767 = vadd.f32 %v1718, %v1766
    %v1768 = vpop.f32.mrf.mxu0
    %v1769 = vadd.f32 %v1720, %v1768
    %1770 = vdwg.mxu0
    %1771 = vmatpush.bf16.msra.mxu0 %v1492
    %1772 = vmatpush.bf16.msra.mxu0 %v1488
    %1773 = vmatpush.bf16.msra.mxu0 %v1484
    %1774 = vmatpush.bf16.msra.mxu0 %v1480
    %1775 = vmatpush.bf16.msra.mxu0 %v1476
    %1776 = vmatpush.bf16.msra.mxu0 %v1472
    %1777 = vmatpush.bf16.msra.mxu0 %v1468
    %1778 = vmatpush.bf16.msra.mxu0 %v1464
    %1779 = vmatmul.bf16.gmra.mxu0 %v817
    %v1780 = vpop.f32.mrf.mxu0
    %v1781 = vadd.f32 %v1732, %v1780
    %v1782 = vpop.f32.mrf.mxu0
    %v1783 = vadd.f32 %v1734, %v1782
    %1784 = vmatmul.bf16.gmra.mxu0 %v821
    %v1785 = vpop.f32.mrf.mxu0
    %v1786 = vadd.f32 %v1737, %v1785
    %v1787 = vpop.f32.mrf.mxu0
    %v1788 = vadd.f32 %v1739, %v1787
    %1789 = vmatmul.bf16.gmra.mxu0 %v825
    %v1790 = vpop.f32.mrf.mxu0
    %v1791 = vadd.f32 %v1742, %v1790
    %v1792 = vpop.f32.mrf.mxu0
    %v1793 = vadd.f32 %v1744, %v1792
    %1794 = vmatmul.bf16.gmra.mxu0 %v829
    %v1795 = vpop.f32.mrf.mxu0
    %v1796 = vadd.f32 %v1747, %v1795
    %v1797 = vpop.f32.mrf.mxu0
    %v1798 = vadd.f32 %v1749, %v1797
    %1799 = vmatmul.bf16.gmra.mxu0 %v833
    %v1800 = vpop.f32.mrf.mxu0
    %v1801 = vadd.f32 %v1752, %v1800
    %v1802 = vpop.f32.mrf.mxu0
    %v1803 = vadd.f32 %v1754, %v1802
    %1804 = vmatmul.bf16.gmra.mxu0 %v837
    %v1805 = vpop.f32.mrf.mxu0
    %v1806 = vadd.f32 %v1757, %v1805
    %v1807 = vpop.f32.mrf.mxu0
    %v1808 = vadd.f32 %v1759, %v1807
    %1809 = vmatmul.bf16.gmra.mxu0 %v841
    %v1810 = vpop.f32.mrf.mxu0
    %v1811 = vadd.f32 %v1762, %v1810
    %v1812 = vpop.f32.mrf.mxu0
    %v1813 = vadd.f32 %v1764, %v1812
    %1814 = vmatmul.bf16.gmra.mxu0 %v845
    %v1815 = vpop.f32.mrf.mxu0
    %v1816 = vadd.f32 %v1767, %v1815
    %v1817 = vpop.f32.mrf.mxu0
    %v1818 = vadd.f32 %v1769, %v1817
    %1819 = vdwg.mxu0
    %1820 = vmatpush.bf16.msra.mxu0 %v1397
    %1821 = vmatpush.bf16.msra.mxu0 %v1393
    %1822 = vmatpush.bf16.msra.mxu0 %v1389
    %1823 = vmatpush.bf16.msra.mxu0 %v1385
    %1824 = vmatpush.bf16.msra.mxu0 %v1381
    %1825 = vmatpush.bf16.msra.mxu0 %v1377
    %1826 = vmatpush.bf16.msra.mxu0 %v1373
    %1827 = vmatpush.bf16.msra.mxu0 %v1369
    %1828 = vmatmul.bf16.gmra.mxu0 %v814
    %v1829 = vpop.f32.mrf.mxu0
    %v1830 = vadd.f32 %v977, %v1829
    %v1831 = vpop.f32.mrf.mxu0
    %v1832 = vadd.f32 %v977, %v1831
    %1833 = vmatmul.bf16.gmra.mxu0 %v818
    %v1834 = vpop.f32.mrf.mxu0
    %v1835 = vadd.f32 %v977, %v1834
    %v1836 = vpop.f32.mrf.mxu0
    %v1837 = vadd.f32 %v977, %v1836
    %1838 = vmatmul.bf16.gmra.mxu0 %v822
    %v1839 = vpop.f32.mrf.mxu0
    %v1840 = vadd.f32 %v977, %v1839
    %v1841 = vpop.f32.mrf.mxu0
    %v1842 = vadd.f32 %v977, %v1841
    %1843 = vmatmul.bf16.gmra.mxu0 %v826
    %v1844 = vpop.f32.mrf.mxu0
    %v1845 = vadd.f32 %v977, %v1844
    %v1846 = vpop.f32.mrf.mxu0
    %v1847 = vadd.f32 %v977, %v1846
    %1848 = vmatmul.bf16.gmra.mxu0 %v830
    %v1849 = vpop.f32.mrf.mxu0
    %v1850 = vadd.f32 %v977, %v1849
    %v1851 = vpop.f32.mrf.mxu0
    %v1852 = vadd.f32 %v977, %v1851
    %1853 = vmatmul.bf16.gmra.mxu0 %v834
    %v1854 = vpop.f32.mrf.mxu0
    %v1855 = vadd.f32 %v977, %v1854
    %v1856 = vpop.f32.mrf.mxu0
    %v1857 = vadd.f32 %v977, %v1856
    %1858 = vmatmul.bf16.gmra.mxu0 %v838
    %v1859 = vpop.f32.mrf.mxu0
    %v1860 = vadd.f32 %v977, %v1859
    %v1861 = vpop.f32.mrf.mxu0
    %v1862 = vadd.f32 %v977, %v1861
    %1863 = vmatmul.bf16.gmra.mxu0 %v842
    %v1864 = vpop.f32.mrf.mxu0
    %v1865 = vadd.f32 %v977, %v1864
    %v1866 = vpop.f32.mrf.mxu0
    %v1867 = vadd.f32 %v977, %v1866
    %1868 = vdwg.mxu0
    %1869 = vmatpush.bf16.msra.mxu0 %v1429
    %1870 = vmatpush.bf16.msra.mxu0 %v1425
    %1871 = vmatpush.bf16.msra.mxu0 %v1421
    %1872 = vmatpush.bf16.msra.mxu0 %v1417
    %1873 = vmatpush.bf16.msra.mxu0 %v1413
    %1874 = vmatpush.bf16.msra.mxu0 %v1409
    %1875 = vmatpush.bf16.msra.mxu0 %v1405
    %1876 = vmatpush.bf16.msra.mxu0 %v1401
    %1877 = vmatmul.bf16.gmra.mxu0 %v815
    %v1878 = vpop.f32.mrf.mxu0
    %v1879 = vadd.f32 %v1830, %v1878
    %v1880 = vpop.f32.mrf.mxu0
    %v1881 = vadd.f32 %v1832, %v1880
    %1882 = vmatmul.bf16.gmra.mxu0 %v819
    %v1883 = vpop.f32.mrf.mxu0
    %v1884 = vadd.f32 %v1835, %v1883
    %v1885 = vpop.f32.mrf.mxu0
    %v1886 = vadd.f32 %v1837, %v1885
    %1887 = vmatmul.bf16.gmra.mxu0 %v823
    %v1888 = vpop.f32.mrf.mxu0
    %v1889 = vadd.f32 %v1840, %v1888
    %v1890 = vpop.f32.mrf.mxu0
    %v1891 = vadd.f32 %v1842, %v1890
    %1892 = vmatmul.bf16.gmra.mxu0 %v827
    %v1893 = vpop.f32.mrf.mxu0
    %v1894 = vadd.f32 %v1845, %v1893
    %v1895 = vpop.f32.mrf.mxu0
    %v1896 = vadd.f32 %v1847, %v1895
    %1897 = vmatmul.bf16.gmra.mxu0 %v831
    %v1898 = vpop.f32.mrf.mxu0
    %v1899 = vadd.f32 %v1850, %v1898
    %v1900 = vpop.f32.mrf.mxu0
    %v1901 = vadd.f32 %v1852, %v1900
    %1902 = vmatmul.bf16.gmra.mxu0 %v835
    %v1903 = vpop.f32.mrf.mxu0
    %v1904 = vadd.f32 %v1855, %v1903
    %v1905 = vpop.f32.mrf.mxu0
    %v1906 = vadd.f32 %v1857, %v1905
    %1907 = vmatmul.bf16.gmra.mxu0 %v839
    %v1908 = vpop.f32.mrf.mxu0
    %v1909 = vadd.f32 %v1860, %v1908
    %v1910 = vpop.f32.mrf.mxu0
    %v1911 = vadd.f32 %v1862, %v1910
    %1912 = vmatmul.bf16.gmra.mxu0 %v843
    %v1913 = vpop.f32.mrf.mxu0
    %v1914 = vadd.f32 %v1865, %v1913
    %v1915 = vpop.f32.mrf.mxu0
    %v1916 = vadd.f32 %v1867, %v1915
    %1917 = vdwg.mxu0
    %1918 = vmatpush.bf16.msra.mxu0 %v1461
    %1919 = vmatpush.bf16.msra.mxu0 %v1457
    %1920 = vmatpush.bf16.msra.mxu0 %v1453
    %1921 = vmatpush.bf16.msra.mxu0 %v1449
    %1922 = vmatpush.bf16.msra.mxu0 %v1445
    %1923 = vmatpush.bf16.msra.mxu0 %v1441
    %1924 = vmatpush.bf16.msra.mxu0 %v1437
    %1925 = vmatpush.bf16.msra.mxu0 %v1433
    %1926 = vmatmul.bf16.gmra.mxu0 %v816
    %v1927 = vpop.f32.mrf.mxu0
    %v1928 = vadd.f32 %v1879, %v1927
    %v1929 = vpop.f32.mrf.mxu0
    %v1930 = vadd.f32 %v1881, %v1929
    %1931 = vmatmul.bf16.gmra.mxu0 %v820
    %v1932 = vpop.f32.mrf.mxu0
    %v1933 = vadd.f32 %v1884, %v1932
    %v1934 = vpop.f32.mrf.mxu0
    %v1935 = vadd.f32 %v1886, %v1934
    %1936 = vmatmul.bf16.gmra.mxu0 %v824
    %v1937 = vpop.f32.mrf.mxu0
    %v1938 = vadd.f32 %v1889, %v1937
    %v1939 = vpop.f32.mrf.mxu0
    %v1940 = vadd.f32 %v1891, %v1939
    %1941 = vmatmul.bf16.gmra.mxu0 %v828
    %v1942 = vpop.f32.mrf.mxu0
    %v1943 = vadd.f32 %v1894, %v1942
    %v1944 = vpop.f32.mrf.mxu0
    %v1945 = vadd.f32 %v1896, %v1944
    %1946 = vmatmul.bf16.gmra.mxu0 %v832
    %v1947 = vpop.f32.mrf.mxu0
    %v1948 = vadd.f32 %v1899, %v1947
    %v1949 = vpop.f32.mrf.mxu0
    %v1950 = vadd.f32 %v1901, %v1949
    %1951 = vmatmul.bf16.gmra.mxu0 %v836
    %v1952 = vpop.f32.mrf.mxu0
    %v1953 = vadd.f32 %v1904, %v1952
    %v1954 = vpop.f32.mrf.mxu0
    %v1955 = vadd.f32 %v1906, %v1954
    %1956 = vmatmul.bf16.gmra.mxu0 %v840
    %v1957 = vpop.f32.mrf.mxu0
    %v1958 = vadd.f32 %v1909, %v1957
    %v1959 = vpop.f32.mrf.mxu0
    %v1960 = vadd.f32 %v1911, %v1959
    %1961 = vmatmul.bf16.gmra.mxu0 %v844
    %v1962 = vpop.f32.mrf.mxu0
    %v1963 = vadd.f32 %v1914, %v1962
    %v1964 = vpop.f32.mrf.mxu0
    %v1965 = vadd.f32 %v1916, %v1964
    %1966 = vdwg.mxu0
    %1967 = vmatpush.bf16.msra.mxu0 %v1493
    %1968 = vmatpush.bf16.msra.mxu0 %v1489
    %1969 = vmatpush.bf16.msra.mxu0 %v1485
    %1970 = vmatpush.bf16.msra.mxu0 %v1481
    %1971 = vmatpush.bf16.msra.mxu0 %v1477
    %1972 = vmatpush.bf16.msra.mxu0 %v1473
    %1973 = vmatpush.bf16.msra.mxu0 %v1469
    %1974 = vmatpush.bf16.msra.mxu0 %v1465
    %1975 = vmatmul.bf16.gmra.mxu0 %v817
    %v1976 = vpop.f32.mrf.mxu0
    %v1977 = vadd.f32 %v1928, %v1976
    %v1978 = vpop.f32.mrf.mxu0
    %v1979 = vadd.f32 %v1930, %v1978
    %1980 = vmatmul.bf16.gmra.mxu0 %v821
    %v1981 = vpop.f32.mrf.mxu0
    %v1982 = vadd.f32 %v1933, %v1981
    %v1983 = vpop.f32.mrf.mxu0
    %v1984 = vadd.f32 %v1935, %v1983
    %1985 = vmatmul.bf16.gmra.mxu0 %v825
    %v1986 = vpop.f32.mrf.mxu0
    %v1987 = vadd.f32 %v1938, %v1986
    %v1988 = vpop.f32.mrf.mxu0
    %v1989 = vadd.f32 %v1940, %v1988
    %1990 = vmatmul.bf16.gmra.mxu0 %v829
    %v1991 = vpop.f32.mrf.mxu0
    %v1992 = vadd.f32 %v1943, %v1991
    %v1993 = vpop.f32.mrf.mxu0
    %v1994 = vadd.f32 %v1945, %v1993
    %1995 = vmatmul.bf16.gmra.mxu0 %v833
    %v1996 = vpop.f32.mrf.mxu0
    %v1997 = vadd.f32 %v1948, %v1996
    %v1998 = vpop.f32.mrf.mxu0
    %v1999 = vadd.f32 %v1950, %v1998
    %2000 = vmatmul.bf16.gmra.mxu0 %v837
    %v2001 = vpop.f32.mrf.mxu0
    %v2002 = vadd.f32 %v1953, %v2001
    %v2003 = vpop.f32.mrf.mxu0
    %v2004 = vadd.f32 %v1955, %v2003
    %2005 = vmatmul.bf16.gmra.mxu0 %v841
    %v2006 = vpop.f32.mrf.mxu0
    %v2007 = vadd.f32 %v1958, %v2006
    %v2008 = vpop.f32.mrf.mxu0
    %v2009 = vadd.f32 %v1960, %v2008
    %2010 = vmatmul.bf16.gmra.mxu0 %v845
    %v2011 = vpop.f32.mrf.mxu0
    %v2012 = vadd.f32 %v1963, %v2011
    %v2013 = vpop.f32.mrf.mxu0
    %v2014 = vadd.f32 %v1965, %v2013
    %2015 = vdwg.mxu0
    %2016 = vmatpush.bf16.msra.mxu0 %v1398
    %2017 = vmatpush.bf16.msra.mxu0 %v1394
    %2018 = vmatpush.bf16.msra.mxu0 %v1390
    %2019 = vmatpush.bf16.msra.mxu0 %v1386
    %2020 = vmatpush.bf16.msra.mxu0 %v1382
    %2021 = vmatpush.bf16.msra.mxu0 %v1378
    %2022 = vmatpush.bf16.msra.mxu0 %v1374
    %2023 = vmatpush.bf16.msra.mxu0 %v1370
    %2024 = vmatmul.bf16.gmra.mxu0 %v814
    %v2025 = vpop.f32.mrf.mxu0
    %v2026 = vadd.f32 %v978, %v2025
    %v2027 = vpop.f32.mrf.mxu0
    %v2028 = vadd.f32 %v978, %v2027
    %2029 = vmatmul.bf16.gmra.mxu0 %v818
    %v2030 = vpop.f32.mrf.mxu0
    %v2031 = vadd.f32 %v978, %v2030
    %v2032 = vpop.f32.mrf.mxu0
    %v2033 = vadd.f32 %v978, %v2032
    %2034 = vmatmul.bf16.gmra.mxu0 %v822
    %v2035 = vpop.f32.mrf.mxu0
    %v2036 = vadd.f32 %v978, %v2035
    %v2037 = vpop.f32.mrf.mxu0
    %v2038 = vadd.f32 %v978, %v2037
    %2039 = vmatmul.bf16.gmra.mxu0 %v826
    %v2040 = vpop.f32.mrf.mxu0
    %v2041 = vadd.f32 %v978, %v2040
    %v2042 = vpop.f32.mrf.mxu0
    %v2043 = vadd.f32 %v978, %v2042
    %2044 = vmatmul.bf16.gmra.mxu0 %v830
    %v2045 = vpop.f32.mrf.mxu0
    %v2046 = vadd.f32 %v978, %v2045
    %v2047 = vpop.f32.mrf.mxu0
    %v2048 = vadd.f32 %v978, %v2047
    %2049 = vmatmul.bf16.gmra.mxu0 %v834
    %v2050 = vpop.f32.mrf.mxu0
    %v2051 = vadd.f32 %v978, %v2050
    %v2052 = vpop.f32.mrf.mxu0
    %v2053 = vadd.f32 %v978, %v2052
    %2054 = vmatmul.bf16.gmra.mxu0 %v838
    %v2055 = vpop.f32.mrf.mxu0
    %v2056 = vadd.f32 %v978, %v2055
    %v2057 = vpop.f32.mrf.mxu0
    %v2058 = vadd.f32 %v978, %v2057
    %2059 = vmatmul.bf16.gmra.mxu0 %v842
    %v2060 = vpop.f32.mrf.mxu0
    %v2061 = vadd.f32 %v978, %v2060
    %v2062 = vpop.f32.mrf.mxu0
    %v2063 = vadd.f32 %v978, %v2062
    %2064 = vdwg.mxu0
    %2065 = vmatpush.bf16.msra.mxu0 %v1430
    %2066 = vmatpush.bf16.msra.mxu0 %v1426
    %2067 = vmatpush.bf16.msra.mxu0 %v1422
    %2068 = vmatpush.bf16.msra.mxu0 %v1418
    %2069 = vmatpush.bf16.msra.mxu0 %v1414
    %2070 = vmatpush.bf16.msra.mxu0 %v1410
    %2071 = vmatpush.bf16.msra.mxu0 %v1406
    %2072 = vmatpush.bf16.msra.mxu0 %v1402
    %2073 = vmatmul.bf16.gmra.mxu0 %v815
    %v2074 = vpop.f32.mrf.mxu0
    %v2075 = vadd.f32 %v2026, %v2074
    %v2076 = vpop.f32.mrf.mxu0
    %v2077 = vadd.f32 %v2028, %v2076
    %2078 = vmatmul.bf16.gmra.mxu0 %v819
    %v2079 = vpop.f32.mrf.mxu0
    %v2080 = vadd.f32 %v2031, %v2079
    %v2081 = vpop.f32.mrf.mxu0
    %v2082 = vadd.f32 %v2033, %v2081
    %2083 = vmatmul.bf16.gmra.mxu0 %v823
    %v2084 = vpop.f32.mrf.mxu0
    %v2085 = vadd.f32 %v2036, %v2084
    %v2086 = vpop.f32.mrf.mxu0
    %v2087 = vadd.f32 %v2038, %v2086
    %2088 = vmatmul.bf16.gmra.mxu0 %v827
    %v2089 = vpop.f32.mrf.mxu0
    %v2090 = vadd.f32 %v2041, %v2089
    %v2091 = vpop.f32.mrf.mxu0
    %v2092 = vadd.f32 %v2043, %v2091
    %2093 = vmatmul.bf16.gmra.mxu0 %v831
    %v2094 = vpop.f32.mrf.mxu0
    %v2095 = vadd.f32 %v2046, %v2094
    %v2096 = vpop.f32.mrf.mxu0
    %v2097 = vadd.f32 %v2048, %v2096
    %2098 = vmatmul.bf16.gmra.mxu0 %v835
    %v2099 = vpop.f32.mrf.mxu0
    %v2100 = vadd.f32 %v2051, %v2099
    %v2101 = vpop.f32.mrf.mxu0
    %v2102 = vadd.f32 %v2053, %v2101
    %2103 = vmatmul.bf16.gmra.mxu0 %v839
    %v2104 = vpop.f32.mrf.mxu0
    %v2105 = vadd.f32 %v2056, %v2104
    %v2106 = vpop.f32.mrf.mxu0
    %v2107 = vadd.f32 %v2058, %v2106
    %2108 = vmatmul.bf16.gmra.mxu0 %v843
    %v2109 = vpop.f32.mrf.mxu0
    %v2110 = vadd.f32 %v2061, %v2109
    %v2111 = vpop.f32.mrf.mxu0
    %v2112 = vadd.f32 %v2063, %v2111
    %2113 = vdwg.mxu0
    %2114 = vmatpush.bf16.msra.mxu0 %v1462
    %2115 = vmatpush.bf16.msra.mxu0 %v1458
    %2116 = vmatpush.bf16.msra.mxu0 %v1454
    %2117 = vmatpush.bf16.msra.mxu0 %v1450
    %2118 = vmatpush.bf16.msra.mxu0 %v1446
    %2119 = vmatpush.bf16.msra.mxu0 %v1442
    %2120 = vmatpush.bf16.msra.mxu0 %v1438
    %2121 = vmatpush.bf16.msra.mxu0 %v1434
    %2122 = vmatmul.bf16.gmra.mxu0 %v816
    %v2123 = vpop.f32.mrf.mxu0
    %v2124 = vadd.f32 %v2075, %v2123
    %v2125 = vpop.f32.mrf.mxu0
    %v2126 = vadd.f32 %v2077, %v2125
    %2127 = vmatmul.bf16.gmra.mxu0 %v820
    %v2128 = vpop.f32.mrf.mxu0
    %v2129 = vadd.f32 %v2080, %v2128
    %v2130 = vpop.f32.mrf.mxu0
    %v2131 = vadd.f32 %v2082, %v2130
    %2132 = vmatmul.bf16.gmra.mxu0 %v824
    %v2133 = vpop.f32.mrf.mxu0
    %v2134 = vadd.f32 %v2085, %v2133
    %v2135 = vpop.f32.mrf.mxu0
    %v2136 = vadd.f32 %v2087, %v2135
    %2137 = vmatmul.bf16.gmra.mxu0 %v828
    %v2138 = vpop.f32.mrf.mxu0
    %v2139 = vadd.f32 %v2090, %v2138
    %v2140 = vpop.f32.mrf.mxu0
    %v2141 = vadd.f32 %v2092, %v2140
    %2142 = vmatmul.bf16.gmra.mxu0 %v832
    %v2143 = vpop.f32.mrf.mxu0
    %v2144 = vadd.f32 %v2095, %v2143
    %v2145 = vpop.f32.mrf.mxu0
    %v2146 = vadd.f32 %v2097, %v2145
    %2147 = vmatmul.bf16.gmra.mxu0 %v836
    %v2148 = vpop.f32.mrf.mxu0
    %v2149 = vadd.f32 %v2100, %v2148
    %v2150 = vpop.f32.mrf.mxu0
    %v2151 = vadd.f32 %v2102, %v2150
    %2152 = vmatmul.bf16.gmra.mxu0 %v840
    %v2153 = vpop.f32.mrf.mxu0
    %v2154 = vadd.f32 %v2105, %v2153
    %v2155 = vpop.f32.mrf.mxu0
    %v2156 = vadd.f32 %v2107, %v2155
    %2157 = vmatmul.bf16.gmra.mxu0 %v844
    %v2158 = vpop.f32.mrf.mxu0
    %v2159 = vadd.f32 %v2110, %v2158
    %v2160 = vpop.f32.mrf.mxu0
    %v2161 = vadd.f32 %v2112, %v2160
    %2162 = vdwg.mxu0
    %2163 = vmatpush.bf16.msra.mxu0 %v1494
    %2164 = vmatpush.bf16.msra.mxu0 %v1490
    %2165 = vmatpush.bf16.msra.mxu0 %v1486
    %2166 = vmatpush.bf16.msra.mxu0 %v1482
    %2167 = vmatpush.bf16.msra.mxu0 %v1478
    %2168 = vmatpush.bf16.msra.mxu0 %v1474
    %2169 = vmatpush.bf16.msra.mxu0 %v1470
    %2170 = vmatpush.bf16.msra.mxu0 %v1466
    %2171 = vmatmul.bf16.gmra.mxu0 %v817
    %v2172 = vpop.f32.mrf.mxu0
    %v2173 = vadd.f32 %v2124, %v2172
    %v2174 = vpop.f32.mrf.mxu0
    %v2175 = vadd.f32 %v2126, %v2174
    %2176 = vmatmul.bf16.gmra.mxu0 %v821
    %v2177 = vpop.f32.mrf.mxu0
    %v2178 = vadd.f32 %v2129, %v2177
    %v2179 = vpop.f32.mrf.mxu0
    %v2180 = vadd.f32 %v2131, %v2179
    %2181 = vmatmul.bf16.gmra.mxu0 %v825
    %v2182 = vpop.f32.mrf.mxu0
    %v2183 = vadd.f32 %v2134, %v2182
    %v2184 = vpop.f32.mrf.mxu0
    %v2185 = vadd.f32 %v2136, %v2184
    %2186 = vmatmul.bf16.gmra.mxu0 %v829
    %v2187 = vpop.f32.mrf.mxu0
    %v2188 = vadd.f32 %v2139, %v2187
    %v2189 = vpop.f32.mrf.mxu0
    %v2190 = vadd.f32 %v2141, %v2189
    %2191 = vmatmul.bf16.gmra.mxu0 %v833
    %v2192 = vpop.f32.mrf.mxu0
    %v2193 = vadd.f32 %v2144, %v2192
    %v2194 = vpop.f32.mrf.mxu0
    %v2195 = vadd.f32 %v2146, %v2194
    %2196 = vmatmul.bf16.gmra.mxu0 %v837
    %v2197 = vpop.f32.mrf.mxu0
    %v2198 = vadd.f32 %v2149, %v2197
    %v2199 = vpop.f32.mrf.mxu0
    %v2200 = vadd.f32 %v2151, %v2199
    %2201 = vmatmul.bf16.gmra.mxu0 %v841
    %v2202 = vpop.f32.mrf.mxu0
    %v2203 = vadd.f32 %v2154, %v2202
    %v2204 = vpop.f32.mrf.mxu0
    %v2205 = vadd.f32 %v2156, %v2204
    %2206 = vmatmul.bf16.gmra.mxu0 %v845
    %v2207 = vpop.f32.mrf.mxu0
    %v2208 = vadd.f32 %v2159, %v2207
    %v2209 = vpop.f32.mrf.mxu0
    %v2210 = vadd.f32 %v2161, %v2209
    %2211 = vdwg.mxu0
    %2212 = vmatpush.bf16.msra.mxu0 %v1399
    %2213 = vmatpush.bf16.msra.mxu0 %v1395
    %2214 = vmatpush.bf16.msra.mxu0 %v1391
    %2215 = vmatpush.bf16.msra.mxu0 %v1387
    %2216 = vmatpush.bf16.msra.mxu0 %v1383
    %2217 = vmatpush.bf16.msra.mxu0 %v1379
    %2218 = vmatpush.bf16.msra.mxu0 %v1375
    %2219 = vmatpush.bf16.msra.mxu0 %v1371
    %2220 = vmatmul.bf16.gmra.mxu0 %v814
    %v2221 = vpop.f32.mrf.mxu0
    %v2222 = vadd.f32 %v979, %v2221
    %v2223 = vpop.f32.mrf.mxu0
    %v2224 = vadd.f32 %v979, %v2223
    %2225 = vmatmul.bf16.gmra.mxu0 %v818
    %v2226 = vpop.f32.mrf.mxu0
    %v2227 = vadd.f32 %v979, %v2226
    %v2228 = vpop.f32.mrf.mxu0
    %v2229 = vadd.f32 %v979, %v2228
    %2230 = vmatmul.bf16.gmra.mxu0 %v822
    %v2231 = vpop.f32.mrf.mxu0
    %v2232 = vadd.f32 %v979, %v2231
    %v2233 = vpop.f32.mrf.mxu0
    %v2234 = vadd.f32 %v979, %v2233
    %2235 = vmatmul.bf16.gmra.mxu0 %v826
    %v2236 = vpop.f32.mrf.mxu0
    %v2237 = vadd.f32 %v979, %v2236
    %v2238 = vpop.f32.mrf.mxu0
    %v2239 = vadd.f32 %v979, %v2238
    %2240 = vmatmul.bf16.gmra.mxu0 %v830
    %v2241 = vpop.f32.mrf.mxu0
    %v2242 = vadd.f32 %v979, %v2241
    %v2243 = vpop.f32.mrf.mxu0
    %v2244 = vadd.f32 %v979, %v2243
    %2245 = vmatmul.bf16.gmra.mxu0 %v834
    %v2246 = vpop.f32.mrf.mxu0
    %v2247 = vadd.f32 %v979, %v2246
    %v2248 = vpop.f32.mrf.mxu0
    %v2249 = vadd.f32 %v979, %v2248
    %2250 = vmatmul.bf16.gmra.mxu0 %v838
    %v2251 = vpop.f32.mrf.mxu0
    %v2252 = vadd.f32 %v979, %v2251
    %v2253 = vpop.f32.mrf.mxu0
    %v2254 = vadd.f32 %v979, %v2253
    %2255 = vmatmul.bf16.gmra.mxu0 %v842
    %v2256 = vpop.f32.mrf.mxu0
    %v2257 = vadd.f32 %v979, %v2256
    %v2258 = vpop.f32.mrf.mxu0
    %v2259 = vadd.f32 %v979, %v2258
    %2260 = vdwg.mxu0
    %2261 = vmatpush.bf16.msra.mxu0 %v1431
    %2262 = vmatpush.bf16.msra.mxu0 %v1427
    %2263 = vmatpush.bf16.msra.mxu0 %v1423
    %2264 = vmatpush.bf16.msra.mxu0 %v1419
    %2265 = vmatpush.bf16.msra.mxu0 %v1415
    %2266 = vmatpush.bf16.msra.mxu0 %v1411
    %2267 = vmatpush.bf16.msra.mxu0 %v1407
    %2268 = vmatpush.bf16.msra.mxu0 %v1403
    %2269 = vmatmul.bf16.gmra.mxu0 %v815
    %v2270 = vpop.f32.mrf.mxu0
    %v2271 = vadd.f32 %v2222, %v2270
    %v2272 = vpop.f32.mrf.mxu0
    %v2273 = vadd.f32 %v2224, %v2272
    %2274 = vmatmul.bf16.gmra.mxu0 %v819
    %v2275 = vpop.f32.mrf.mxu0
    %v2276 = vadd.f32 %v2227, %v2275
    %v2277 = vpop.f32.mrf.mxu0
    %v2278 = vadd.f32 %v2229, %v2277
    %2279 = vmatmul.bf16.gmra.mxu0 %v823
    %v2280 = vpop.f32.mrf.mxu0
    %v2281 = vadd.f32 %v2232, %v2280
    %v2282 = vpop.f32.mrf.mxu0
    %v2283 = vadd.f32 %v2234, %v2282
    %2284 = vmatmul.bf16.gmra.mxu0 %v827
    %v2285 = vpop.f32.mrf.mxu0
    %v2286 = vadd.f32 %v2237, %v2285
    %v2287 = vpop.f32.mrf.mxu0
    %v2288 = vadd.f32 %v2239, %v2287
    %2289 = vmatmul.bf16.gmra.mxu0 %v831
    %v2290 = vpop.f32.mrf.mxu0
    %v2291 = vadd.f32 %v2242, %v2290
    %v2292 = vpop.f32.mrf.mxu0
    %v2293 = vadd.f32 %v2244, %v2292
    %2294 = vmatmul.bf16.gmra.mxu0 %v835
    %v2295 = vpop.f32.mrf.mxu0
    %v2296 = vadd.f32 %v2247, %v2295
    %v2297 = vpop.f32.mrf.mxu0
    %v2298 = vadd.f32 %v2249, %v2297
    %2299 = vmatmul.bf16.gmra.mxu0 %v839
    %v2300 = vpop.f32.mrf.mxu0
    %v2301 = vadd.f32 %v2252, %v2300
    %v2302 = vpop.f32.mrf.mxu0
    %v2303 = vadd.f32 %v2254, %v2302
    %2304 = vmatmul.bf16.gmra.mxu0 %v843
    %v2305 = vpop.f32.mrf.mxu0
    %v2306 = vadd.f32 %v2257, %v2305
    %v2307 = vpop.f32.mrf.mxu0
    %v2308 = vadd.f32 %v2259, %v2307
    %2309 = vdwg.mxu0
    %2310 = vmatpush.bf16.msra.mxu0 %v1463
    %2311 = vmatpush.bf16.msra.mxu0 %v1459
    %2312 = vmatpush.bf16.msra.mxu0 %v1455
    %2313 = vmatpush.bf16.msra.mxu0 %v1451
    %2314 = vmatpush.bf16.msra.mxu0 %v1447
    %2315 = vmatpush.bf16.msra.mxu0 %v1443
    %2316 = vmatpush.bf16.msra.mxu0 %v1439
    %2317 = vmatpush.bf16.msra.mxu0 %v1435
    %2318 = vmatmul.bf16.gmra.mxu0 %v816
    %v2319 = vpop.f32.mrf.mxu0
    %v2320 = vadd.f32 %v2271, %v2319
    %v2321 = vpop.f32.mrf.mxu0
    %v2322 = vadd.f32 %v2273, %v2321
    %2323 = vmatmul.bf16.gmra.mxu0 %v820
    %v2324 = vpop.f32.mrf.mxu0
    %v2325 = vadd.f32 %v2276, %v2324
    %v2326 = vpop.f32.mrf.mxu0
    %v2327 = vadd.f32 %v2278, %v2326
    %2328 = vmatmul.bf16.gmra.mxu0 %v824
    %v2329 = vpop.f32.mrf.mxu0
    %v2330 = vadd.f32 %v2281, %v2329
    %v2331 = vpop.f32.mrf.mxu0
    %v2332 = vadd.f32 %v2283, %v2331
    %2333 = vmatmul.bf16.gmra.mxu0 %v828
    %v2334 = vpop.f32.mrf.mxu0
    %v2335 = vadd.f32 %v2286, %v2334
    %v2336 = vpop.f32.mrf.mxu0
    %v2337 = vadd.f32 %v2288, %v2336
    %2338 = vmatmul.bf16.gmra.mxu0 %v832
    %v2339 = vpop.f32.mrf.mxu0
    %v2340 = vadd.f32 %v2291, %v2339
    %v2341 = vpop.f32.mrf.mxu0
    %v2342 = vadd.f32 %v2293, %v2341
    %2343 = vmatmul.bf16.gmra.mxu0 %v836
    %v2344 = vpop.f32.mrf.mxu0
    %v2345 = vadd.f32 %v2296, %v2344
    %v2346 = vpop.f32.mrf.mxu0
    %v2347 = vadd.f32 %v2298, %v2346
    %2348 = vmatmul.bf16.gmra.mxu0 %v840
    %v2349 = vpop.f32.mrf.mxu0
    %v2350 = vadd.f32 %v2301, %v2349
    %v2351 = vpop.f32.mrf.mxu0
    %v2352 = vadd.f32 %v2303, %v2351
    %2353 = vmatmul.bf16.gmra.mxu0 %v844
    %v2354 = vpop.f32.mrf.mxu0
    %v2355 = vadd.f32 %v2306, %v2354
    %v2356 = vpop.f32.mrf.mxu0
    %v2357 = vadd.f32 %v2308, %v2356
    %2358 = vdwg.mxu0
    %2359 = vmatpush.bf16.msra.mxu0 %v1495
    %2360 = vmatpush.bf16.msra.mxu0 %v1491
    %2361 = vmatpush.bf16.msra.mxu0 %v1487
    %2362 = vmatpush.bf16.msra.mxu0 %v1483
    %2363 = vmatpush.bf16.msra.mxu0 %v1479
    %2364 = vmatpush.bf16.msra.mxu0 %v1475
    %2365 = vmatpush.bf16.msra.mxu0 %v1471
    %2366 = vmatpush.bf16.msra.mxu0 %v1467
    %2367 = vmatmul.bf16.gmra.mxu0 %v817
    %v2368 = vpop.f32.mrf.mxu0
    %v2369 = vadd.f32 %v2320, %v2368
    %v2370 = vpop.f32.mrf.mxu0
    %v2371 = vadd.f32 %v2322, %v2370
    %2372 = vmatmul.bf16.gmra.mxu0 %v821
    %v2373 = vpop.f32.mrf.mxu0
    %v2374 = vadd.f32 %v2325, %v2373
    %v2375 = vpop.f32.mrf.mxu0
    %v2376 = vadd.f32 %v2327, %v2375
    %2377 = vmatmul.bf16.gmra.mxu0 %v825
    %v2378 = vpop.f32.mrf.mxu0
    %v2379 = vadd.f32 %v2330, %v2378
    %v2380 = vpop.f32.mrf.mxu0
    %v2381 = vadd.f32 %v2332, %v2380
    %2382 = vmatmul.bf16.gmra.mxu0 %v829
    %v2383 = vpop.f32.mrf.mxu0
    %v2384 = vadd.f32 %v2335, %v2383
    %v2385 = vpop.f32.mrf.mxu0
    %v2386 = vadd.f32 %v2337, %v2385
    %2387 = vmatmul.bf16.gmra.mxu0 %v833
    %v2388 = vpop.f32.mrf.mxu0
    %v2389 = vadd.f32 %v2340, %v2388
    %v2390 = vpop.f32.mrf.mxu0
    %v2391 = vadd.f32 %v2342, %v2390
    %2392 = vmatmul.bf16.gmra.mxu0 %v837
    %v2393 = vpop.f32.mrf.mxu0
    %v2394 = vadd.f32 %v2345, %v2393
    %v2395 = vpop.f32.mrf.mxu0
    %v2396 = vadd.f32 %v2347, %v2395
    %2397 = vmatmul.bf16.gmra.mxu0 %v841
    %v2398 = vpop.f32.mrf.mxu0
    %v2399 = vadd.f32 %v2350, %v2398
    %v2400 = vpop.f32.mrf.mxu0
    %v2401 = vadd.f32 %v2352, %v2400
    %2402 = vmatmul.bf16.gmra.mxu0 %v845
    %v2403 = vpop.f32.mrf.mxu0
    %v2404 = vadd.f32 %v2355, %v2403
    %v2405 = vpop.f32.mrf.mxu0
    %v2406 = vadd.f32 %v2357, %v2405
    %2407 = vdwg.mxu0
    %v2408 = vtanh.pop %v1781
    %v2409 = vtanh.pop %v1977
    %v2410 = vtanh.pop %v2173
    %v2411 = vtanh.pop %v2369
    %v2412 = vtanh.pop %v1783
    %v2413 = vtanh.pop %v1979
    %v2414 = vtanh.pop %v2175
    %v2415 = vtanh.pop %v2371
    %v2416 = vtanh.pop %v1786
    %v2417 = vtanh.pop %v1982
    %v2418 = vtanh.pop %v2178
    %v2419 = vtanh.pop %v2374
    %v2420 = vtanh.pop %v1788
    %v2421 = vtanh.pop %v1984
    %v2422 = vtanh.pop %v2180
    %v2423 = vtanh.pop %v2376
    %v2424 = vtanh.pop %v1791
    %v2425 = vtanh.pop %v1987
    %v2426 = vtanh.pop %v2183
    %v2427 = vtanh.pop %v2379
    %v2428 = vtanh.pop %v1793
    %v2429 = vtanh.pop %v1989
    %v2430 = vtanh.pop %v2185
    %v2431 = vtanh.pop %v2381
    %v2432 = vtanh.pop %v1796
    %v2433 = vtanh.pop %v1992
    %v2434 = vtanh.pop %v2188
    %v2435 = vtanh.pop %v2384
    %v2436 = vtanh.pop %v1798
    %v2437 = vtanh.pop %v1994
    %v2438 = vtanh.pop %v2190
    %v2439 = vtanh.pop %v2386
    %v2440 = vtanh.pop %v1801
    %v2441 = vtanh.pop %v1997
    %v2442 = vtanh.pop %v2193
    %v2443 = vtanh.pop %v2389
    %v2444 = vtanh.pop %v1803
    %v2445 = vtanh.pop %v1999
    %v2446 = vtanh.pop %v2195
    %v2447 = vtanh.pop %v2391
    %v2448 = vtanh.pop %v1806
    %v2449 = vtanh.pop %v2002
    %v2450 = vtanh.pop %v2198
    %v2451 = vtanh.pop %v2394
    %v2452 = vtanh.pop %v1808
    %v2453 = vtanh.pop %v2004
    %v2454 = vtanh.pop %v2200
    %v2455 = vtanh.pop %v2396
    %v2456 = vtanh.pop %v1811
    %v2457 = vtanh.pop %v2007
    %v2458 = vtanh.pop %v2203
    %v2459 = vtanh.pop %v2399
    %v2460 = vtanh.pop %v1813
    %v2461 = vtanh.pop %v2009
    %v2462 = vtanh.pop %v2205
    %v2463 = vtanh.pop %v2401
    %v2464 = vtanh.pop %v1816
    %v2465 = vtanh.pop %v2012
    %v2466 = vtanh.pop %v2208
    %v2467 = vtanh.pop %v2404
    %v2468 = vtanh.pop %v1818
    %v2469 = vtanh.pop %v2014
    %v2470 = vtanh.pop %v2210
    %v2471 = vtanh.pop %v2406
    %v2472 = vpack.c.bf16 %v2412, %v2408
    %v2473 = vpack.c.bf16 %v2413, %v2409
    %v2474 = vpack.c.bf16 %v2414, %v2410
    %v2475 = vpack.c.bf16 %v2415, %v2411
    %v2476 = vpack.c.bf16 %v2420, %v2416
    %v2477 = vpack.c.bf16 %v2421, %v2417
    %v2478 = vpack.c.bf16 %v2422, %v2418
    %v2479 = vpack.c.bf16 %v2423, %v2419
    %v2480 = vpack.c.bf16 %v2428, %v2424
    %v2481 = vpack.c.bf16 %v2429, %v2425
    %v2482 = vpack.c.bf16 %v2430, %v2426
    %v2483 = vpack.c.bf16 %v2431, %v2427
    %v2484 = vpack.c.bf16 %v2436, %v2432
    %v2485 = vpack.c.bf16 %v2437, %v2433
    %v2486 = vpack.c.bf16 %v2438, %v2434
    %v2487 = vpack.c.bf16 %v2439, %v2435
    %v2488 = vpack.c.bf16 %v2444, %v2440
    %v2489 = vpack.c.bf16 %v2445, %v2441
    %v2490 = vpack.c.bf16 %v2446, %v2442
    %v2491 = vpack.c.bf16 %v2447, %v2443
    %v2492 = vpack.c.bf16 %v2452, %v2448
    %v2493 = vpack.c.bf16 %v2453, %v2449
    %v2494 = vpack.c.bf16 %v2454, %v2450
    %v2495 = vpack.c.bf16 %v2455, %v2451
    %v2496 = vpack.c.bf16 %v2460, %v2456
    %v2497 = vpack.c.bf16 %v2461, %v2457
    %v2498 = vpack.c.bf16 %v2462, %v2458
    %v2499 = vpack.c.bf16 %v2463, %v2459
    %v2500 = vpack.c.bf16 %v2468, %v2464
    %v2501 = vpack.c.bf16 %v2469, %v2465
    %v2502 = vpack.c.bf16 %v2470, %v2466
    %v2503 = vpack.c.bf16 %v2471, %v2467
    %s2504 = scalar_lea.vmem [#allocation7], 1024
    %v2505 = vld [vmem:[%s2504] sm:$0xff]
    %v2506 = vld [vmem:[%s2504 + $0x8] sm:$0xff]
    %v2507 = vld [vmem:[%s2504 + $0x10] sm:$0xff]
    %v2508 = vld [vmem:[%s2504 + $0x18] sm:$0xff]
    %v2509 = vld [vmem:[%s2504 + $0x20] sm:$0xff]
    %v2510 = vld [vmem:[%s2504 + $0x28] sm:$0xff]
    %v2511 = vld [vmem:[%s2504 + $0x30] sm:$0xff]
    %v2512 = vld [vmem:[%s2504 + $0x38] sm:$0xff]
    %v2513 = vld [vmem:[%s2504 + $0x40] sm:$0xff]
    %v2514 = vld [vmem:[%s2504 + $0x48] sm:$0xff]
    %v2515 = vld [vmem:[%s2504 + $0x50] sm:$0xff]
    %v2516 = vld [vmem:[%s2504 + $0x58] sm:$0xff]
    %v2517 = vld [vmem:[%s2504 + $0x60] sm:$0xff]
    %v2518 = vld [vmem:[%s2504 + $0x68] sm:$0xff]
    %v2519 = vld [vmem:[%s2504 + $0x70] sm:$0xff]
    %v2520 = vld [vmem:[%s2504 + $0x78] sm:$0xff]
    %v2521 = vld [vmem:[%s2504 + $0x80] sm:$0xff]
    %v2522 = vld [vmem:[%s2504 + $0x88] sm:$0xff]
    %v2523 = vld [vmem:[%s2504 + $0x90] sm:$0xff]
    %v2524 = vld [vmem:[%s2504 + $0x98] sm:$0xff]
    %v2525 = vld [vmem:[%s2504 + $0xa0] sm:$0xff]
    %v2526 = vld [vmem:[%s2504 + $0xa8] sm:$0xff]
    %v2527 = vld [vmem:[%s2504 + $0xb0] sm:$0xff]
    %v2528 = vld [vmem:[%s2504 + $0xb8] sm:$0xff]
    %v2529 = vld [vmem:[%s2504 + $0xc0] sm:$0xff]
    %v2530 = vld [vmem:[%s2504 + $0xc8] sm:$0xff]
    %v2531 = vld [vmem:[%s2504 + $0xd0] sm:$0xff]
    %v2532 = vld [vmem:[%s2504 + $0xd8] sm:$0xff]
    %v2533 = vld [vmem:[%s2504 + $0xe0] sm:$0xff]
    %v2534 = vld [vmem:[%s2504 + $0xe8] sm:$0xff]
    %v2535 = vld [vmem:[%s2504 + $0xf0] sm:$0xff]
    %v2536 = vld [vmem:[%s2504 + $0xf8] sm:$0xff]
    %v2537 = vld [vmem:[%s2504 + $0x100] sm:$0xff]
    %v2538 = vld [vmem:[%s2504 + $0x108] sm:$0xff]
    %v2539 = vld [vmem:[%s2504 + $0x110] sm:$0xff]
    %v2540 = vld [vmem:[%s2504 + $0x118] sm:$0xff]
    %v2541 = vld [vmem:[%s2504 + $0x120] sm:$0xff]
    %v2542 = vld [vmem:[%s2504 + $0x128] sm:$0xff]
    %v2543 = vld [vmem:[%s2504 + $0x130] sm:$0xff]
    %v2544 = vld [vmem:[%s2504 + $0x138] sm:$0xff]
    %v2545 = vld [vmem:[%s2504 + $0x140] sm:$0xff]
    %v2546 = vld [vmem:[%s2504 + $0x148] sm:$0xff]
    %v2547 = vld [vmem:[%s2504 + $0x150] sm:$0xff]
    %v2548 = vld [vmem:[%s2504 + $0x158] sm:$0xff]
    %v2549 = vld [vmem:[%s2504 + $0x160] sm:$0xff]
    %v2550 = vld [vmem:[%s2504 + $0x168] sm:$0xff]
    %v2551 = vld [vmem:[%s2504 + $0x170] sm:$0xff]
    %v2552 = vld [vmem:[%s2504 + $0x178] sm:$0xff]
    %v2553 = vld [vmem:[%s2504 + $0x180] sm:$0xff]
    %v2554 = vld [vmem:[%s2504 + $0x188] sm:$0xff]
    %v2555 = vld [vmem:[%s2504 + $0x190] sm:$0xff]
    %v2556 = vld [vmem:[%s2504 + $0x198] sm:$0xff]
    %v2557 = vld [vmem:[%s2504 + $0x1a0] sm:$0xff]
    %v2558 = vld [vmem:[%s2504 + $0x1a8] sm:$0xff]
    %v2559 = vld [vmem:[%s2504 + $0x1b0] sm:$0xff]
    %v2560 = vld [vmem:[%s2504 + $0x1b8] sm:$0xff]
    %v2561 = vld [vmem:[%s2504 + $0x1c0] sm:$0xff]
    %v2562 = vld [vmem:[%s2504 + $0x1c8] sm:$0xff]
    %v2563 = vld [vmem:[%s2504 + $0x1d0] sm:$0xff]
    %v2564 = vld [vmem:[%s2504 + $0x1d8] sm:$0xff]
    %v2565 = vld [vmem:[%s2504 + $0x1e0] sm:$0xff]
    %v2566 = vld [vmem:[%s2504 + $0x1e8] sm:$0xff]
    %v2567 = vld [vmem:[%s2504 + $0x1f0] sm:$0xff]
    %v2568 = vld [vmem:[%s2504 + $0x1f8] sm:$0xff]
    %v2569 = vld [vmem:[%s2504 + $0x200] sm:$0xff]
    %v2570 = vld [vmem:[%s2504 + $0x208] sm:$0xff]
    %v2571 = vld [vmem:[%s2504 + $0x210] sm:$0xff]
    %v2572 = vld [vmem:[%s2504 + $0x218] sm:$0xff]
    %v2573 = vld [vmem:[%s2504 + $0x220] sm:$0xff]
    %v2574 = vld [vmem:[%s2504 + $0x228] sm:$0xff]
    %v2575 = vld [vmem:[%s2504 + $0x230] sm:$0xff]
    %v2576 = vld [vmem:[%s2504 + $0x238] sm:$0xff]
    %v2577 = vld [vmem:[%s2504 + $0x240] sm:$0xff]
    %v2578 = vld [vmem:[%s2504 + $0x248] sm:$0xff]
    %v2579 = vld [vmem:[%s2504 + $0x250] sm:$0xff]
    %v2580 = vld [vmem:[%s2504 + $0x258] sm:$0xff]
    %v2581 = vld [vmem:[%s2504 + $0x260] sm:$0xff]
    %v2582 = vld [vmem:[%s2504 + $0x268] sm:$0xff]
    %v2583 = vld [vmem:[%s2504 + $0x270] sm:$0xff]
    %v2584 = vld [vmem:[%s2504 + $0x278] sm:$0xff]
    %v2585 = vld [vmem:[%s2504 + $0x280] sm:$0xff]
    %v2586 = vld [vmem:[%s2504 + $0x288] sm:$0xff]
    %v2587 = vld [vmem:[%s2504 + $0x290] sm:$0xff]
    %v2588 = vld [vmem:[%s2504 + $0x298] sm:$0xff]
    %v2589 = vld [vmem:[%s2504 + $0x2a0] sm:$0xff]
    %v2590 = vld [vmem:[%s2504 + $0x2a8] sm:$0xff]
    %v2591 = vld [vmem:[%s2504 + $0x2b0] sm:$0xff]
    %v2592 = vld [vmem:[%s2504 + $0x2b8] sm:$0xff]
    %v2593 = vld [vmem:[%s2504 + $0x2c0] sm:$0xff]
    %v2594 = vld [vmem:[%s2504 + $0x2c8] sm:$0xff]
    %v2595 = vld [vmem:[%s2504 + $0x2d0] sm:$0xff]
    %v2596 = vld [vmem:[%s2504 + $0x2d8] sm:$0xff]
    %v2597 = vld [vmem:[%s2504 + $0x2e0] sm:$0xff]
    %v2598 = vld [vmem:[%s2504 + $0x2e8] sm:$0xff]
    %v2599 = vld [vmem:[%s2504 + $0x2f0] sm:$0xff]
    %v2600 = vld [vmem:[%s2504 + $0x2f8] sm:$0xff]
    %v2601 = vld [vmem:[%s2504 + $0x300] sm:$0xff]
    %v2602 = vld [vmem:[%s2504 + $0x308] sm:$0xff]
    %v2603 = vld [vmem:[%s2504 + $0x310] sm:$0xff]
    %v2604 = vld [vmem:[%s2504 + $0x318] sm:$0xff]
    %v2605 = vld [vmem:[%s2504 + $0x320] sm:$0xff]
    %v2606 = vld [vmem:[%s2504 + $0x328] sm:$0xff]
    %v2607 = vld [vmem:[%s2504 + $0x330] sm:$0xff]
    %v2608 = vld [vmem:[%s2504 + $0x338] sm:$0xff]
    %v2609 = vld [vmem:[%s2504 + $0x340] sm:$0xff]
    %v2610 = vld [vmem:[%s2504 + $0x348] sm:$0xff]
    %v2611 = vld [vmem:[%s2504 + $0x350] sm:$0xff]
    %v2612 = vld [vmem:[%s2504 + $0x358] sm:$0xff]
    %v2613 = vld [vmem:[%s2504 + $0x360] sm:$0xff]
    %v2614 = vld [vmem:[%s2504 + $0x368] sm:$0xff]
    %v2615 = vld [vmem:[%s2504 + $0x370] sm:$0xff]
    %v2616 = vld [vmem:[%s2504 + $0x378] sm:$0xff]
    %v2617 = vld [vmem:[%s2504 + $0x380] sm:$0xff]
    %v2618 = vld [vmem:[%s2504 + $0x388] sm:$0xff]
    %v2619 = vld [vmem:[%s2504 + $0x390] sm:$0xff]
    %v2620 = vld [vmem:[%s2504 + $0x398] sm:$0xff]
    %v2621 = vld [vmem:[%s2504 + $0x3a0] sm:$0xff]
    %v2622 = vld [vmem:[%s2504 + $0x3a8] sm:$0xff]
    %v2623 = vld [vmem:[%s2504 + $0x3b0] sm:$0xff]
    %v2624 = vld [vmem:[%s2504 + $0x3b8] sm:$0xff]
    %v2625 = vld [vmem:[%s2504 + $0x3c0] sm:$0xff]
    %v2626 = vld [vmem:[%s2504 + $0x3c8] sm:$0xff]
    %v2627 = vld [vmem:[%s2504 + $0x3d0] sm:$0xff]
    %v2628 = vld [vmem:[%s2504 + $0x3d8] sm:$0xff]
    %v2629 = vld [vmem:[%s2504 + $0x3e0] sm:$0xff]
    %v2630 = vld [vmem:[%s2504 + $0x3e8] sm:$0xff]
    %v2631 = vld [vmem:[%s2504 + $0x3f0] sm:$0xff]
    %v2632 = vld [vmem:[%s2504 + $0x3f8] sm:$0xff]
    %s2633 = scalar_lea.vmem [#allocation8], 4
    %v2634 = vld [vmem:[%s2633] sm:$0xf]
    %v2636 = vperm.slane %v2634, 0
    %v2637 = vperm.slane %v2634, 1
    %v2638 = vperm.slane %v2634, 2
    %v2639 = vperm.slane %v2634, 3
    %v2772 = vunpack.c.l.b16 %v2505
    %v2773 = vunpack.c.h.b16 %v2505
    %v2774 = vunpack.c.l.b16 %v2506
    %v2775 = vunpack.c.h.b16 %v2506
    %v2776 = vunpack.c.l.b16 %v2507
    %v2777 = vunpack.c.h.b16 %v2507
    %v2778 = vunpack.c.l.b16 %v2508
    %v2779 = vunpack.c.h.b16 %v2508
    %v2780 = vunpack.c.l.b16 %v2509
    %v2781 = vunpack.c.h.b16 %v2509
    %v2782 = vunpack.c.l.b16 %v2510
    %v2783 = vunpack.c.h.b16 %v2510
    %v2784 = vunpack.c.l.b16 %v2511
    %v2785 = vunpack.c.h.b16 %v2511
    %v2786 = vunpack.c.l.b16 %v2512
    %v2787 = vunpack.c.h.b16 %v2512
    %v2788 = vunpack.c.l.b16 %v2513
    %v2789 = vunpack.c.h.b16 %v2513
    %v2790 = vunpack.c.l.b16 %v2514
    %v2791 = vunpack.c.h.b16 %v2514
    %v2792 = vunpack.c.l.b16 %v2515
    %v2793 = vunpack.c.h.b16 %v2515
    %v2794 = vunpack.c.l.b16 %v2516
    %v2795 = vunpack.c.h.b16 %v2516
    %v2796 = vunpack.c.l.b16 %v2517
    %v2797 = vunpack.c.h.b16 %v2517
    %v2798 = vunpack.c.l.b16 %v2518
    %v2799 = vunpack.c.h.b16 %v2518
    %v2800 = vunpack.c.l.b16 %v2519
    %v2801 = vunpack.c.h.b16 %v2519
    %v2802 = vunpack.c.l.b16 %v2520
    %v2803 = vunpack.c.h.b16 %v2520
    %v2804 = vunpack.c.l.b16 %v2521
    %v2805 = vunpack.c.h.b16 %v2521
    %v2806 = vunpack.c.l.b16 %v2522
    %v2807 = vunpack.c.h.b16 %v2522
    %v2808 = vunpack.c.l.b16 %v2523
    %v2809 = vunpack.c.h.b16 %v2523
    %v2810 = vunpack.c.l.b16 %v2524
    %v2811 = vunpack.c.h.b16 %v2524
    %v2812 = vunpack.c.l.b16 %v2525
    %v2813 = vunpack.c.h.b16 %v2525
    %v2814 = vunpack.c.l.b16 %v2526
    %v2815 = vunpack.c.h.b16 %v2526
    %v2816 = vunpack.c.l.b16 %v2527
    %v2817 = vunpack.c.h.b16 %v2527
    %v2818 = vunpack.c.l.b16 %v2528
    %v2819 = vunpack.c.h.b16 %v2528
    %v2820 = vunpack.c.l.b16 %v2529
    %v2821 = vunpack.c.h.b16 %v2529
    %v2822 = vunpack.c.l.b16 %v2530
    %v2823 = vunpack.c.h.b16 %v2530
    %v2824 = vunpack.c.l.b16 %v2531
    %v2825 = vunpack.c.h.b16 %v2531
    %v2826 = vunpack.c.l.b16 %v2532
    %v2827 = vunpack.c.h.b16 %v2532
    %v2828 = vunpack.c.l.b16 %v2533
    %v2829 = vunpack.c.h.b16 %v2533
    %v2830 = vunpack.c.l.b16 %v2534
    %v2831 = vunpack.c.h.b16 %v2534
    %v2832 = vunpack.c.l.b16 %v2535
    %v2833 = vunpack.c.h.b16 %v2535
    %v2834 = vunpack.c.l.b16 %v2536
    %v2835 = vunpack.c.h.b16 %v2536
    %v2836 = vunpack.c.l.b16 %v2537
    %v2837 = vunpack.c.h.b16 %v2537
    %v2838 = vunpack.c.l.b16 %v2538
    %v2839 = vunpack.c.h.b16 %v2538
    %v2840 = vunpack.c.l.b16 %v2539
    %v2841 = vunpack.c.h.b16 %v2539
    %v2842 = vunpack.c.l.b16 %v2540
    %v2843 = vunpack.c.h.b16 %v2540
    %v2844 = vunpack.c.l.b16 %v2541
    %v2845 = vunpack.c.h.b16 %v2541
    %v2846 = vunpack.c.l.b16 %v2542
    %v2847 = vunpack.c.h.b16 %v2542
    %v2848 = vunpack.c.l.b16 %v2543
    %v2849 = vunpack.c.h.b16 %v2543
    %v2850 = vunpack.c.l.b16 %v2544
    %v2851 = vunpack.c.h.b16 %v2544
    %v2852 = vunpack.c.l.b16 %v2545
    %v2853 = vunpack.c.h.b16 %v2545
    %v2854 = vunpack.c.l.b16 %v2546
    %v2855 = vunpack.c.h.b16 %v2546
    %v2856 = vunpack.c.l.b16 %v2547
    %v2857 = vunpack.c.h.b16 %v2547
    %v2858 = vunpack.c.l.b16 %v2548
    %v2859 = vunpack.c.h.b16 %v2548
    %v2860 = vunpack.c.l.b16 %v2549
    %v2861 = vunpack.c.h.b16 %v2549
    %v2862 = vunpack.c.l.b16 %v2550
    %v2863 = vunpack.c.h.b16 %v2550
    %v2864 = vunpack.c.l.b16 %v2551
    %v2865 = vunpack.c.h.b16 %v2551
    %v2866 = vunpack.c.l.b16 %v2552
    %v2867 = vunpack.c.h.b16 %v2552
    %v2868 = vunpack.c.l.b16 %v2553
    %v2869 = vunpack.c.h.b16 %v2553
    %v2870 = vunpack.c.l.b16 %v2554
    %v2871 = vunpack.c.h.b16 %v2554
    %v2872 = vunpack.c.l.b16 %v2555
    %v2873 = vunpack.c.h.b16 %v2555
    %v2874 = vunpack.c.l.b16 %v2556
    %v2875 = vunpack.c.h.b16 %v2556
    %v2876 = vunpack.c.l.b16 %v2557
    %v2877 = vunpack.c.h.b16 %v2557
    %v2878 = vunpack.c.l.b16 %v2558
    %v2879 = vunpack.c.h.b16 %v2558
    %v2880 = vunpack.c.l.b16 %v2559
    %v2881 = vunpack.c.h.b16 %v2559
    %v2882 = vunpack.c.l.b16 %v2560
    %v2883 = vunpack.c.h.b16 %v2560
    %v2884 = vunpack.c.l.b16 %v2561
    %v2885 = vunpack.c.h.b16 %v2561
    %v2886 = vunpack.c.l.b16 %v2562
    %v2887 = vunpack.c.h.b16 %v2562
    %v2888 = vunpack.c.l.b16 %v2563
    %v2889 = vunpack.c.h.b16 %v2563
    %v2890 = vunpack.c.l.b16 %v2564
    %v2891 = vunpack.c.h.b16 %v2564
    %v2892 = vunpack.c.l.b16 %v2565
    %v2893 = vunpack.c.h.b16 %v2565
    %v2894 = vunpack.c.l.b16 %v2566
    %v2895 = vunpack.c.h.b16 %v2566
    %v2896 = vunpack.c.l.b16 %v2567
    %v2897 = vunpack.c.h.b16 %v2567
    %v2898 = vunpack.c.l.b16 %v2568
    %v2899 = vunpack.c.h.b16 %v2568
    %v2900 = vunpack.c.l.b16 %v2569
    %v2901 = vunpack.c.h.b16 %v2569
    %v2902 = vunpack.c.l.b16 %v2570
    %v2903 = vunpack.c.h.b16 %v2570
    %v2904 = vunpack.c.l.b16 %v2571
    %v2905 = vunpack.c.h.b16 %v2571
    %v2906 = vunpack.c.l.b16 %v2572
    %v2907 = vunpack.c.h.b16 %v2572
    %v2908 = vunpack.c.l.b16 %v2573
    %v2909 = vunpack.c.h.b16 %v2573
    %v2910 = vunpack.c.l.b16 %v2574
    %v2911 = vunpack.c.h.b16 %v2574
    %v2912 = vunpack.c.l.b16 %v2575
    %v2913 = vunpack.c.h.b16 %v2575
    %v2914 = vunpack.c.l.b16 %v2576
    %v2915 = vunpack.c.h.b16 %v2576
    %v2916 = vunpack.c.l.b16 %v2577
    %v2917 = vunpack.c.h.b16 %v2577
    %v2918 = vunpack.c.l.b16 %v2578
    %v2919 = vunpack.c.h.b16 %v2578
    %v2920 = vunpack.c.l.b16 %v2579
    %v2921 = vunpack.c.h.b16 %v2579
    %v2922 = vunpack.c.l.b16 %v2580
    %v2923 = vunpack.c.h.b16 %v2580
    %v2924 = vunpack.c.l.b16 %v2581
    %v2925 = vunpack.c.h.b16 %v2581
    %v2926 = vunpack.c.l.b16 %v2582
    %v2927 = vunpack.c.h.b16 %v2582
    %v2928 = vunpack.c.l.b16 %v2583
    %v2929 = vunpack.c.h.b16 %v2583
    %v2930 = vunpack.c.l.b16 %v2584
    %v2931 = vunpack.c.h.b16 %v2584
    %v2932 = vunpack.c.l.b16 %v2585
    %v2933 = vunpack.c.h.b16 %v2585
    %v2934 = vunpack.c.l.b16 %v2586
    %v2935 = vunpack.c.h.b16 %v2586
    %v2936 = vunpack.c.l.b16 %v2587
    %v2937 = vunpack.c.h.b16 %v2587
    %v2938 = vunpack.c.l.b16 %v2588
    %v2939 = vunpack.c.h.b16 %v2588
    %v2940 = vunpack.c.l.b16 %v2589
    %v2941 = vunpack.c.h.b16 %v2589
    %v2942 = vunpack.c.l.b16 %v2590
    %v2943 = vunpack.c.h.b16 %v2590
    %v2944 = vunpack.c.l.b16 %v2591
    %v2945 = vunpack.c.h.b16 %v2591
    %v2946 = vunpack.c.l.b16 %v2592
    %v2947 = vunpack.c.h.b16 %v2592
    %v2948 = vunpack.c.l.b16 %v2593
    %v2949 = vunpack.c.h.b16 %v2593
    %v2950 = vunpack.c.l.b16 %v2594
    %v2951 = vunpack.c.h.b16 %v2594
    %v2952 = vunpack.c.l.b16 %v2595
    %v2953 = vunpack.c.h.b16 %v2595
    %v2954 = vunpack.c.l.b16 %v2596
    %v2955 = vunpack.c.h.b16 %v2596
    %v2956 = vunpack.c.l.b16 %v2597
    %v2957 = vunpack.c.h.b16 %v2597
    %v2958 = vunpack.c.l.b16 %v2598
    %v2959 = vunpack.c.h.b16 %v2598
    %v2960 = vunpack.c.l.b16 %v2599
    %v2961 = vunpack.c.h.b16 %v2599
    %v2962 = vunpack.c.l.b16 %v2600
    %v2963 = vunpack.c.h.b16 %v2600
    %v2964 = vunpack.c.l.b16 %v2601
    %v2965 = vunpack.c.h.b16 %v2601
    %v2966 = vunpack.c.l.b16 %v2602
    %v2967 = vunpack.c.h.b16 %v2602
    %v2968 = vunpack.c.l.b16 %v2603
    %v2969 = vunpack.c.h.b16 %v2603
    %v2970 = vunpack.c.l.b16 %v2604
    %v2971 = vunpack.c.h.b16 %v2604
    %v2972 = vunpack.c.l.b16 %v2605
    %v2973 = vunpack.c.h.b16 %v2605
    %v2974 = vunpack.c.l.b16 %v2606
    %v2975 = vunpack.c.h.b16 %v2606
    %v2976 = vunpack.c.l.b16 %v2607
    %v2977 = vunpack.c.h.b16 %v2607
    %v2978 = vunpack.c.l.b16 %v2608
    %v2979 = vunpack.c.h.b16 %v2608
    %v2980 = vunpack.c.l.b16 %v2609
    %v2981 = vunpack.c.h.b16 %v2609
    %v2982 = vunpack.c.l.b16 %v2610
    %v2983 = vunpack.c.h.b16 %v2610
    %v2984 = vunpack.c.l.b16 %v2611
    %v2985 = vunpack.c.h.b16 %v2611
    %v2986 = vunpack.c.l.b16 %v2612
    %v2987 = vunpack.c.h.b16 %v2612
    %v2988 = vunpack.c.l.b16 %v2613
    %v2989 = vunpack.c.h.b16 %v2613
    %v2990 = vunpack.c.l.b16 %v2614
    %v2991 = vunpack.c.h.b16 %v2614
    %v2992 = vunpack.c.l.b16 %v2615
    %v2993 = vunpack.c.h.b16 %v2615
    %v2994 = vunpack.c.l.b16 %v2616
    %v2995 = vunpack.c.h.b16 %v2616
    %v2996 = vunpack.c.l.b16 %v2617
    %v2997 = vunpack.c.h.b16 %v2617
    %v2998 = vunpack.c.l.b16 %v2618
    %v2999 = vunpack.c.h.b16 %v2618
    %v3000 = vunpack.c.l.b16 %v2619
    %v3001 = vunpack.c.h.b16 %v2619
    %v3002 = vunpack.c.l.b16 %v2620
    %v3003 = vunpack.c.h.b16 %v2620
    %v3004 = vunpack.c.l.b16 %v2621
    %v3005 = vunpack.c.h.b16 %v2621
    %v3006 = vunpack.c.l.b16 %v2622
    %v3007 = vunpack.c.h.b16 %v2622
    %v3008 = vunpack.c.l.b16 %v2623
    %v3009 = vunpack.c.h.b16 %v2623
    %v3010 = vunpack.c.l.b16 %v2624
    %v3011 = vunpack.c.h.b16 %v2624
    %v3012 = vunpack.c.l.b16 %v2625
    %v3013 = vunpack.c.h.b16 %v2625
    %v3014 = vunpack.c.l.b16 %v2626
    %v3015 = vunpack.c.h.b16 %v2626
    %v3016 = vunpack.c.l.b16 %v2627
    %v3017 = vunpack.c.h.b16 %v2627
    %v3018 = vunpack.c.l.b16 %v2628
    %v3019 = vunpack.c.h.b16 %v2628
    %v3020 = vunpack.c.l.b16 %v2629
    %v3021 = vunpack.c.h.b16 %v2629
    %v3022 = vunpack.c.l.b16 %v2630
    %v3023 = vunpack.c.h.b16 %v2630
    %v3024 = vunpack.c.l.b16 %v2631
    %v3025 = vunpack.c.h.b16 %v2631
    %v3026 = vunpack.c.l.b16 %v2632
    %v3027 = vunpack.c.h.b16 %v2632
    %v3028 = vpack.c.b16 %v2776, %v2772
    %v3029 = vpack.c.b16 %v2777, %v2773
    %v3030 = vpack.c.b16 %v2778, %v2774
    %v3031 = vpack.c.b16 %v2779, %v2775
    %v3032 = vpack.c.b16 %v2784, %v2780
    %v3033 = vpack.c.b16 %v2785, %v2781
    %v3034 = vpack.c.b16 %v2786, %v2782
    %v3035 = vpack.c.b16 %v2787, %v2783
    %v3036 = vpack.c.b16 %v2792, %v2788
    %v3037 = vpack.c.b16 %v2793, %v2789
    %v3038 = vpack.c.b16 %v2794, %v2790
    %v3039 = vpack.c.b16 %v2795, %v2791
    %v3040 = vpack.c.b16 %v2800, %v2796
    %v3041 = vpack.c.b16 %v2801, %v2797
    %v3042 = vpack.c.b16 %v2802, %v2798
    %v3043 = vpack.c.b16 %v2803, %v2799
    %v3044 = vpack.c.b16 %v2808, %v2804
    %v3045 = vpack.c.b16 %v2809, %v2805
    %v3046 = vpack.c.b16 %v2810, %v2806
    %v3047 = vpack.c.b16 %v2811, %v2807
    %v3048 = vpack.c.b16 %v2816, %v2812
    %v3049 = vpack.c.b16 %v2817, %v2813
    %v3050 = vpack.c.b16 %v2818, %v2814
    %v3051 = vpack.c.b16 %v2819, %v2815
    %v3052 = vpack.c.b16 %v2824, %v2820
    %v3053 = vpack.c.b16 %v2825, %v2821
    %v3054 = vpack.c.b16 %v2826, %v2822
    %v3055 = vpack.c.b16 %v2827, %v2823
    %v3056 = vpack.c.b16 %v2832, %v2828
    %v3057 = vpack.c.b16 %v2833, %v2829
    %v3058 = vpack.c.b16 %v2834, %v2830
    %v3059 = vpack.c.b16 %v2835, %v2831
    %v3060 = vpack.c.b16 %v2840, %v2836
    %v3061 = vpack.c.b16 %v2841, %v2837
    %v3062 = vpack.c.b16 %v2842, %v2838
    %v3063 = vpack.c.b16 %v2843, %v2839
    %v3064 = vpack.c.b16 %v2848, %v2844
    %v3065 = vpack.c.b16 %v2849, %v2845
    %v3066 = vpack.c.b16 %v2850, %v2846
    %v3067 = vpack.c.b16 %v2851, %v2847
    %v3068 = vpack.c.b16 %v2856, %v2852
    %v3069 = vpack.c.b16 %v2857, %v2853
    %v3070 = vpack.c.b16 %v2858, %v2854
    %v3071 = vpack.c.b16 %v2859, %v2855
    %v3072 = vpack.c.b16 %v2864, %v2860
    %v3073 = vpack.c.b16 %v2865, %v2861
    %v3074 = vpack.c.b16 %v2866, %v2862
    %v3075 = vpack.c.b16 %v2867, %v2863
    %v3076 = vpack.c.b16 %v2872, %v2868
    %v3077 = vpack.c.b16 %v2873, %v2869
    %v3078 = vpack.c.b16 %v2874, %v2870
    %v3079 = vpack.c.b16 %v2875, %v2871
    %v3080 = vpack.c.b16 %v2880, %v2876
    %v3081 = vpack.c.b16 %v2881, %v2877
    %v3082 = vpack.c.b16 %v2882, %v2878
    %v3083 = vpack.c.b16 %v2883, %v2879
    %v3084 = vpack.c.b16 %v2888, %v2884
    %v3085 = vpack.c.b16 %v2889, %v2885
    %v3086 = vpack.c.b16 %v2890, %v2886
    %v3087 = vpack.c.b16 %v2891, %v2887
    %v3088 = vpack.c.b16 %v2896, %v2892
    %v3089 = vpack.c.b16 %v2897, %v2893
    %v3090 = vpack.c.b16 %v2898, %v2894
    %v3091 = vpack.c.b16 %v2899, %v2895
    %v3092 = vpack.c.b16 %v2904, %v2900
    %v3093 = vpack.c.b16 %v2905, %v2901
    %v3094 = vpack.c.b16 %v2906, %v2902
    %v3095 = vpack.c.b16 %v2907, %v2903
    %v3096 = vpack.c.b16 %v2912, %v2908
    %v3097 = vpack.c.b16 %v2913, %v2909
    %v3098 = vpack.c.b16 %v2914, %v2910
    %v3099 = vpack.c.b16 %v2915, %v2911
    %v3100 = vpack.c.b16 %v2920, %v2916
    %v3101 = vpack.c.b16 %v2921, %v2917
    %v3102 = vpack.c.b16 %v2922, %v2918
    %v3103 = vpack.c.b16 %v2923, %v2919
    %v3104 = vpack.c.b16 %v2928, %v2924
    %v3105 = vpack.c.b16 %v2929, %v2925
    %v3106 = vpack.c.b16 %v2930, %v2926
    %v3107 = vpack.c.b16 %v2931, %v2927
    %v3108 = vpack.c.b16 %v2936, %v2932
    %v3109 = vpack.c.b16 %v2937, %v2933
    %v3110 = vpack.c.b16 %v2938, %v2934
    %v3111 = vpack.c.b16 %v2939, %v2935
    %v3112 = vpack.c.b16 %v2944, %v2940
    %v3113 = vpack.c.b16 %v2945, %v2941
    %v3114 = vpack.c.b16 %v2946, %v2942
    %v3115 = vpack.c.b16 %v2947, %v2943
    %v3116 = vpack.c.b16 %v2952, %v2948
    %v3117 = vpack.c.b16 %v2953, %v2949
    %v3118 = vpack.c.b16 %v2954, %v2950
    %v3119 = vpack.c.b16 %v2955, %v2951
    %v3120 = vpack.c.b16 %v2960, %v2956
    %v3121 = vpack.c.b16 %v2961, %v2957
    %v3122 = vpack.c.b16 %v2962, %v2958
    %v3123 = vpack.c.b16 %v2963, %v2959
    %v3124 = vpack.c.b16 %v2968, %v2964
    %v3125 = vpack.c.b16 %v2969, %v2965
    %v3126 = vpack.c.b16 %v2970, %v2966
    %v3127 = vpack.c.b16 %v2971, %v2967
    %v3128 = vpack.c.b16 %v2976, %v2972
    %v3129 = vpack.c.b16 %v2977, %v2973
    %v3130 = vpack.c.b16 %v2978, %v2974
    %v3131 = vpack.c.b16 %v2979, %v2975
    %v3132 = vpack.c.b16 %v2984, %v2980
    %v3133 = vpack.c.b16 %v2985, %v2981
    %v3134 = vpack.c.b16 %v2986, %v2982
    %v3135 = vpack.c.b16 %v2987, %v2983
    %v3136 = vpack.c.b16 %v2992, %v2988
    %v3137 = vpack.c.b16 %v2993, %v2989
    %v3138 = vpack.c.b16 %v2994, %v2990
    %v3139 = vpack.c.b16 %v2995, %v2991
    %v3140 = vpack.c.b16 %v3000, %v2996
    %v3141 = vpack.c.b16 %v3001, %v2997
    %v3142 = vpack.c.b16 %v3002, %v2998
    %v3143 = vpack.c.b16 %v3003, %v2999
    %v3144 = vpack.c.b16 %v3008, %v3004
    %v3145 = vpack.c.b16 %v3009, %v3005
    %v3146 = vpack.c.b16 %v3010, %v3006
    %v3147 = vpack.c.b16 %v3011, %v3007
    %v3148 = vpack.c.b16 %v3016, %v3012
    %v3149 = vpack.c.b16 %v3017, %v3013
    %v3150 = vpack.c.b16 %v3018, %v3014
    %v3151 = vpack.c.b16 %v3019, %v3015
    %v3152 = vpack.c.b16 %v3024, %v3020
    %v3153 = vpack.c.b16 %v3025, %v3021
    %v3154 = vpack.c.b16 %v3026, %v3022
    %v3155 = vpack.c.b16 %v3027, %v3023
    %3284 = vmatpush.bf16.msra.mxu0 %v3056
    %3285 = vmatpush.bf16.msra.mxu0 %v3052
    %3286 = vmatpush.bf16.msra.mxu0 %v3048
    %3287 = vmatpush.bf16.msra.mxu0 %v3044
    %3288 = vmatpush.bf16.msra.mxu0 %v3040
    %3289 = vmatpush.bf16.msra.mxu0 %v3036
    %3290 = vmatpush.bf16.msra.mxu0 %v3032
    %3291 = vmatpush.bf16.msra.mxu0 %v3028
    %3292 = vmatmul.bf16.gmra.mxu0 %v2472
    %v3293 = vpop.f32.mrf.mxu0
    %v3294 = vadd.f32 %v2636, %v3293
    %v3295 = vpop.f32.mrf.mxu0
    %v3296 = vadd.f32 %v2636, %v3295
    %3297 = vmatmul.bf16.gmra.mxu0 %v2476
    %v3298 = vpop.f32.mrf.mxu0
    %v3299 = vadd.f32 %v2636, %v3298
    %v3300 = vpop.f32.mrf.mxu0
    %v3301 = vadd.f32 %v2636, %v3300
    %3302 = vmatmul.bf16.gmra.mxu0 %v2480
    %v3303 = vpop.f32.mrf.mxu0
    %v3304 = vadd.f32 %v2636, %v3303
    %v3305 = vpop.f32.mrf.mxu0
    %v3306 = vadd.f32 %v2636, %v3305
    %3307 = vmatmul.bf16.gmra.mxu0 %v2484
    %v3308 = vpop.f32.mrf.mxu0
    %v3309 = vadd.f32 %v2636, %v3308
    %v3310 = vpop.f32.mrf.mxu0
    %v3311 = vadd.f32 %v2636, %v3310
    %3312 = vmatmul.bf16.gmra.mxu0 %v2488
    %v3313 = vpop.f32.mrf.mxu0
    %v3314 = vadd.f32 %v2636, %v3313
    %v3315 = vpop.f32.mrf.mxu0
    %v3316 = vadd.f32 %v2636, %v3315
    %3317 = vmatmul.bf16.gmra.mxu0 %v2492
    %v3318 = vpop.f32.mrf.mxu0
    %v3319 = vadd.f32 %v2636, %v3318
    %v3320 = vpop.f32.mrf.mxu0
    %v3321 = vadd.f32 %v2636, %v3320
    %3322 = vmatmul.bf16.gmra.mxu0 %v2496
    %v3323 = vpop.f32.mrf.mxu0
    %v3324 = vadd.f32 %v2636, %v3323
    %v3325 = vpop.f32.mrf.mxu0
    %v3326 = vadd.f32 %v2636, %v3325
    %3327 = vmatmul.bf16.gmra.mxu0 %v2500
    %v3328 = vpop.f32.mrf.mxu0
    %v3329 = vadd.f32 %v2636, %v3328
    %v3330 = vpop.f32.mrf.mxu0
    %v3331 = vadd.f32 %v2636, %v3330
    %3332 = vdwg.mxu0
    %3333 = vmatpush.bf16.msra.mxu0 %v3088
    %3334 = vmatpush.bf16.msra.mxu0 %v3084
    %3335 = vmatpush.bf16.msra.mxu0 %v3080
    %3336 = vmatpush.bf16.msra.mxu0 %v3076
    %3337 = vmatpush.bf16.msra.mxu0 %v3072
    %3338 = vmatpush.bf16.msra.mxu0 %v3068
    %3339 = vmatpush.bf16.msra.mxu0 %v3064
    %3340 = vmatpush.bf16.msra.mxu0 %v3060
    %3341 = vmatmul.bf16.gmra.mxu0 %v2473
    %v3342 = vpop.f32.mrf.mxu0
    %v3343 = vadd.f32 %v3294, %v3342
    %v3344 = vpop.f32.mrf.mxu0
    %v3345 = vadd.f32 %v3296, %v3344
    %3346 = vmatmul.bf16.gmra.mxu0 %v2477
    %v3347 = vpop.f32.mrf.mxu0
    %v3348 = vadd.f32 %v3299, %v3347
    %v3349 = vpop.f32.mrf.mxu0
    %v3350 = vadd.f32 %v3301, %v3349
    %3351 = vmatmul.bf16.gmra.mxu0 %v2481
    %v3352 = vpop.f32.mrf.mxu0
    %v3353 = vadd.f32 %v3304, %v3352
    %v3354 = vpop.f32.mrf.mxu0
    %v3355 = vadd.f32 %v3306, %v3354
    %3356 = vmatmul.bf16.gmra.mxu0 %v2485
    %v3357 = vpop.f32.mrf.mxu0
    %v3358 = vadd.f32 %v3309, %v3357
    %v3359 = vpop.f32.mrf.mxu0
    %v3360 = vadd.f32 %v3311, %v3359
    %3361 = vmatmul.bf16.gmra.mxu0 %v2489
    %v3362 = vpop.f32.mrf.mxu0
    %v3363 = vadd.f32 %v3314, %v3362
    %v3364 = vpop.f32.mrf.mxu0
    %v3365 = vadd.f32 %v3316, %v3364
    %3366 = vmatmul.bf16.gmra.mxu0 %v2493
    %v3367 = vpop.f32.mrf.mxu0
    %v3368 = vadd.f32 %v3319, %v3367
    %v3369 = vpop.f32.mrf.mxu0
    %v3370 = vadd.f32 %v3321, %v3369
    %3371 = vmatmul.bf16.gmra.mxu0 %v2497
    %v3372 = vpop.f32.mrf.mxu0
    %v3373 = vadd.f32 %v3324, %v3372
    %v3374 = vpop.f32.mrf.mxu0
    %v3375 = vadd.f32 %v3326, %v3374
    %3376 = vmatmul.bf16.gmra.mxu0 %v2501
    %v3377 = vpop.f32.mrf.mxu0
    %v3378 = vadd.f32 %v3329, %v3377
    %v3379 = vpop.f32.mrf.mxu0
    %v3380 = vadd.f32 %v3331, %v3379
    %3381 = vdwg.mxu0
    %3382 = vmatpush.bf16.msra.mxu0 %v3120
    %3383 = vmatpush.bf16.msra.mxu0 %v3116
    %3384 = vmatpush.bf16.msra.mxu0 %v3112
    %3385 = vmatpush.bf16.msra.mxu0 %v3108
    %3386 = vmatpush.bf16.msra.mxu0 %v3104
    %3387 = vmatpush.bf16.msra.mxu0 %v3100
    %3388 = vmatpush.bf16.msra.mxu0 %v3096
    %3389 = vmatpush.bf16.msra.mxu0 %v3092
    %3390 = vmatmul.bf16.gmra.mxu0 %v2474
    %v3391 = vpop.f32.mrf.mxu0
    %v3392 = vadd.f32 %v3343, %v3391
    %v3393 = vpop.f32.mrf.mxu0
    %v3394 = vadd.f32 %v3345, %v3393
    %3395 = vmatmul.bf16.gmra.mxu0 %v2478
    %v3396 = vpop.f32.mrf.mxu0
    %v3397 = vadd.f32 %v3348, %v3396
    %v3398 = vpop.f32.mrf.mxu0
    %v3399 = vadd.f32 %v3350, %v3398
    %3400 = vmatmul.bf16.gmra.mxu0 %v2482
    %v3401 = vpop.f32.mrf.mxu0
    %v3402 = vadd.f32 %v3353, %v3401
    %v3403 = vpop.f32.mrf.mxu0
    %v3404 = vadd.f32 %v3355, %v3403
    %3405 = vmatmul.bf16.gmra.mxu0 %v2486
    %v3406 = vpop.f32.mrf.mxu0
    %v3407 = vadd.f32 %v3358, %v3406
    %v3408 = vpop.f32.mrf.mxu0
    %v3409 = vadd.f32 %v3360, %v3408
    %3410 = vmatmul.bf16.gmra.mxu0 %v2490
    %v3411 = vpop.f32.mrf.mxu0
    %v3412 = vadd.f32 %v3363, %v3411
    %v3413 = vpop.f32.mrf.mxu0
    %v3414 = vadd.f32 %v3365, %v3413
    %3415 = vmatmul.bf16.gmra.mxu0 %v2494
    %v3416 = vpop.f32.mrf.mxu0
    %v3417 = vadd.f32 %v3368, %v3416
    %v3418 = vpop.f32.mrf.mxu0
    %v3419 = vadd.f32 %v3370, %v3418
    %3420 = vmatmul.bf16.gmra.mxu0 %v2498
    %v3421 = vpop.f32.mrf.mxu0
    %v3422 = vadd.f32 %v3373, %v3421
    %v3423 = vpop.f32.mrf.mxu0
    %v3424 = vadd.f32 %v3375, %v3423
    %3425 = vmatmul.bf16.gmra.mxu0 %v2502
    %v3426 = vpop.f32.mrf.mxu0
    %v3427 = vadd.f32 %v3378, %v3426
    %v3428 = vpop.f32.mrf.mxu0
    %v3429 = vadd.f32 %v3380, %v3428
    %3430 = vdwg.mxu0
    %3431 = vmatpush.bf16.msra.mxu0 %v3152
    %3432 = vmatpush.bf16.msra.mxu0 %v3148
    %3433 = vmatpush.bf16.msra.mxu0 %v3144
    %3434 = vmatpush.bf16.msra.mxu0 %v3140
    %3435 = vmatpush.bf16.msra.mxu0 %v3136
    %3436 = vmatpush.bf16.msra.mxu0 %v3132
    %3437 = vmatpush.bf16.msra.mxu0 %v3128
    %3438 = vmatpush.bf16.msra.mxu0 %v3124
    %3439 = vmatmul.bf16.gmra.mxu0 %v2475
    %v3440 = vpop.f32.mrf.mxu0
    %v3441 = vadd.f32 %v3392, %v3440
    %v3442 = vpop.f32.mrf.mxu0
    %v3443 = vadd.f32 %v3394, %v3442
    %3444 = vmatmul.bf16.gmra.mxu0 %v2479
    %v3445 = vpop.f32.mrf.mxu0
    %v3446 = vadd.f32 %v3397, %v3445
    %v3447 = vpop.f32.mrf.mxu0
    %v3448 = vadd.f32 %v3399, %v3447
    %3449 = vmatmul.bf16.gmra.mxu0 %v2483
    %v3450 = vpop.f32.mrf.mxu0
    %v3451 = vadd.f32 %v3402, %v3450
    %v3452 = vpop.f32.mrf.mxu0
    %v3453 = vadd.f32 %v3404, %v3452
    %3454 = vmatmul.bf16.gmra.mxu0 %v2487
    %v3455 = vpop.f32.mrf.mxu0
    %v3456 = vadd.f32 %v3407, %v3455
    %v3457 = vpop.f32.mrf.mxu0
    %v3458 = vadd.f32 %v3409, %v3457
    %3459 = vmatmul.bf16.gmra.mxu0 %v2491
    %v3460 = vpop.f32.mrf.mxu0
    %v3461 = vadd.f32 %v3412, %v3460
    %v3462 = vpop.f32.mrf.mxu0
    %v3463 = vadd.f32 %v3414, %v3462
    %3464 = vmatmul.bf16.gmra.mxu0 %v2495
    %v3465 = vpop.f32.mrf.mxu0
    %v3466 = vadd.f32 %v3417, %v3465
    %v3467 = vpop.f32.mrf.mxu0
    %v3468 = vadd.f32 %v3419, %v3467
    %3469 = vmatmul.bf16.gmra.mxu0 %v2499
    %v3470 = vpop.f32.mrf.mxu0
    %v3471 = vadd.f32 %v3422, %v3470
    %v3472 = vpop.f32.mrf.mxu0
    %v3473 = vadd.f32 %v3424, %v3472
    %3474 = vmatmul.bf16.gmra.mxu0 %v2503
    %v3475 = vpop.f32.mrf.mxu0
    %v3476 = vadd.f32 %v3427, %v3475
    %v3477 = vpop.f32.mrf.mxu0
    %v3478 = vadd.f32 %v3429, %v3477
    %3479 = vdwg.mxu0
    %3480 = vmatpush.bf16.msra.mxu0 %v3057
    %3481 = vmatpush.bf16.msra.mxu0 %v3053
    %3482 = vmatpush.bf16.msra.mxu0 %v3049
    %3483 = vmatpush.bf16.msra.mxu0 %v3045
    %3484 = vmatpush.bf16.msra.mxu0 %v3041
    %3485 = vmatpush.bf16.msra.mxu0 %v3037
    %3486 = vmatpush.bf16.msra.mxu0 %v3033
    %3487 = vmatpush.bf16.msra.mxu0 %v3029
    %3488 = vmatmul.bf16.gmra.mxu0 %v2472
    %v3489 = vpop.f32.mrf.mxu0
    %v3490 = vadd.f32 %v2637, %v3489
    %v3491 = vpop.f32.mrf.mxu0
    %v3492 = vadd.f32 %v2637, %v3491
    %3493 = vmatmul.bf16.gmra.mxu0 %v2476
    %v3494 = vpop.f32.mrf.mxu0
    %v3495 = vadd.f32 %v2637, %v3494
    %v3496 = vpop.f32.mrf.mxu0
    %v3497 = vadd.f32 %v2637, %v3496
    %3498 = vmatmul.bf16.gmra.mxu0 %v2480
    %v3499 = vpop.f32.mrf.mxu0
    %v3500 = vadd.f32 %v2637, %v3499
    %v3501 = vpop.f32.mrf.mxu0
    %v3502 = vadd.f32 %v2637, %v3501
    %3503 = vmatmul.bf16.gmra.mxu0 %v2484
    %v3504 = vpop.f32.mrf.mxu0
    %v3505 = vadd.f32 %v2637, %v3504
    %v3506 = vpop.f32.mrf.mxu0
    %v3507 = vadd.f32 %v2637, %v3506
    %3508 = vmatmul.bf16.gmra.mxu0 %v2488
    %v3509 = vpop.f32.mrf.mxu0
    %v3510 = vadd.f32 %v2637, %v3509
    %v3511 = vpop.f32.mrf.mxu0
    %v3512 = vadd.f32 %v2637, %v3511
    %3513 = vmatmul.bf16.gmra.mxu0 %v2492
    %v3514 = vpop.f32.mrf.mxu0
    %v3515 = vadd.f32 %v2637, %v3514
    %v3516 = vpop.f32.mrf.mxu0
    %v3517 = vadd.f32 %v2637, %v3516
    %3518 = vmatmul.bf16.gmra.mxu0 %v2496
    %v3519 = vpop.f32.mrf.mxu0
    %v3520 = vadd.f32 %v2637, %v3519
    %v3521 = vpop.f32.mrf.mxu0
    %v3522 = vadd.f32 %v2637, %v3521
    %3523 = vmatmul.bf16.gmra.mxu0 %v2500
    %v3524 = vpop.f32.mrf.mxu0
    %v3525 = vadd.f32 %v2637, %v3524
    %v3526 = vpop.f32.mrf.mxu0
    %v3527 = vadd.f32 %v2637, %v3526
    %3528 = vdwg.mxu0
    %3529 = vmatpush.bf16.msra.mxu0 %v3089
    %3530 = vmatpush.bf16.msra.mxu0 %v3085
    %3531 = vmatpush.bf16.msra.mxu0 %v3081
    %3532 = vmatpush.bf16.msra.mxu0 %v3077
    %3533 = vmatpush.bf16.msra.mxu0 %v3073
    %3534 = vmatpush.bf16.msra.mxu0 %v3069
    %3535 = vmatpush.bf16.msra.mxu0 %v3065
    %3536 = vmatpush.bf16.msra.mxu0 %v3061
    %3537 = vmatmul.bf16.gmra.mxu0 %v2473
    %v3538 = vpop.f32.mrf.mxu0
    %v3539 = vadd.f32 %v3490, %v3538
    %v3540 = vpop.f32.mrf.mxu0
    %v3541 = vadd.f32 %v3492, %v3540
    %3542 = vmatmul.bf16.gmra.mxu0 %v2477
    %v3543 = vpop.f32.mrf.mxu0
    %v3544 = vadd.f32 %v3495, %v3543
    %v3545 = vpop.f32.mrf.mxu0
    %v3546 = vadd.f32 %v3497, %v3545
    %3547 = vmatmul.bf16.gmra.mxu0 %v2481
    %v3548 = vpop.f32.mrf.mxu0
    %v3549 = vadd.f32 %v3500, %v3548
    %v3550 = vpop.f32.mrf.mxu0
    %v3551 = vadd.f32 %v3502, %v3550
    %3552 = vmatmul.bf16.gmra.mxu0 %v2485
    %v3553 = vpop.f32.mrf.mxu0
    %v3554 = vadd.f32 %v3505, %v3553
    %v3555 = vpop.f32.mrf.mxu0
    %v3556 = vadd.f32 %v3507, %v3555
    %3557 = vmatmul.bf16.gmra.mxu0 %v2489
    %v3558 = vpop.f32.mrf.mxu0
    %v3559 = vadd.f32 %v3510, %v3558
    %v3560 = vpop.f32.mrf.mxu0
    %v3561 = vadd.f32 %v3512, %v3560
    %3562 = vmatmul.bf16.gmra.mxu0 %v2493
    %v3563 = vpop.f32.mrf.mxu0
    %v3564 = vadd.f32 %v3515, %v3563
    %v3565 = vpop.f32.mrf.mxu0
    %v3566 = vadd.f32 %v3517, %v3565
    %3567 = vmatmul.bf16.gmra.mxu0 %v2497
    %v3568 = vpop.f32.mrf.mxu0
    %v3569 = vadd.f32 %v3520, %v3568
    %v3570 = vpop.f32.mrf.mxu0
    %v3571 = vadd.f32 %v3522, %v3570
    %3572 = vmatmul.bf16.gmra.mxu0 %v2501
    %v3573 = vpop.f32.mrf.mxu0
    %v3574 = vadd.f32 %v3525, %v3573
    %v3575 = vpop.f32.mrf.mxu0
    %v3576 = vadd.f32 %v3527, %v3575
    %3577 = vdwg.mxu0
    %3578 = vmatpush.bf16.msra.mxu0 %v3121
    %3579 = vmatpush.bf16.msra.mxu0 %v3117
    %3580 = vmatpush.bf16.msra.mxu0 %v3113
    %3581 = vmatpush.bf16.msra.mxu0 %v3109
    %3582 = vmatpush.bf16.msra.mxu0 %v3105
    %3583 = vmatpush.bf16.msra.mxu0 %v3101
    %3584 = vmatpush.bf16.msra.mxu0 %v3097
    %3585 = vmatpush.bf16.msra.mxu0 %v3093
    %3586 = vmatmul.bf16.gmra.mxu0 %v2474
    %v3587 = vpop.f32.mrf.mxu0
    %v3588 = vadd.f32 %v3539, %v3587
    %v3589 = vpop.f32.mrf.mxu0
    %v3590 = vadd.f32 %v3541, %v3589
    %3591 = vmatmul.bf16.gmra.mxu0 %v2478
    %v3592 = vpop.f32.mrf.mxu0
    %v3593 = vadd.f32 %v3544, %v3592
    %v3594 = vpop.f32.mrf.mxu0
    %v3595 = vadd.f32 %v3546, %v3594
    %3596 = vmatmul.bf16.gmra.mxu0 %v2482
    %v3597 = vpop.f32.mrf.mxu0
    %v3598 = vadd.f32 %v3549, %v3597
    %v3599 = vpop.f32.mrf.mxu0
    %v3600 = vadd.f32 %v3551, %v3599
    %3601 = vmatmul.bf16.gmra.mxu0 %v2486
    %v3602 = vpop.f32.mrf.mxu0
    %v3603 = vadd.f32 %v3554, %v3602
    %v3604 = vpop.f32.mrf.mxu0
    %v3605 = vadd.f32 %v3556, %v3604
    %3606 = vmatmul.bf16.gmra.mxu0 %v2490
    %v3607 = vpop.f32.mrf.mxu0
    %v3608 = vadd.f32 %v3559, %v3607
    %v3609 = vpop.f32.mrf.mxu0
    %v3610 = vadd.f32 %v3561, %v3609
    %3611 = vmatmul.bf16.gmra.mxu0 %v2494
    %v3612 = vpop.f32.mrf.mxu0
    %v3613 = vadd.f32 %v3564, %v3612
    %v3614 = vpop.f32.mrf.mxu0
    %v3615 = vadd.f32 %v3566, %v3614
    %3616 = vmatmul.bf16.gmra.mxu0 %v2498
    %v3617 = vpop.f32.mrf.mxu0
    %v3618 = vadd.f32 %v3569, %v3617
    %v3619 = vpop.f32.mrf.mxu0
    %v3620 = vadd.f32 %v3571, %v3619
    %3621 = vmatmul.bf16.gmra.mxu0 %v2502
    %v3622 = vpop.f32.mrf.mxu0
    %v3623 = vadd.f32 %v3574, %v3622
    %v3624 = vpop.f32.mrf.mxu0
    %v3625 = vadd.f32 %v3576, %v3624
    %3626 = vdwg.mxu0
    %3627 = vmatpush.bf16.msra.mxu0 %v3153
    %3628 = vmatpush.bf16.msra.mxu0 %v3149
    %3629 = vmatpush.bf16.msra.mxu0 %v3145
    %3630 = vmatpush.bf16.msra.mxu0 %v3141
    %3631 = vmatpush.bf16.msra.mxu0 %v3137
    %3632 = vmatpush.bf16.msra.mxu0 %v3133
    %3633 = vmatpush.bf16.msra.mxu0 %v3129
    %3634 = vmatpush.bf16.msra.mxu0 %v3125
    %3635 = vmatmul.bf16.gmra.mxu0 %v2475
    %v3636 = vpop.f32.mrf.mxu0
    %v3637 = vadd.f32 %v3588, %v3636
    %v3638 = vpop.f32.mrf.mxu0
    %v3639 = vadd.f32 %v3590, %v3638
    %3640 = vmatmul.bf16.gmra.mxu0 %v2479
    %v3641 = vpop.f32.mrf.mxu0
    %v3642 = vadd.f32 %v3593, %v3641
    %v3643 = vpop.f32.mrf.mxu0
    %v3644 = vadd.f32 %v3595, %v3643
    %3645 = vmatmul.bf16.gmra.mxu0 %v2483
    %v3646 = vpop.f32.mrf.mxu0
    %v3647 = vadd.f32 %v3598, %v3646
    %v3648 = vpop.f32.mrf.mxu0
    %v3649 = vadd.f32 %v3600, %v3648
    %3650 = vmatmul.bf16.gmra.mxu0 %v2487
    %v3651 = vpop.f32.mrf.mxu0
    %v3652 = vadd.f32 %v3603, %v3651
    %v3653 = vpop.f32.mrf.mxu0
    %v3654 = vadd.f32 %v3605, %v3653
    %3655 = vmatmul.bf16.gmra.mxu0 %v2491
    %v3656 = vpop.f32.mrf.mxu0
    %v3657 = vadd.f32 %v3608, %v3656
    %v3658 = vpop.f32.mrf.mxu0
    %v3659 = vadd.f32 %v3610, %v3658
    %3660 = vmatmul.bf16.gmra.mxu0 %v2495
    %v3661 = vpop.f32.mrf.mxu0
    %v3662 = vadd.f32 %v3613, %v3661
    %v3663 = vpop.f32.mrf.mxu0
    %v3664 = vadd.f32 %v3615, %v3663
    %3665 = vmatmul.bf16.gmra.mxu0 %v2499
    %v3666 = vpop.f32.mrf.mxu0
    %v3667 = vadd.f32 %v3618, %v3666
    %v3668 = vpop.f32.mrf.mxu0
    %v3669 = vadd.f32 %v3620, %v3668
    %3670 = vmatmul.bf16.gmra.mxu0 %v2503
    %v3671 = vpop.f32.mrf.mxu0
    %v3672 = vadd.f32 %v3623, %v3671
    %v3673 = vpop.f32.mrf.mxu0
    %v3674 = vadd.f32 %v3625, %v3673
    %3675 = vdwg.mxu0
    %3676 = vmatpush.bf16.msra.mxu0 %v3058
    %3677 = vmatpush.bf16.msra.mxu0 %v3054
    %3678 = vmatpush.bf16.msra.mxu0 %v3050
    %3679 = vmatpush.bf16.msra.mxu0 %v3046
    %3680 = vmatpush.bf16.msra.mxu0 %v3042
    %3681 = vmatpush.bf16.msra.mxu0 %v3038
    %3682 = vmatpush.bf16.msra.mxu0 %v3034
    %3683 = vmatpush.bf16.msra.mxu0 %v3030
    %3684 = vmatmul.bf16.gmra.mxu0 %v2472
    %v3685 = vpop.f32.mrf.mxu0
    %v3686 = vadd.f32 %v2638, %v3685
    %v3687 = vpop.f32.mrf.mxu0
    %v3688 = vadd.f32 %v2638, %v3687
    %3689 = vmatmul.bf16.gmra.mxu0 %v2476
    %v3690 = vpop.f32.mrf.mxu0
    %v3691 = vadd.f32 %v2638, %v3690
    %v3692 = vpop.f32.mrf.mxu0
    %v3693 = vadd.f32 %v2638, %v3692
    %3694 = vmatmul.bf16.gmra.mxu0 %v2480
    %v3695 = vpop.f32.mrf.mxu0
    %v3696 = vadd.f32 %v2638, %v3695
    %v3697 = vpop.f32.mrf.mxu0
    %v3698 = vadd.f32 %v2638, %v3697
    %3699 = vmatmul.bf16.gmra.mxu0 %v2484
    %v3700 = vpop.f32.mrf.mxu0
    %v3701 = vadd.f32 %v2638, %v3700
    %v3702 = vpop.f32.mrf.mxu0
    %v3703 = vadd.f32 %v2638, %v3702
    %3704 = vmatmul.bf16.gmra.mxu0 %v2488
    %v3705 = vpop.f32.mrf.mxu0
    %v3706 = vadd.f32 %v2638, %v3705
    %v3707 = vpop.f32.mrf.mxu0
    %v3708 = vadd.f32 %v2638, %v3707
    %3709 = vmatmul.bf16.gmra.mxu0 %v2492
    %v3710 = vpop.f32.mrf.mxu0
    %v3711 = vadd.f32 %v2638, %v3710
    %v3712 = vpop.f32.mrf.mxu0
    %v3713 = vadd.f32 %v2638, %v3712
    %3714 = vmatmul.bf16.gmra.mxu0 %v2496
    %v3715 = vpop.f32.mrf.mxu0
    %v3716 = vadd.f32 %v2638, %v3715
    %v3717 = vpop.f32.mrf.mxu0
    %v3718 = vadd.f32 %v2638, %v3717
    %3719 = vmatmul.bf16.gmra.mxu0 %v2500
    %v3720 = vpop.f32.mrf.mxu0
    %v3721 = vadd.f32 %v2638, %v3720
    %v3722 = vpop.f32.mrf.mxu0
    %v3723 = vadd.f32 %v2638, %v3722
    %3724 = vdwg.mxu0
    %3725 = vmatpush.bf16.msra.mxu0 %v3090
    %3726 = vmatpush.bf16.msra.mxu0 %v3086
    %3727 = vmatpush.bf16.msra.mxu0 %v3082
    %3728 = vmatpush.bf16.msra.mxu0 %v3078
    %3729 = vmatpush.bf16.msra.mxu0 %v3074
    %3730 = vmatpush.bf16.msra.mxu0 %v3070
    %3731 = vmatpush.bf16.msra.mxu0 %v3066
    %3732 = vmatpush.bf16.msra.mxu0 %v3062
    %3733 = vmatmul.bf16.gmra.mxu0 %v2473
    %v3734 = vpop.f32.mrf.mxu0
    %v3735 = vadd.f32 %v3686, %v3734
    %v3736 = vpop.f32.mrf.mxu0
    %v3737 = vadd.f32 %v3688, %v3736
    %3738 = vmatmul.bf16.gmra.mxu0 %v2477
    %v3739 = vpop.f32.mrf.mxu0
    %v3740 = vadd.f32 %v3691, %v3739
    %v3741 = vpop.f32.mrf.mxu0
    %v3742 = vadd.f32 %v3693, %v3741
    %3743 = vmatmul.bf16.gmra.mxu0 %v2481
    %v3744 = vpop.f32.mrf.mxu0
    %v3745 = vadd.f32 %v3696, %v3744
    %v3746 = vpop.f32.mrf.mxu0
    %v3747 = vadd.f32 %v3698, %v3746
    %3748 = vmatmul.bf16.gmra.mxu0 %v2485
    %v3749 = vpop.f32.mrf.mxu0
    %v3750 = vadd.f32 %v3701, %v3749
    %v3751 = vpop.f32.mrf.mxu0
    %v3752 = vadd.f32 %v3703, %v3751
    %3753 = vmatmul.bf16.gmra.mxu0 %v2489
    %v3754 = vpop.f32.mrf.mxu0
    %v3755 = vadd.f32 %v3706, %v3754
    %v3756 = vpop.f32.mrf.mxu0
    %v3757 = vadd.f32 %v3708, %v3756
    %3758 = vmatmul.bf16.gmra.mxu0 %v2493
    %v3759 = vpop.f32.mrf.mxu0
    %v3760 = vadd.f32 %v3711, %v3759
    %v3761 = vpop.f32.mrf.mxu0
    %v3762 = vadd.f32 %v3713, %v3761
    %3763 = vmatmul.bf16.gmra.mxu0 %v2497
    %v3764 = vpop.f32.mrf.mxu0
    %v3765 = vadd.f32 %v3716, %v3764
    %v3766 = vpop.f32.mrf.mxu0
    %v3767 = vadd.f32 %v3718, %v3766
    %3768 = vmatmul.bf16.gmra.mxu0 %v2501
    %v3769 = vpop.f32.mrf.mxu0
    %v3770 = vadd.f32 %v3721, %v3769
    %v3771 = vpop.f32.mrf.mxu0
    %v3772 = vadd.f32 %v3723, %v3771
    %3773 = vdwg.mxu0
    %3774 = vmatpush.bf16.msra.mxu0 %v3122
    %3775 = vmatpush.bf16.msra.mxu0 %v3118
    %3776 = vmatpush.bf16.msra.mxu0 %v3114
    %3777 = vmatpush.bf16.msra.mxu0 %v3110
    %3778 = vmatpush.bf16.msra.mxu0 %v3106
    %3779 = vmatpush.bf16.msra.mxu0 %v3102
    %3780 = vmatpush.bf16.msra.mxu0 %v3098
    %3781 = vmatpush.bf16.msra.mxu0 %v3094
    %3782 = vmatmul.bf16.gmra.mxu0 %v2474
    %v3783 = vpop.f32.mrf.mxu0
    %v3784 = vadd.f32 %v3735, %v3783
    %v3785 = vpop.f32.mrf.mxu0
    %v3786 = vadd.f32 %v3737, %v3785
    %3787 = vmatmul.bf16.gmra.mxu0 %v2478
    %v3788 = vpop.f32.mrf.mxu0
    %v3789 = vadd.f32 %v3740, %v3788
    %v3790 = vpop.f32.mrf.mxu0
    %v3791 = vadd.f32 %v3742, %v3790
    %3792 = vmatmul.bf16.gmra.mxu0 %v2482
    %v3793 = vpop.f32.mrf.mxu0
    %v3794 = vadd.f32 %v3745, %v3793
    %v3795 = vpop.f32.mrf.mxu0
    %v3796 = vadd.f32 %v3747, %v3795
    %3797 = vmatmul.bf16.gmra.mxu0 %v2486
    %v3798 = vpop.f32.mrf.mxu0
    %v3799 = vadd.f32 %v3750, %v3798
    %v3800 = vpop.f32.mrf.mxu0
    %v3801 = vadd.f32 %v3752, %v3800
    %3802 = vmatmul.bf16.gmra.mxu0 %v2490
    %v3803 = vpop.f32.mrf.mxu0
    %v3804 = vadd.f32 %v3755, %v3803
    %v3805 = vpop.f32.mrf.mxu0
    %v3806 = vadd.f32 %v3757, %v3805
    %3807 = vmatmul.bf16.gmra.mxu0 %v2494
    %v3808 = vpop.f32.mrf.mxu0
    %v3809 = vadd.f32 %v3760, %v3808
    %v3810 = vpop.f32.mrf.mxu0
    %v3811 = vadd.f32 %v3762, %v3810
    %3812 = vmatmul.bf16.gmra.mxu0 %v2498
    %v3813 = vpop.f32.mrf.mxu0
    %v3814 = vadd.f32 %v3765, %v3813
    %v3815 = vpop.f32.mrf.mxu0
    %v3816 = vadd.f32 %v3767, %v3815
    %3817 = vmatmul.bf16.gmra.mxu0 %v2502
    %v3818 = vpop.f32.mrf.mxu0
    %v3819 = vadd.f32 %v3770, %v3818
    %v3820 = vpop.f32.mrf.mxu0
    %v3821 = vadd.f32 %v3772, %v3820
    %3822 = vdwg.mxu0
    %3823 = vmatpush.bf16.msra.mxu0 %v3154
    %3824 = vmatpush.bf16.msra.mxu0 %v3150
    %3825 = vmatpush.bf16.msra.mxu0 %v3146
    %3826 = vmatpush.bf16.msra.mxu0 %v3142
    %3827 = vmatpush.bf16.msra.mxu0 %v3138
    %3828 = vmatpush.bf16.msra.mxu0 %v3134
    %3829 = vmatpush.bf16.msra.mxu0 %v3130
    %3830 = vmatpush.bf16.msra.mxu0 %v3126
    %3831 = vmatmul.bf16.gmra.mxu0 %v2475
    %v3832 = vpop.f32.mrf.mxu0
    %v3833 = vadd.f32 %v3784, %v3832
    %v3834 = vpop.f32.mrf.mxu0
    %v3835 = vadd.f32 %v3786, %v3834
    %3836 = vmatmul.bf16.gmra.mxu0 %v2479
    %v3837 = vpop.f32.mrf.mxu0
    %v3838 = vadd.f32 %v3789, %v3837
    %v3839 = vpop.f32.mrf.mxu0
    %v3840 = vadd.f32 %v3791, %v3839
    %3841 = vmatmul.bf16.gmra.mxu0 %v2483
    %v3842 = vpop.f32.mrf.mxu0
    %v3843 = vadd.f32 %v3794, %v3842
    %v3844 = vpop.f32.mrf.mxu0
    %v3845 = vadd.f32 %v3796, %v3844
    %3846 = vmatmul.bf16.gmra.mxu0 %v2487
    %v3847 = vpop.f32.mrf.mxu0
    %v3848 = vadd.f32 %v3799, %v3847
    %v3849 = vpop.f32.mrf.mxu0
    %v3850 = vadd.f32 %v3801, %v3849
    %3851 = vmatmul.bf16.gmra.mxu0 %v2491
    %v3852 = vpop.f32.mrf.mxu0
    %v3853 = vadd.f32 %v3804, %v3852
    %v3854 = vpop.f32.mrf.mxu0
    %v3855 = vadd.f32 %v3806, %v3854
    %3856 = vmatmul.bf16.gmra.mxu0 %v2495
    %v3857 = vpop.f32.mrf.mxu0
    %v3858 = vadd.f32 %v3809, %v3857
    %v3859 = vpop.f32.mrf.mxu0
    %v3860 = vadd.f32 %v3811, %v3859
    %3861 = vmatmul.bf16.gmra.mxu0 %v2499
    %v3862 = vpop.f32.mrf.mxu0
    %v3863 = vadd.f32 %v3814, %v3862
    %v3864 = vpop.f32.mrf.mxu0
    %v3865 = vadd.f32 %v3816, %v3864
    %3866 = vmatmul.bf16.gmra.mxu0 %v2503
    %v3867 = vpop.f32.mrf.mxu0
    %v3868 = vadd.f32 %v3819, %v3867
    %v3869 = vpop.f32.mrf.mxu0
    %v3870 = vadd.f32 %v3821, %v3869
    %3871 = vdwg.mxu0
    %3872 = vmatpush.bf16.msra.mxu0 %v3059
    %3873 = vmatpush.bf16.msra.mxu0 %v3055
    %3874 = vmatpush.bf16.msra.mxu0 %v3051
    %3875 = vmatpush.bf16.msra.mxu0 %v3047
    %3876 = vmatpush.bf16.msra.mxu0 %v3043
    %3877 = vmatpush.bf16.msra.mxu0 %v3039
    %3878 = vmatpush.bf16.msra.mxu0 %v3035
    %3879 = vmatpush.bf16.msra.mxu0 %v3031
    %3880 = vmatmul.bf16.gmra.mxu0 %v2472
    %v3881 = vpop.f32.mrf.mxu0
    %v3882 = vadd.f32 %v2639, %v3881
    %v3883 = vpop.f32.mrf.mxu0
    %v3884 = vadd.f32 %v2639, %v3883
    %3885 = vmatmul.bf16.gmra.mxu0 %v2476
    %v3886 = vpop.f32.mrf.mxu0
    %v3887 = vadd.f32 %v2639, %v3886
    %v3888 = vpop.f32.mrf.mxu0
    %v3889 = vadd.f32 %v2639, %v3888
    %3890 = vmatmul.bf16.gmra.mxu0 %v2480
    %v3891 = vpop.f32.mrf.mxu0
    %v3892 = vadd.f32 %v2639, %v3891
    %v3893 = vpop.f32.mrf.mxu0
    %v3894 = vadd.f32 %v2639, %v3893
    %3895 = vmatmul.bf16.gmra.mxu0 %v2484
    %v3896 = vpop.f32.mrf.mxu0
    %v3897 = vadd.f32 %v2639, %v3896
    %v3898 = vpop.f32.mrf.mxu0
    %v3899 = vadd.f32 %v2639, %v3898
    %3900 = vmatmul.bf16.gmra.mxu0 %v2488
    %v3901 = vpop.f32.mrf.mxu0
    %v3902 = vadd.f32 %v2639, %v3901
    %v3903 = vpop.f32.mrf.mxu0
    %v3904 = vadd.f32 %v2639, %v3903
    %3905 = vmatmul.bf16.gmra.mxu0 %v2492
    %v3906 = vpop.f32.mrf.mxu0
    %v3907 = vadd.f32 %v2639, %v3906
    %v3908 = vpop.f32.mrf.mxu0
    %v3909 = vadd.f32 %v2639, %v3908
    %3910 = vmatmul.bf16.gmra.mxu0 %v2496
    %v3911 = vpop.f32.mrf.mxu0
    %v3912 = vadd.f32 %v2639, %v3911
    %v3913 = vpop.f32.mrf.mxu0
    %v3914 = vadd.f32 %v2639, %v3913
    %3915 = vmatmul.bf16.gmra.mxu0 %v2500
    %v3916 = vpop.f32.mrf.mxu0
    %v3917 = vadd.f32 %v2639, %v3916
    %v3918 = vpop.f32.mrf.mxu0
    %v3919 = vadd.f32 %v2639, %v3918
    %3920 = vdwg.mxu0
    %3921 = vmatpush.bf16.msra.mxu0 %v3091
    %3922 = vmatpush.bf16.msra.mxu0 %v3087
    %3923 = vmatpush.bf16.msra.mxu0 %v3083
    %3924 = vmatpush.bf16.msra.mxu0 %v3079
    %3925 = vmatpush.bf16.msra.mxu0 %v3075
    %3926 = vmatpush.bf16.msra.mxu0 %v3071
    %3927 = vmatpush.bf16.msra.mxu0 %v3067
    %3928 = vmatpush.bf16.msra.mxu0 %v3063
    %3929 = vmatmul.bf16.gmra.mxu0 %v2473
    %v3930 = vpop.f32.mrf.mxu0
    %v3931 = vadd.f32 %v3882, %v3930
    %v3932 = vpop.f32.mrf.mxu0
    %v3933 = vadd.f32 %v3884, %v3932
    %3934 = vmatmul.bf16.gmra.mxu0 %v2477
    %v3935 = vpop.f32.mrf.mxu0
    %v3936 = vadd.f32 %v3887, %v3935
    %v3937 = vpop.f32.mrf.mxu0
    %v3938 = vadd.f32 %v3889, %v3937
    %3939 = vmatmul.bf16.gmra.mxu0 %v2481
    %v3940 = vpop.f32.mrf.mxu0
    %v3941 = vadd.f32 %v3892, %v3940
    %v3942 = vpop.f32.mrf.mxu0
    %v3943 = vadd.f32 %v3894, %v3942
    %3944 = vmatmul.bf16.gmra.mxu0 %v2485
    %v3945 = vpop.f32.mrf.mxu0
    %v3946 = vadd.f32 %v3897, %v3945
    %v3947 = vpop.f32.mrf.mxu0
    %v3948 = vadd.f32 %v3899, %v3947
    %3949 = vmatmul.bf16.gmra.mxu0 %v2489
    %v3950 = vpop.f32.mrf.mxu0
    %v3951 = vadd.f32 %v3902, %v3950
    %v3952 = vpop.f32.mrf.mxu0
    %v3953 = vadd.f32 %v3904, %v3952
    %3954 = vmatmul.bf16.gmra.mxu0 %v2493
    %v3955 = vpop.f32.mrf.mxu0
    %v3956 = vadd.f32 %v3907, %v3955
    %v3957 = vpop.f32.mrf.mxu0
    %v3958 = vadd.f32 %v3909, %v3957
    %3959 = vmatmul.bf16.gmra.mxu0 %v2497
    %v3960 = vpop.f32.mrf.mxu0
    %v3961 = vadd.f32 %v3912, %v3960
    %v3962 = vpop.f32.mrf.mxu0
    %v3963 = vadd.f32 %v3914, %v3962
    %3964 = vmatmul.bf16.gmra.mxu0 %v2501
    %v3965 = vpop.f32.mrf.mxu0
    %v3966 = vadd.f32 %v3917, %v3965
    %v3967 = vpop.f32.mrf.mxu0
    %v3968 = vadd.f32 %v3919, %v3967
    %3969 = vdwg.mxu0
    %3970 = vmatpush.bf16.msra.mxu0 %v3123
    %3971 = vmatpush.bf16.msra.mxu0 %v3119
    %3972 = vmatpush.bf16.msra.mxu0 %v3115
    %3973 = vmatpush.bf16.msra.mxu0 %v3111
    %3974 = vmatpush.bf16.msra.mxu0 %v3107
    %3975 = vmatpush.bf16.msra.mxu0 %v3103
    %3976 = vmatpush.bf16.msra.mxu0 %v3099
    %3977 = vmatpush.bf16.msra.mxu0 %v3095
    %3978 = vmatmul.bf16.gmra.mxu0 %v2474
    %v3979 = vpop.f32.mrf.mxu0
    %v3980 = vadd.f32 %v3931, %v3979
    %v3981 = vpop.f32.mrf.mxu0
    %v3982 = vadd.f32 %v3933, %v3981
    %3983 = vmatmul.bf16.gmra.mxu0 %v2478
    %v3984 = vpop.f32.mrf.mxu0
    %v3985 = vadd.f32 %v3936, %v3984
    %v3986 = vpop.f32.mrf.mxu0
    %v3987 = vadd.f32 %v3938, %v3986
    %3988 = vmatmul.bf16.gmra.mxu0 %v2482
    %v3989 = vpop.f32.mrf.mxu0
    %v3990 = vadd.f32 %v3941, %v3989
    %v3991 = vpop.f32.mrf.mxu0
    %v3992 = vadd.f32 %v3943, %v3991
    %3993 = vmatmul.bf16.gmra.mxu0 %v2486
    %v3994 = vpop.f32.mrf.mxu0
    %v3995 = vadd.f32 %v3946, %v3994
    %v3996 = vpop.f32.mrf.mxu0
    %v3997 = vadd.f32 %v3948, %v3996
    %3998 = vmatmul.bf16.gmra.mxu0 %v2490
    %v3999 = vpop.f32.mrf.mxu0
    %v4000 = vadd.f32 %v3951, %v3999
    %v4001 = vpop.f32.mrf.mxu0
    %v4002 = vadd.f32 %v3953, %v4001
    %4003 = vmatmul.bf16.gmra.mxu0 %v2494
    %v4004 = vpop.f32.mrf.mxu0
    %v4005 = vadd.f32 %v3956, %v4004
    %v4006 = vpop.f32.mrf.mxu0
    %v4007 = vadd.f32 %v3958, %v4006
    %4008 = vmatmul.bf16.gmra.mxu0 %v2498
    %v4009 = vpop.f32.mrf.mxu0
    %v4010 = vadd.f32 %v3961, %v4009
    %v4011 = vpop.f32.mrf.mxu0
    %v4012 = vadd.f32 %v3963, %v4011
    %4013 = vmatmul.bf16.gmra.mxu0 %v2502
    %v4014 = vpop.f32.mrf.mxu0
    %v4015 = vadd.f32 %v3966, %v4014
    %v4016 = vpop.f32.mrf.mxu0
    %v4017 = vadd.f32 %v3968, %v4016
    %4018 = vdwg.mxu0
    %4019 = vmatpush.bf16.msra.mxu0 %v3155
    %4020 = vmatpush.bf16.msra.mxu0 %v3151
    %4021 = vmatpush.bf16.msra.mxu0 %v3147
    %4022 = vmatpush.bf16.msra.mxu0 %v3143
    %4023 = vmatpush.bf16.msra.mxu0 %v3139
    %4024 = vmatpush.bf16.msra.mxu0 %v3135
    %4025 = vmatpush.bf16.msra.mxu0 %v3131
    %4026 = vmatpush.bf16.msra.mxu0 %v3127
    %4027 = vmatmul.bf16.gmra.mxu0 %v2475
    %v4028 = vpop.f32.mrf.mxu0
    %v4029 = vadd.f32 %v3980, %v4028
    %v4030 = vpop.f32.mrf.mxu0
    %v4031 = vadd.f32 %v3982, %v4030
    %4032 = vmatmul.bf16.gmra.mxu0 %v2479
    %v4033 = vpop.f32.mrf.mxu0
    %v4034 = vadd.f32 %v3985, %v4033
    %v4035 = vpop.f32.mrf.mxu0
    %v4036 = vadd.f32 %v3987, %v4035
    %4037 = vmatmul.bf16.gmra.mxu0 %v2483
    %v4038 = vpop.f32.mrf.mxu0
    %v4039 = vadd.f32 %v3990, %v4038
    %v4040 = vpop.f32.mrf.mxu0
    %v4041 = vadd.f32 %v3992, %v4040
    %4042 = vmatmul.bf16.gmra.mxu0 %v2487
    %v4043 = vpop.f32.mrf.mxu0
    %v4044 = vadd.f32 %v3995, %v4043
    %v4045 = vpop.f32.mrf.mxu0
    %v4046 = vadd.f32 %v3997, %v4045
    %4047 = vmatmul.bf16.gmra.mxu0 %v2491
    %v4048 = vpop.f32.mrf.mxu0
    %v4049 = vadd.f32 %v4000, %v4048
    %v4050 = vpop.f32.mrf.mxu0
    %v4051 = vadd.f32 %v4002, %v4050
    %4052 = vmatmul.bf16.gmra.mxu0 %v2495
    %v4053 = vpop.f32.mrf.mxu0
    %v4054 = vadd.f32 %v4005, %v4053
    %v4055 = vpop.f32.mrf.mxu0
    %v4056 = vadd.f32 %v4007, %v4055
    %4057 = vmatmul.bf16.gmra.mxu0 %v2499
    %v4058 = vpop.f32.mrf.mxu0
    %v4059 = vadd.f32 %v4010, %v4058
    %v4060 = vpop.f32.mrf.mxu0
    %v4061 = vadd.f32 %v4012, %v4060
    %4062 = vmatmul.bf16.gmra.mxu0 %v2503
    %v4063 = vpop.f32.mrf.mxu0
    %v4064 = vadd.f32 %v4015, %v4063
    %v4065 = vpop.f32.mrf.mxu0
    %v4066 = vadd.f32 %v4017, %v4065
    %4067 = vdwg.mxu0
    %v4068 = vtanh.pop %v3441
    %v4069 = vtanh.pop %v3637
    %v4070 = vtanh.pop %v3833
    %v4071 = vtanh.pop %v4029
    %v4072 = vtanh.pop %v3443
    %v4073 = vtanh.pop %v3639
    %v4074 = vtanh.pop %v3835
    %v4075 = vtanh.pop %v4031
    %v4076 = vtanh.pop %v3446
    %v4077 = vtanh.pop %v3642
    %v4078 = vtanh.pop %v3838
    %v4079 = vtanh.pop %v4034
    %v4080 = vtanh.pop %v3448
    %v4081 = vtanh.pop %v3644
    %v4082 = vtanh.pop %v3840
    %v4083 = vtanh.pop %v4036
    %v4084 = vtanh.pop %v3451
    %v4085 = vtanh.pop %v3647
    %v4086 = vtanh.pop %v3843
    %v4087 = vtanh.pop %v4039
    %v4088 = vtanh.pop %v3453
    %v4089 = vtanh.pop %v3649
    %v4090 = vtanh.pop %v3845
    %v4091 = vtanh.pop %v4041
    %v4092 = vtanh.pop %v3456
    %v4093 = vtanh.pop %v3652
    %v4094 = vtanh.pop %v3848
    %v4095 = vtanh.pop %v4044
    %v4096 = vtanh.pop %v3458
    %v4097 = vtanh.pop %v3654
    %v4098 = vtanh.pop %v3850
    %v4099 = vtanh.pop %v4046
    %v4100 = vtanh.pop %v3461
    %v4101 = vtanh.pop %v3657
    %v4102 = vtanh.pop %v3853
    %v4103 = vtanh.pop %v4049
    %v4104 = vtanh.pop %v3463
    %v4105 = vtanh.pop %v3659
    %v4106 = vtanh.pop %v3855
    %v4107 = vtanh.pop %v4051
    %v4108 = vtanh.pop %v3466
    %v4109 = vtanh.pop %v3662
    %v4110 = vtanh.pop %v3858
    %v4111 = vtanh.pop %v4054
    %v4112 = vtanh.pop %v3468
    %v4113 = vtanh.pop %v3664
    %v4114 = vtanh.pop %v3860
    %v4115 = vtanh.pop %v4056
    %v4116 = vtanh.pop %v3471
    %v4117 = vtanh.pop %v3667
    %v4118 = vtanh.pop %v3863
    %v4119 = vtanh.pop %v4059
    %v4120 = vtanh.pop %v3473
    %v4121 = vtanh.pop %v3669
    %v4122 = vtanh.pop %v3865
    %v4123 = vtanh.pop %v4061
    %v4124 = vtanh.pop %v3476
    %v4125 = vtanh.pop %v3672
    %v4126 = vtanh.pop %v3868
    %v4127 = vtanh.pop %v4064
    %v4128 = vtanh.pop %v3478
    %v4129 = vtanh.pop %v3674
    %v4130 = vtanh.pop %v3870
    %v4131 = vtanh.pop %v4066
    %v4132 = vpack.c.bf16 %v4072, %v4068
    %v4133 = vpack.c.bf16 %v4073, %v4069
    %v4134 = vpack.c.bf16 %v4074, %v4070
    %v4135 = vpack.c.bf16 %v4075, %v4071
    %v4136 = vpack.c.bf16 %v4080, %v4076
    %v4137 = vpack.c.bf16 %v4081, %v4077
    %v4138 = vpack.c.bf16 %v4082, %v4078
    %v4139 = vpack.c.bf16 %v4083, %v4079
    %v4140 = vpack.c.bf16 %v4088, %v4084
    %v4141 = vpack.c.bf16 %v4089, %v4085
    %v4142 = vpack.c.bf16 %v4090, %v4086
    %v4143 = vpack.c.bf16 %v4091, %v4087
    %v4144 = vpack.c.bf16 %v4096, %v4092
    %v4145 = vpack.c.bf16 %v4097, %v4093
    %v4146 = vpack.c.bf16 %v4098, %v4094
    %v4147 = vpack.c.bf16 %v4099, %v4095
    %v4148 = vpack.c.bf16 %v4104, %v4100
    %v4149 = vpack.c.bf16 %v4105, %v4101
    %v4150 = vpack.c.bf16 %v4106, %v4102
    %v4151 = vpack.c.bf16 %v4107, %v4103
    %v4152 = vpack.c.bf16 %v4112, %v4108
    %v4153 = vpack.c.bf16 %v4113, %v4109
    %v4154 = vpack.c.bf16 %v4114, %v4110
    %v4155 = vpack.c.bf16 %v4115, %v4111
    %v4156 = vpack.c.bf16 %v4120, %v4116
    %v4157 = vpack.c.bf16 %v4121, %v4117
    %v4158 = vpack.c.bf16 %v4122, %v4118
    %v4159 = vpack.c.bf16 %v4123, %v4119
    %v4160 = vpack.c.bf16 %v4128, %v4124
    %v4161 = vpack.c.bf16 %v4129, %v4125
    %v4162 = vpack.c.bf16 %v4130, %v4126
    %v4163 = vpack.c.bf16 %v4131, %v4127
    %s4164 = scalar_lea.vmem [#allocation7], 2048
    %v4165 = vld [vmem:[%s4164] sm:$0xff]
    %v4166 = vld [vmem:[%s4164 + $0x8] sm:$0xff]
    %v4167 = vld [vmem:[%s4164 + $0x10] sm:$0xff]
    %v4168 = vld [vmem:[%s4164 + $0x18] sm:$0xff]
    %v4169 = vld [vmem:[%s4164 + $0x20] sm:$0xff]
    %v4170 = vld [vmem:[%s4164 + $0x28] sm:$0xff]
    %v4171 = vld [vmem:[%s4164 + $0x30] sm:$0xff]
    %v4172 = vld [vmem:[%s4164 + $0x38] sm:$0xff]
    %v4173 = vld [vmem:[%s4164 + $0x40] sm:$0xff]
    %v4174 = vld [vmem:[%s4164 + $0x48] sm:$0xff]
    %v4175 = vld [vmem:[%s4164 + $0x50] sm:$0xff]
    %v4176 = vld [vmem:[%s4164 + $0x58] sm:$0xff]
    %v4177 = vld [vmem:[%s4164 + $0x60] sm:$0xff]
    %v4178 = vld [vmem:[%s4164 + $0x68] sm:$0xff]
    %v4179 = vld [vmem:[%s4164 + $0x70] sm:$0xff]
    %v4180 = vld [vmem:[%s4164 + $0x78] sm:$0xff]
    %v4181 = vld [vmem:[%s4164 + $0x80] sm:$0xff]
    %v4182 = vld [vmem:[%s4164 + $0x88] sm:$0xff]
    %v4183 = vld [vmem:[%s4164 + $0x90] sm:$0xff]
    %v4184 = vld [vmem:[%s4164 + $0x98] sm:$0xff]
    %v4185 = vld [vmem:[%s4164 + $0xa0] sm:$0xff]
    %v4186 = vld [vmem:[%s4164 + $0xa8] sm:$0xff]
    %v4187 = vld [vmem:[%s4164 + $0xb0] sm:$0xff]
    %v4188 = vld [vmem:[%s4164 + $0xb8] sm:$0xff]
    %v4189 = vld [vmem:[%s4164 + $0xc0] sm:$0xff]
    %v4190 = vld [vmem:[%s4164 + $0xc8] sm:$0xff]
    %v4191 = vld [vmem:[%s4164 + $0xd0] sm:$0xff]
    %v4192 = vld [vmem:[%s4164 + $0xd8] sm:$0xff]
    %v4193 = vld [vmem:[%s4164 + $0xe0] sm:$0xff]
    %v4194 = vld [vmem:[%s4164 + $0xe8] sm:$0xff]
    %v4195 = vld [vmem:[%s4164 + $0xf0] sm:$0xff]
    %v4196 = vld [vmem:[%s4164 + $0xf8] sm:$0xff]
    %v4197 = vld [vmem:[%s4164 + $0x100] sm:$0xff]
    %v4198 = vld [vmem:[%s4164 + $0x108] sm:$0xff]
    %v4199 = vld [vmem:[%s4164 + $0x110] sm:$0xff]
    %v4200 = vld [vmem:[%s4164 + $0x118] sm:$0xff]
    %v4201 = vld [vmem:[%s4164 + $0x120] sm:$0xff]
    %v4202 = vld [vmem:[%s4164 + $0x128] sm:$0xff]
    %v4203 = vld [vmem:[%s4164 + $0x130] sm:$0xff]
    %v4204 = vld [vmem:[%s4164 + $0x138] sm:$0xff]
    %v4205 = vld [vmem:[%s4164 + $0x140] sm:$0xff]
    %v4206 = vld [vmem:[%s4164 + $0x148] sm:$0xff]
    %v4207 = vld [vmem:[%s4164 + $0x150] sm:$0xff]
    %v4208 = vld [vmem:[%s4164 + $0x158] sm:$0xff]
    %v4209 = vld [vmem:[%s4164 + $0x160] sm:$0xff]
    %v4210 = vld [vmem:[%s4164 + $0x168] sm:$0xff]
    %v4211 = vld [vmem:[%s4164 + $0x170] sm:$0xff]
    %v4212 = vld [vmem:[%s4164 + $0x178] sm:$0xff]
    %v4213 = vld [vmem:[%s4164 + $0x180] sm:$0xff]
    %v4214 = vld [vmem:[%s4164 + $0x188] sm:$0xff]
    %v4215 = vld [vmem:[%s4164 + $0x190] sm:$0xff]
    %v4216 = vld [vmem:[%s4164 + $0x198] sm:$0xff]
    %v4217 = vld [vmem:[%s4164 + $0x1a0] sm:$0xff]
    %v4218 = vld [vmem:[%s4164 + $0x1a8] sm:$0xff]
    %v4219 = vld [vmem:[%s4164 + $0x1b0] sm:$0xff]
    %v4220 = vld [vmem:[%s4164 + $0x1b8] sm:$0xff]
    %v4221 = vld [vmem:[%s4164 + $0x1c0] sm:$0xff]
    %v4222 = vld [vmem:[%s4164 + $0x1c8] sm:$0xff]
    %v4223 = vld [vmem:[%s4164 + $0x1d0] sm:$0xff]
    %v4224 = vld [vmem:[%s4164 + $0x1d8] sm:$0xff]
    %v4225 = vld [vmem:[%s4164 + $0x1e0] sm:$0xff]
    %v4226 = vld [vmem:[%s4164 + $0x1e8] sm:$0xff]
    %v4227 = vld [vmem:[%s4164 + $0x1f0] sm:$0xff]
    %v4228 = vld [vmem:[%s4164 + $0x1f8] sm:$0xff]
    %v4229 = vld [vmem:[%s4164 + $0x200] sm:$0xff]
    %v4230 = vld [vmem:[%s4164 + $0x208] sm:$0xff]
    %v4231 = vld [vmem:[%s4164 + $0x210] sm:$0xff]
    %v4232 = vld [vmem:[%s4164 + $0x218] sm:$0xff]
    %v4233 = vld [vmem:[%s4164 + $0x220] sm:$0xff]
    %v4234 = vld [vmem:[%s4164 + $0x228] sm:$0xff]
    %v4235 = vld [vmem:[%s4164 + $0x230] sm:$0xff]
    %v4236 = vld [vmem:[%s4164 + $0x238] sm:$0xff]
    %v4237 = vld [vmem:[%s4164 + $0x240] sm:$0xff]
    %v4238 = vld [vmem:[%s4164 + $0x248] sm:$0xff]
    %v4239 = vld [vmem:[%s4164 + $0x250] sm:$0xff]
    %v4240 = vld [vmem:[%s4164 + $0x258] sm:$0xff]
    %v4241 = vld [vmem:[%s4164 + $0x260] sm:$0xff]
    %v4242 = vld [vmem:[%s4164 + $0x268] sm:$0xff]
    %v4243 = vld [vmem:[%s4164 + $0x270] sm:$0xff]
    %v4244 = vld [vmem:[%s4164 + $0x278] sm:$0xff]
    %v4245 = vld [vmem:[%s4164 + $0x280] sm:$0xff]
    %v4246 = vld [vmem:[%s4164 + $0x288] sm:$0xff]
    %v4247 = vld [vmem:[%s4164 + $0x290] sm:$0xff]
    %v4248 = vld [vmem:[%s4164 + $0x298] sm:$0xff]
    %v4249 = vld [vmem:[%s4164 + $0x2a0] sm:$0xff]
    %v4250 = vld [vmem:[%s4164 + $0x2a8] sm:$0xff]
    %v4251 = vld [vmem:[%s4164 + $0x2b0] sm:$0xff]
    %v4252 = vld [vmem:[%s4164 + $0x2b8] sm:$0xff]
    %v4253 = vld [vmem:[%s4164 + $0x2c0] sm:$0xff]
    %v4254 = vld [vmem:[%s4164 + $0x2c8] sm:$0xff]
    %v4255 = vld [vmem:[%s4164 + $0x2d0] sm:$0xff]
    %v4256 = vld [vmem:[%s4164 + $0x2d8] sm:$0xff]
    %v4257 = vld [vmem:[%s4164 + $0x2e0] sm:$0xff]
    %v4258 = vld [vmem:[%s4164 + $0x2e8] sm:$0xff]
    %v4259 = vld [vmem:[%s4164 + $0x2f0] sm:$0xff]
    %v4260 = vld [vmem:[%s4164 + $0x2f8] sm:$0xff]
    %v4261 = vld [vmem:[%s4164 + $0x300] sm:$0xff]
    %v4262 = vld [vmem:[%s4164 + $0x308] sm:$0xff]
    %v4263 = vld [vmem:[%s4164 + $0x310] sm:$0xff]
    %v4264 = vld [vmem:[%s4164 + $0x318] sm:$0xff]
    %v4265 = vld [vmem:[%s4164 + $0x320] sm:$0xff]
    %v4266 = vld [vmem:[%s4164 + $0x328] sm:$0xff]
    %v4267 = vld [vmem:[%s4164 + $0x330] sm:$0xff]
    %v4268 = vld [vmem:[%s4164 + $0x338] sm:$0xff]
    %v4269 = vld [vmem:[%s4164 + $0x340] sm:$0xff]
    %v4270 = vld [vmem:[%s4164 + $0x348] sm:$0xff]
    %v4271 = vld [vmem:[%s4164 + $0x350] sm:$0xff]
    %v4272 = vld [vmem:[%s4164 + $0x358] sm:$0xff]
    %v4273 = vld [vmem:[%s4164 + $0x360] sm:$0xff]
    %v4274 = vld [vmem:[%s4164 + $0x368] sm:$0xff]
    %v4275 = vld [vmem:[%s4164 + $0x370] sm:$0xff]
    %v4276 = vld [vmem:[%s4164 + $0x378] sm:$0xff]
    %v4277 = vld [vmem:[%s4164 + $0x380] sm:$0xff]
    %v4278 = vld [vmem:[%s4164 + $0x388] sm:$0xff]
    %v4279 = vld [vmem:[%s4164 + $0x390] sm:$0xff]
    %v4280 = vld [vmem:[%s4164 + $0x398] sm:$0xff]
    %v4281 = vld [vmem:[%s4164 + $0x3a0] sm:$0xff]
    %v4282 = vld [vmem:[%s4164 + $0x3a8] sm:$0xff]
    %v4283 = vld [vmem:[%s4164 + $0x3b0] sm:$0xff]
    %v4284 = vld [vmem:[%s4164 + $0x3b8] sm:$0xff]
    %v4285 = vld [vmem:[%s4164 + $0x3c0] sm:$0xff]
    %v4286 = vld [vmem:[%s4164 + $0x3c8] sm:$0xff]
    %v4287 = vld [vmem:[%s4164 + $0x3d0] sm:$0xff]
    %v4288 = vld [vmem:[%s4164 + $0x3d8] sm:$0xff]
    %v4289 = vld [vmem:[%s4164 + $0x3e0] sm:$0xff]
    %v4290 = vld [vmem:[%s4164 + $0x3e8] sm:$0xff]
    %v4291 = vld [vmem:[%s4164 + $0x3f0] sm:$0xff]
    %v4292 = vld [vmem:[%s4164 + $0x3f8] sm:$0xff]
    %s4293 = scalar_lea.vmem [#allocation8], 8
    %v4294 = vld [vmem:[%s4293] sm:$0xf]
    %v4296 = vperm.slane %v4294, 0
    %v4297 = vperm.slane %v4294, 1
    %v4298 = vperm.slane %v4294, 2
    %v4299 = vperm.slane %v4294, 3
    %v4432 = vunpack.c.l.b16 %v4165
    %v4433 = vunpack.c.h.b16 %v4165
    %v4434 = vunpack.c.l.b16 %v4166
    %v4435 = vunpack.c.h.b16 %v4166
    %v4436 = vunpack.c.l.b16 %v4167
    %v4437 = vunpack.c.h.b16 %v4167
    %v4438 = vunpack.c.l.b16 %v4168
    %v4439 = vunpack.c.h.b16 %v4168
    %v4440 = vunpack.c.l.b16 %v4169
    %v4441 = vunpack.c.h.b16 %v4169
    %v4442 = vunpack.c.l.b16 %v4170
    %v4443 = vunpack.c.h.b16 %v4170
    %v4444 = vunpack.c.l.b16 %v4171
    %v4445 = vunpack.c.h.b16 %v4171
    %v4446 = vunpack.c.l.b16 %v4172
    %v4447 = vunpack.c.h.b16 %v4172
    %v4448 = vunpack.c.l.b16 %v4173
    %v4449 = vunpack.c.h.b16 %v4173
    %v4450 = vunpack.c.l.b16 %v4174
    %v4451 = vunpack.c.h.b16 %v4174
    %v4452 = vunpack.c.l.b16 %v4175
    %v4453 = vunpack.c.h.b16 %v4175
    %v4454 = vunpack.c.l.b16 %v4176
    %v4455 = vunpack.c.h.b16 %v4176
    %v4456 = vunpack.c.l.b16 %v4177
    %v4457 = vunpack.c.h.b16 %v4177
    %v4458 = vunpack.c.l.b16 %v4178
    %v4459 = vunpack.c.h.b16 %v4178
    %v4460 = vunpack.c.l.b16 %v4179
    %v4461 = vunpack.c.h.b16 %v4179
    %v4462 = vunpack.c.l.b16 %v4180
    %v4463 = vunpack.c.h.b16 %v4180
    %v4464 = vunpack.c.l.b16 %v4181
    %v4465 = vunpack.c.h.b16 %v4181
    %v4466 = vunpack.c.l.b16 %v4182
    %v4467 = vunpack.c.h.b16 %v4182
    %v4468 = vunpack.c.l.b16 %v4183
    %v4469 = vunpack.c.h.b16 %v4183
    %v4470 = vunpack.c.l.b16 %v4184
    %v4471 = vunpack.c.h.b16 %v4184
    %v4472 = vunpack.c.l.b16 %v4185
    %v4473 = vunpack.c.h.b16 %v4185
    %v4474 = vunpack.c.l.b16 %v4186
    %v4475 = vunpack.c.h.b16 %v4186
    %v4476 = vunpack.c.l.b16 %v4187
    %v4477 = vunpack.c.h.b16 %v4187
    %v4478 = vunpack.c.l.b16 %v4188
    %v4479 = vunpack.c.h.b16 %v4188
    %v4480 = vunpack.c.l.b16 %v4189
    %v4481 = vunpack.c.h.b16 %v4189
    %v4482 = vunpack.c.l.b16 %v4190
    %v4483 = vunpack.c.h.b16 %v4190
    %v4484 = vunpack.c.l.b16 %v4191
    %v4485 = vunpack.c.h.b16 %v4191
    %v4486 = vunpack.c.l.b16 %v4192
    %v4487 = vunpack.c.h.b16 %v4192
    %v4488 = vunpack.c.l.b16 %v4193
    %v4489 = vunpack.c.h.b16 %v4193
    %v4490 = vunpack.c.l.b16 %v4194
    %v4491 = vunpack.c.h.b16 %v4194
    %v4492 = vunpack.c.l.b16 %v4195
    %v4493 = vunpack.c.h.b16 %v4195
    %v4494 = vunpack.c.l.b16 %v4196
    %v4495 = vunpack.c.h.b16 %v4196
    %v4496 = vunpack.c.l.b16 %v4197
    %v4497 = vunpack.c.h.b16 %v4197
    %v4498 = vunpack.c.l.b16 %v4198
    %v4499 = vunpack.c.h.b16 %v4198
    %v4500 = vunpack.c.l.b16 %v4199
    %v4501 = vunpack.c.h.b16 %v4199
    %v4502 = vunpack.c.l.b16 %v4200
    %v4503 = vunpack.c.h.b16 %v4200
    %v4504 = vunpack.c.l.b16 %v4201
    %v4505 = vunpack.c.h.b16 %v4201
    %v4506 = vunpack.c.l.b16 %v4202
    %v4507 = vunpack.c.h.b16 %v4202
    %v4508 = vunpack.c.l.b16 %v4203
    %v4509 = vunpack.c.h.b16 %v4203
    %v4510 = vunpack.c.l.b16 %v4204
    %v4511 = vunpack.c.h.b16 %v4204
    %v4512 = vunpack.c.l.b16 %v4205
    %v4513 = vunpack.c.h.b16 %v4205
    %v4514 = vunpack.c.l.b16 %v4206
    %v4515 = vunpack.c.h.b16 %v4206
    %v4516 = vunpack.c.l.b16 %v4207
    %v4517 = vunpack.c.h.b16 %v4207
    %v4518 = vunpack.c.l.b16 %v4208
    %v4519 = vunpack.c.h.b16 %v4208
    %v4520 = vunpack.c.l.b16 %v4209
    %v4521 = vunpack.c.h.b16 %v4209
    %v4522 = vunpack.c.l.b16 %v4210
    %v4523 = vunpack.c.h.b16 %v4210
    %v4524 = vunpack.c.l.b16 %v4211
    %v4525 = vunpack.c.h.b16 %v4211
    %v4526 = vunpack.c.l.b16 %v4212
    %v4527 = vunpack.c.h.b16 %v4212
    %v4528 = vunpack.c.l.b16 %v4213
    %v4529 = vunpack.c.h.b16 %v4213
    %v4530 = vunpack.c.l.b16 %v4214
    %v4531 = vunpack.c.h.b16 %v4214
    %v4532 = vunpack.c.l.b16 %v4215
    %v4533 = vunpack.c.h.b16 %v4215
    %v4534 = vunpack.c.l.b16 %v4216
    %v4535 = vunpack.c.h.b16 %v4216
    %v4536 = vunpack.c.l.b16 %v4217
    %v4537 = vunpack.c.h.b16 %v4217
    %v4538 = vunpack.c.l.b16 %v4218
    %v4539 = vunpack.c.h.b16 %v4218
    %v4540 = vunpack.c.l.b16 %v4219
    %v4541 = vunpack.c.h.b16 %v4219
    %v4542 = vunpack.c.l.b16 %v4220
    %v4543 = vunpack.c.h.b16 %v4220
    %v4544 = vunpack.c.l.b16 %v4221
    %v4545 = vunpack.c.h.b16 %v4221
    %v4546 = vunpack.c.l.b16 %v4222
    %v4547 = vunpack.c.h.b16 %v4222
    %v4548 = vunpack.c.l.b16 %v4223
    %v4549 = vunpack.c.h.b16 %v4223
    %v4550 = vunpack.c.l.b16 %v4224
    %v4551 = vunpack.c.h.b16 %v4224
    %v4552 = vunpack.c.l.b16 %v4225
    %v4553 = vunpack.c.h.b16 %v4225
    %v4554 = vunpack.c.l.b16 %v4226
    %v4555 = vunpack.c.h.b16 %v4226
    %v4556 = vunpack.c.l.b16 %v4227
    %v4557 = vunpack.c.h.b16 %v4227
    %v4558 = vunpack.c.l.b16 %v4228
    %v4559 = vunpack.c.h.b16 %v4228
    %v4560 = vunpack.c.l.b16 %v4229
    %v4561 = vunpack.c.h.b16 %v4229
    %v4562 = vunpack.c.l.b16 %v4230
    %v4563 = vunpack.c.h.b16 %v4230
    %v4564 = vunpack.c.l.b16 %v4231
    %v4565 = vunpack.c.h.b16 %v4231
    %v4566 = vunpack.c.l.b16 %v4232
    %v4567 = vunpack.c.h.b16 %v4232
    %v4568 = vunpack.c.l.b16 %v4233
    %v4569 = vunpack.c.h.b16 %v4233
    %v4570 = vunpack.c.l.b16 %v4234
    %v4571 = vunpack.c.h.b16 %v4234
    %v4572 = vunpack.c.l.b16 %v4235
    %v4573 = vunpack.c.h.b16 %v4235
    %v4574 = vunpack.c.l.b16 %v4236
    %v4575 = vunpack.c.h.b16 %v4236
    %v4576 = vunpack.c.l.b16 %v4237
    %v4577 = vunpack.c.h.b16 %v4237
    %v4578 = vunpack.c.l.b16 %v4238
    %v4579 = vunpack.c.h.b16 %v4238
    %v4580 = vunpack.c.l.b16 %v4239
    %v4581 = vunpack.c.h.b16 %v4239
    %v4582 = vunpack.c.l.b16 %v4240
    %v4583 = vunpack.c.h.b16 %v4240
    %v4584 = vunpack.c.l.b16 %v4241
    %v4585 = vunpack.c.h.b16 %v4241
    %v4586 = vunpack.c.l.b16 %v4242
    %v4587 = vunpack.c.h.b16 %v4242
    %v4588 = vunpack.c.l.b16 %v4243
    %v4589 = vunpack.c.h.b16 %v4243
    %v4590 = vunpack.c.l.b16 %v4244
    %v4591 = vunpack.c.h.b16 %v4244
    %v4592 = vunpack.c.l.b16 %v4245
    %v4593 = vunpack.c.h.b16 %v4245
    %v4594 = vunpack.c.l.b16 %v4246
    %v4595 = vunpack.c.h.b16 %v4246
    %v4596 = vunpack.c.l.b16 %v4247
    %v4597 = vunpack.c.h.b16 %v4247
    %v4598 = vunpack.c.l.b16 %v4248
    %v4599 = vunpack.c.h.b16 %v4248
    %v4600 = vunpack.c.l.b16 %v4249
    %v4601 = vunpack.c.h.b16 %v4249
    %v4602 = vunpack.c.l.b16 %v4250
    %v4603 = vunpack.c.h.b16 %v4250
    %v4604 = vunpack.c.l.b16 %v4251
    %v4605 = vunpack.c.h.b16 %v4251
    %v4606 = vunpack.c.l.b16 %v4252
    %v4607 = vunpack.c.h.b16 %v4252
    %v4608 = vunpack.c.l.b16 %v4253
    %v4609 = vunpack.c.h.b16 %v4253
    %v4610 = vunpack.c.l.b16 %v4254
    %v4611 = vunpack.c.h.b16 %v4254
    %v4612 = vunpack.c.l.b16 %v4255
    %v4613 = vunpack.c.h.b16 %v4255
    %v4614 = vunpack.c.l.b16 %v4256
    %v4615 = vunpack.c.h.b16 %v4256
    %v4616 = vunpack.c.l.b16 %v4257
    %v4617 = vunpack.c.h.b16 %v4257
    %v4618 = vunpack.c.l.b16 %v4258
    %v4619 = vunpack.c.h.b16 %v4258
    %v4620 = vunpack.c.l.b16 %v4259
    %v4621 = vunpack.c.h.b16 %v4259
    %v4622 = vunpack.c.l.b16 %v4260
    %v4623 = vunpack.c.h.b16 %v4260
    %v4624 = vunpack.c.l.b16 %v4261
    %v4625 = vunpack.c.h.b16 %v4261
    %v4626 = vunpack.c.l.b16 %v4262
    %v4627 = vunpack.c.h.b16 %v4262
    %v4628 = vunpack.c.l.b16 %v4263
    %v4629 = vunpack.c.h.b16 %v4263
    %v4630 = vunpack.c.l.b16 %v4264
    %v4631 = vunpack.c.h.b16 %v4264
    %v4632 = vunpack.c.l.b16 %v4265
    %v4633 = vunpack.c.h.b16 %v4265
    %v4634 = vunpack.c.l.b16 %v4266
    %v4635 = vunpack.c.h.b16 %v4266
    %v4636 = vunpack.c.l.b16 %v4267
    %v4637 = vunpack.c.h.b16 %v4267
    %v4638 = vunpack.c.l.b16 %v4268
    %v4639 = vunpack.c.h.b16 %v4268
    %v4640 = vunpack.c.l.b16 %v4269
    %v4641 = vunpack.c.h.b16 %v4269
    %v4642 = vunpack.c.l.b16 %v4270
    %v4643 = vunpack.c.h.b16 %v4270
    %v4644 = vunpack.c.l.b16 %v4271
    %v4645 = vunpack.c.h.b16 %v4271
    %v4646 = vunpack.c.l.b16 %v4272
    %v4647 = vunpack.c.h.b16 %v4272
    %v4648 = vunpack.c.l.b16 %v4273
    %v4649 = vunpack.c.h.b16 %v4273
    %v4650 = vunpack.c.l.b16 %v4274
    %v4651 = vunpack.c.h.b16 %v4274
    %v4652 = vunpack.c.l.b16 %v4275
    %v4653 = vunpack.c.h.b16 %v4275
    %v4654 = vunpack.c.l.b16 %v4276
    %v4655 = vunpack.c.h.b16 %v4276
    %v4656 = vunpack.c.l.b16 %v4277
    %v4657 = vunpack.c.h.b16 %v4277
    %v4658 = vunpack.c.l.b16 %v4278
    %v4659 = vunpack.c.h.b16 %v4278
    %v4660 = vunpack.c.l.b16 %v4279
    %v4661 = vunpack.c.h.b16 %v4279
    %v4662 = vunpack.c.l.b16 %v4280
    %v4663 = vunpack.c.h.b16 %v4280
    %v4664 = vunpack.c.l.b16 %v4281
    %v4665 = vunpack.c.h.b16 %v4281
    %v4666 = vunpack.c.l.b16 %v4282
    %v4667 = vunpack.c.h.b16 %v4282
    %v4668 = vunpack.c.l.b16 %v4283
    %v4669 = vunpack.c.h.b16 %v4283
    %v4670 = vunpack.c.l.b16 %v4284
    %v4671 = vunpack.c.h.b16 %v4284
    %v4672 = vunpack.c.l.b16 %v4285
    %v4673 = vunpack.c.h.b16 %v4285
    %v4674 = vunpack.c.l.b16 %v4286
    %v4675 = vunpack.c.h.b16 %v4286
    %v4676 = vunpack.c.l.b16 %v4287
    %v4677 = vunpack.c.h.b16 %v4287
    %v4678 = vunpack.c.l.b16 %v4288
    %v4679 = vunpack.c.h.b16 %v4288
    %v4680 = vunpack.c.l.b16 %v4289
    %v4681 = vunpack.c.h.b16 %v4289
    %v4682 = vunpack.c.l.b16 %v4290
    %v4683 = vunpack.c.h.b16 %v4290
    %v4684 = vunpack.c.l.b16 %v4291
    %v4685 = vunpack.c.h.b16 %v4291
    %v4686 = vunpack.c.l.b16 %v4292
    %v4687 = vunpack.c.h.b16 %v4292
    %v4688 = vpack.c.b16 %v4436, %v4432
    %v4689 = vpack.c.b16 %v4437, %v4433
    %v4690 = vpack.c.b16 %v4438, %v4434
    %v4691 = vpack.c.b16 %v4439, %v4435
    %v4692 = vpack.c.b16 %v4444, %v4440
    %v4693 = vpack.c.b16 %v4445, %v4441
    %v4694 = vpack.c.b16 %v4446, %v4442
    %v4695 = vpack.c.b16 %v4447, %v4443
    %v4696 = vpack.c.b16 %v4452, %v4448
    %v4697 = vpack.c.b16 %v4453, %v4449
    %v4698 = vpack.c.b16 %v4454, %v4450
    %v4699 = vpack.c.b16 %v4455, %v4451
    %v4700 = vpack.c.b16 %v4460, %v4456
    %v4701 = vpack.c.b16 %v4461, %v4457
    %v4702 = vpack.c.b16 %v4462, %v4458
    %v4703 = vpack.c.b16 %v4463, %v4459
    %v4704 = vpack.c.b16 %v4468, %v4464
    %v4705 = vpack.c.b16 %v4469, %v4465
    %v4706 = vpack.c.b16 %v4470, %v4466
    %v4707 = vpack.c.b16 %v4471, %v4467
    %v4708 = vpack.c.b16 %v4476, %v4472
    %v4709 = vpack.c.b16 %v4477, %v4473
    %v4710 = vpack.c.b16 %v4478, %v4474
    %v4711 = vpack.c.b16 %v4479, %v4475
    %v4712 = vpack.c.b16 %v4484, %v4480
    %v4713 = vpack.c.b16 %v4485, %v4481
    %v4714 = vpack.c.b16 %v4486, %v4482
    %v4715 = vpack.c.b16 %v4487, %v4483
    %v4716 = vpack.c.b16 %v4492, %v4488
    %v4717 = vpack.c.b16 %v4493, %v4489
    %v4718 = vpack.c.b16 %v4494, %v4490
    %v4719 = vpack.c.b16 %v4495, %v4491
    %v4720 = vpack.c.b16 %v4500, %v4496
    %v4721 = vpack.c.b16 %v4501, %v4497
    %v4722 = vpack.c.b16 %v4502, %v4498
    %v4723 = vpack.c.b16 %v4503, %v4499
    %v4724 = vpack.c.b16 %v4508, %v4504
    %v4725 = vpack.c.b16 %v4509, %v4505
    %v4726 = vpack.c.b16 %v4510, %v4506
    %v4727 = vpack.c.b16 %v4511, %v4507
    %v4728 = vpack.c.b16 %v4516, %v4512
    %v4729 = vpack.c.b16 %v4517, %v4513
    %v4730 = vpack.c.b16 %v4518, %v4514
    %v4731 = vpack.c.b16 %v4519, %v4515
    %v4732 = vpack.c.b16 %v4524, %v4520
    %v4733 = vpack.c.b16 %v4525, %v4521
    %v4734 = vpack.c.b16 %v4526, %v4522
    %v4735 = vpack.c.b16 %v4527, %v4523
    %v4736 = vpack.c.b16 %v4532, %v4528
    %v4737 = vpack.c.b16 %v4533, %v4529
    %v4738 = vpack.c.b16 %v4534, %v4530
    %v4739 = vpack.c.b16 %v4535, %v4531
    %v4740 = vpack.c.b16 %v4540, %v4536
    %v4741 = vpack.c.b16 %v4541, %v4537
    %v4742 = vpack.c.b16 %v4542, %v4538
    %v4743 = vpack.c.b16 %v4543, %v4539
    %v4744 = vpack.c.b16 %v4548, %v4544
    %v4745 = vpack.c.b16 %v4549, %v4545
    %v4746 = vpack.c.b16 %v4550, %v4546
    %v4747 = vpack.c.b16 %v4551, %v4547
    %v4748 = vpack.c.b16 %v4556, %v4552
    %v4749 = vpack.c.b16 %v4557, %v4553
    %v4750 = vpack.c.b16 %v4558, %v4554
    %v4751 = vpack.c.b16 %v4559, %v4555
    %v4752 = vpack.c.b16 %v4564, %v4560
    %v4753 = vpack.c.b16 %v4565, %v4561
    %v4754 = vpack.c.b16 %v4566, %v4562
    %v4755 = vpack.c.b16 %v4567, %v4563
    %v4756 = vpack.c.b16 %v4572, %v4568
    %v4757 = vpack.c.b16 %v4573, %v4569
    %v4758 = vpack.c.b16 %v4574, %v4570
    %v4759 = vpack.c.b16 %v4575, %v4571
    %v4760 = vpack.c.b16 %v4580, %v4576
    %v4761 = vpack.c.b16 %v4581, %v4577
    %v4762 = vpack.c.b16 %v4582, %v4578
    %v4763 = vpack.c.b16 %v4583, %v4579
    %v4764 = vpack.c.b16 %v4588, %v4584
    %v4765 = vpack.c.b16 %v4589, %v4585
    %v4766 = vpack.c.b16 %v4590, %v4586
    %v4767 = vpack.c.b16 %v4591, %v4587
    %v4768 = vpack.c.b16 %v4596, %v4592
    %v4769 = vpack.c.b16 %v4597, %v4593
    %v4770 = vpack.c.b16 %v4598, %v4594
    %v4771 = vpack.c.b16 %v4599, %v4595
    %v4772 = vpack.c.b16 %v4604, %v4600
    %v4773 = vpack.c.b16 %v4605, %v4601
    %v4774 = vpack.c.b16 %v4606, %v4602
    %v4775 = vpack.c.b16 %v4607, %v4603
    %v4776 = vpack.c.b16 %v4612, %v4608
    %v4777 = vpack.c.b16 %v4613, %v4609
    %v4778 = vpack.c.b16 %v4614, %v4610
    %v4779 = vpack.c.b16 %v4615, %v4611
    %v4780 = vpack.c.b16 %v4620, %v4616
    %v4781 = vpack.c.b16 %v4621, %v4617
    %v4782 = vpack.c.b16 %v4622, %v4618
    %v4783 = vpack.c.b16 %v4623, %v4619
    %v4784 = vpack.c.b16 %v4628, %v4624
    %v4785 = vpack.c.b16 %v4629, %v4625
    %v4786 = vpack.c.b16 %v4630, %v4626
    %v4787 = vpack.c.b16 %v4631, %v4627
    %v4788 = vpack.c.b16 %v4636, %v4632
    %v4789 = vpack.c.b16 %v4637, %v4633
    %v4790 = vpack.c.b16 %v4638, %v4634
    %v4791 = vpack.c.b16 %v4639, %v4635
    %v4792 = vpack.c.b16 %v4644, %v4640
    %v4793 = vpack.c.b16 %v4645, %v4641
    %v4794 = vpack.c.b16 %v4646, %v4642
    %v4795 = vpack.c.b16 %v4647, %v4643
    %v4796 = vpack.c.b16 %v4652, %v4648
    %v4797 = vpack.c.b16 %v4653, %v4649
    %v4798 = vpack.c.b16 %v4654, %v4650
    %v4799 = vpack.c.b16 %v4655, %v4651
    %v4800 = vpack.c.b16 %v4660, %v4656
    %v4801 = vpack.c.b16 %v4661, %v4657
    %v4802 = vpack.c.b16 %v4662, %v4658
    %v4803 = vpack.c.b16 %v4663, %v4659
    %v4804 = vpack.c.b16 %v4668, %v4664
    %v4805 = vpack.c.b16 %v4669, %v4665
    %v4806 = vpack.c.b16 %v4670, %v4666
    %v4807 = vpack.c.b16 %v4671, %v4667
    %v4808 = vpack.c.b16 %v4676, %v4672
    %v4809 = vpack.c.b16 %v4677, %v4673
    %v4810 = vpack.c.b16 %v4678, %v4674
    %v4811 = vpack.c.b16 %v4679, %v4675
    %v4812 = vpack.c.b16 %v4684, %v4680
    %v4813 = vpack.c.b16 %v4685, %v4681
    %v4814 = vpack.c.b16 %v4686, %v4682
    %v4815 = vpack.c.b16 %v4687, %v4683
    %4944 = vmatpush.bf16.msra.mxu0 %v4716
    %4945 = vmatpush.bf16.msra.mxu0 %v4712
    %4946 = vmatpush.bf16.msra.mxu0 %v4708
    %4947 = vmatpush.bf16.msra.mxu0 %v4704
    %4948 = vmatpush.bf16.msra.mxu0 %v4700
    %4949 = vmatpush.bf16.msra.mxu0 %v4696
    %4950 = vmatpush.bf16.msra.mxu0 %v4692
    %4951 = vmatpush.bf16.msra.mxu0 %v4688
    %4952 = vmatmul.bf16.gmra.mxu0 %v4132
    %v4953 = vpop.f32.mrf.mxu0
    %v4954 = vadd.f32 %v4296, %v4953
    %v4955 = vpop.f32.mrf.mxu0
    %v4956 = vadd.f32 %v4296, %v4955
    %4957 = vmatmul.bf16.gmra.mxu0 %v4136
    %v4958 = vpop.f32.mrf.mxu0
    %v4959 = vadd.f32 %v4296, %v4958
    %v4960 = vpop.f32.mrf.mxu0
    %v4961 = vadd.f32 %v4296, %v4960
    %4962 = vmatmul.bf16.gmra.mxu0 %v4140
    %v4963 = vpop.f32.mrf.mxu0
    %v4964 = vadd.f32 %v4296, %v4963
    %v4965 = vpop.f32.mrf.mxu0
    %v4966 = vadd.f32 %v4296, %v4965
    %4967 = vmatmul.bf16.gmra.mxu0 %v4144
    %v4968 = vpop.f32.mrf.mxu0
    %v4969 = vadd.f32 %v4296, %v4968
    %v4970 = vpop.f32.mrf.mxu0
    %v4971 = vadd.f32 %v4296, %v4970
    %4972 = vmatmul.bf16.gmra.mxu0 %v4148
    %v4973 = vpop.f32.mrf.mxu0
    %v4974 = vadd.f32 %v4296, %v4973
    %v4975 = vpop.f32.mrf.mxu0
    %v4976 = vadd.f32 %v4296, %v4975
    %4977 = vmatmul.bf16.gmra.mxu0 %v4152
    %v4978 = vpop.f32.mrf.mxu0
    %v4979 = vadd.f32 %v4296, %v4978
    %v4980 = vpop.f32.mrf.mxu0
    %v4981 = vadd.f32 %v4296, %v4980
    %4982 = vmatmul.bf16.gmra.mxu0 %v4156
    %v4983 = vpop.f32.mrf.mxu0
    %v4984 = vadd.f32 %v4296, %v4983
    %v4985 = vpop.f32.mrf.mxu0
    %v4986 = vadd.f32 %v4296, %v4985
    %4987 = vmatmul.bf16.gmra.mxu0 %v4160
    %v4988 = vpop.f32.mrf.mxu0
    %v4989 = vadd.f32 %v4296, %v4988
    %v4990 = vpop.f32.mrf.mxu0
    %v4991 = vadd.f32 %v4296, %v4990
    %4992 = vdwg.mxu0
    %4993 = vmatpush.bf16.msra.mxu0 %v4748
    %4994 = vmatpush.bf16.msra.mxu0 %v4744
    %4995 = vmatpush.bf16.msra.mxu0 %v4740
    %4996 = vmatpush.bf16.msra.mxu0 %v4736
    %4997 = vmatpush.bf16.msra.mxu0 %v4732
    %4998 = vmatpush.bf16.msra.mxu0 %v4728
    %4999 = vmatpush.bf16.msra.mxu0 %v4724
    %5000 = vmatpush.bf16.msra.mxu0 %v4720
    %5001 = vmatmul.bf16.gmra.mxu0 %v4133
    %v5002 = vpop.f32.mrf.mxu0
    %v5003 = vadd.f32 %v4954, %v5002
    %v5004 = vpop.f32.mrf.mxu0
    %v5005 = vadd.f32 %v4956, %v5004
    %5006 = vmatmul.bf16.gmra.mxu0 %v4137
    %v5007 = vpop.f32.mrf.mxu0
    %v5008 = vadd.f32 %v4959, %v5007
    %v5009 = vpop.f32.mrf.mxu0
    %v5010 = vadd.f32 %v4961, %v5009
    %5011 = vmatmul.bf16.gmra.mxu0 %v4141
    %v5012 = vpop.f32.mrf.mxu0
    %v5013 = vadd.f32 %v4964, %v5012
    %v5014 = vpop.f32.mrf.mxu0
    %v5015 = vadd.f32 %v4966, %v5014
    %5016 = vmatmul.bf16.gmra.mxu0 %v4145
    %v5017 = vpop.f32.mrf.mxu0
    %v5018 = vadd.f32 %v4969, %v5017
    %v5019 = vpop.f32.mrf.mxu0
    %v5020 = vadd.f32 %v4971, %v5019
    %5021 = vmatmul.bf16.gmra.mxu0 %v4149
    %v5022 = vpop.f32.mrf.mxu0
    %v5023 = vadd.f32 %v4974, %v5022
    %v5024 = vpop.f32.mrf.mxu0
    %v5025 = vadd.f32 %v4976, %v5024
    %5026 = vmatmul.bf16.gmra.mxu0 %v4153
    %v5027 = vpop.f32.mrf.mxu0
    %v5028 = vadd.f32 %v4979, %v5027
    %v5029 = vpop.f32.mrf.mxu0
    %v5030 = vadd.f32 %v4981, %v5029
    %5031 = vmatmul.bf16.gmra.mxu0 %v4157
    %v5032 = vpop.f32.mrf.mxu0
    %v5033 = vadd.f32 %v4984, %v5032
    %v5034 = vpop.f32.mrf.mxu0
    %v5035 = vadd.f32 %v4986, %v5034
    %5036 = vmatmul.bf16.gmra.mxu0 %v4161
    %v5037 = vpop.f32.mrf.mxu0
    %v5038 = vadd.f32 %v4989, %v5037
    %v5039 = vpop.f32.mrf.mxu0
    %v5040 = vadd.f32 %v4991, %v5039
    %5041 = vdwg.mxu0
    %5042 = vmatpush.bf16.msra.mxu0 %v4780
    %5043 = vmatpush.bf16.msra.mxu0 %v4776
    %5044 = vmatpush.bf16.msra.mxu0 %v4772
    %5045 = vmatpush.bf16.msra.mxu0 %v4768
    %5046 = vmatpush.bf16.msra.mxu0 %v4764
    %5047 = vmatpush.bf16.msra.mxu0 %v4760
    %5048 = vmatpush.bf16.msra.mxu0 %v4756
    %5049 = vmatpush.bf16.msra.mxu0 %v4752
    %5050 = vmatmul.bf16.gmra.mxu0 %v4134
    %v5051 = vpop.f32.mrf.mxu0
    %v5052 = vadd.f32 %v5003, %v5051
    %v5053 = vpop.f32.mrf.mxu0
    %v5054 = vadd.f32 %v5005, %v5053
    %5055 = vmatmul.bf16.gmra.mxu0 %v4138
    %v5056 = vpop.f32.mrf.mxu0
    %v5057 = vadd.f32 %v5008, %v5056
    %v5058 = vpop.f32.mrf.mxu0
    %v5059 = vadd.f32 %v5010, %v5058
    %5060 = vmatmul.bf16.gmra.mxu0 %v4142
    %v5061 = vpop.f32.mrf.mxu0
    %v5062 = vadd.f32 %v5013, %v5061
    %v5063 = vpop.f32.mrf.mxu0
    %v5064 = vadd.f32 %v5015, %v5063
    %5065 = vmatmul.bf16.gmra.mxu0 %v4146
    %v5066 = vpop.f32.mrf.mxu0
    %v5067 = vadd.f32 %v5018, %v5066
    %v5068 = vpop.f32.mrf.mxu0
    %v5069 = vadd.f32 %v5020, %v5068
    %5070 = vmatmul.bf16.gmra.mxu0 %v4150
    %v5071 = vpop.f32.mrf.mxu0
    %v5072 = vadd.f32 %v5023, %v5071
    %v5073 = vpop.f32.mrf.mxu0
    %v5074 = vadd.f32 %v5025, %v5073
    %5075 = vmatmul.bf16.gmra.mxu0 %v4154
    %v5076 = vpop.f32.mrf.mxu0
    %v5077 = vadd.f32 %v5028, %v5076
    %v5078 = vpop.f32.mrf.mxu0
    %v5079 = vadd.f32 %v5030, %v5078
    %5080 = vmatmul.bf16.gmra.mxu0 %v4158
    %v5081 = vpop.f32.mrf.mxu0
    %v5082 = vadd.f32 %v5033, %v5081
    %v5083 = vpop.f32.mrf.mxu0
    %v5084 = vadd.f32 %v5035, %v5083
    %5085 = vmatmul.bf16.gmra.mxu0 %v4162
    %v5086 = vpop.f32.mrf.mxu0
    %v5087 = vadd.f32 %v5038, %v5086
    %v5088 = vpop.f32.mrf.mxu0
    %v5089 = vadd.f32 %v5040, %v5088
    %5090 = vdwg.mxu0
    %5091 = vmatpush.bf16.msra.mxu0 %v4812
    %5092 = vmatpush.bf16.msra.mxu0 %v4808
    %5093 = vmatpush.bf16.msra.mxu0 %v4804
    %5094 = vmatpush.bf16.msra.mxu0 %v4800
    %5095 = vmatpush.bf16.msra.mxu0 %v4796
    %5096 = vmatpush.bf16.msra.mxu0 %v4792
    %5097 = vmatpush.bf16.msra.mxu0 %v4788
    %5098 = vmatpush.bf16.msra.mxu0 %v4784
    %5099 = vmatmul.bf16.gmra.mxu0 %v4135
    %v5100 = vpop.f32.mrf.mxu0
    %v5101 = vadd.f32 %v5052, %v5100
    %v5102 = vpop.f32.mrf.mxu0
    %v5103 = vadd.f32 %v5054, %v5102
    %5104 = vmatmul.bf16.gmra.mxu0 %v4139
    %v5105 = vpop.f32.mrf.mxu0
    %v5106 = vadd.f32 %v5057, %v5105
    %v5107 = vpop.f32.mrf.mxu0
    %v5108 = vadd.f32 %v5059, %v5107
    %5109 = vmatmul.bf16.gmra.mxu0 %v4143
    %v5110 = vpop.f32.mrf.mxu0
    %v5111 = vadd.f32 %v5062, %v5110
    %v5112 = vpop.f32.mrf.mxu0
    %v5113 = vadd.f32 %v5064, %v5112
    %5114 = vmatmul.bf16.gmra.mxu0 %v4147
    %v5115 = vpop.f32.mrf.mxu0
    %v5116 = vadd.f32 %v5067, %v5115
    %v5117 = vpop.f32.mrf.mxu0
    %v5118 = vadd.f32 %v5069, %v5117
    %5119 = vmatmul.bf16.gmra.mxu0 %v4151
    %v5120 = vpop.f32.mrf.mxu0
    %v5121 = vadd.f32 %v5072, %v5120
    %v5122 = vpop.f32.mrf.mxu0
    %v5123 = vadd.f32 %v5074, %v5122
    %5124 = vmatmul.bf16.gmra.mxu0 %v4155
    %v5125 = vpop.f32.mrf.mxu0
    %v5126 = vadd.f32 %v5077, %v5125
    %v5127 = vpop.f32.mrf.mxu0
    %v5128 = vadd.f32 %v5079, %v5127
    %5129 = vmatmul.bf16.gmra.mxu0 %v4159
    %v5130 = vpop.f32.mrf.mxu0
    %v5131 = vadd.f32 %v5082, %v5130
    %v5132 = vpop.f32.mrf.mxu0
    %v5133 = vadd.f32 %v5084, %v5132
    %5134 = vmatmul.bf16.gmra.mxu0 %v4163
    %v5135 = vpop.f32.mrf.mxu0
    %v5136 = vadd.f32 %v5087, %v5135
    %v5137 = vpop.f32.mrf.mxu0
    %v5138 = vadd.f32 %v5089, %v5137
    %5139 = vdwg.mxu0
    %5140 = vmatpush.bf16.msra.mxu0 %v4717
    %5141 = vmatpush.bf16.msra.mxu0 %v4713
    %5142 = vmatpush.bf16.msra.mxu0 %v4709
    %5143 = vmatpush.bf16.msra.mxu0 %v4705
    %5144 = vmatpush.bf16.msra.mxu0 %v4701
    %5145 = vmatpush.bf16.msra.mxu0 %v4697
    %5146 = vmatpush.bf16.msra.mxu0 %v4693
    %5147 = vmatpush.bf16.msra.mxu0 %v4689
    %5148 = vmatmul.bf16.gmra.mxu0 %v4132
    %v5149 = vpop.f32.mrf.mxu0
    %v5150 = vadd.f32 %v4297, %v5149
    %v5151 = vpop.f32.mrf.mxu0
    %v5152 = vadd.f32 %v4297, %v5151
    %5153 = vmatmul.bf16.gmra.mxu0 %v4136
    %v5154 = vpop.f32.mrf.mxu0
    %v5155 = vadd.f32 %v4297, %v5154
    %v5156 = vpop.f32.mrf.mxu0
    %v5157 = vadd.f32 %v4297, %v5156
    %5158 = vmatmul.bf16.gmra.mxu0 %v4140
    %v5159 = vpop.f32.mrf.mxu0
    %v5160 = vadd.f32 %v4297, %v5159
    %v5161 = vpop.f32.mrf.mxu0
    %v5162 = vadd.f32 %v4297, %v5161
    %5163 = vmatmul.bf16.gmra.mxu0 %v4144
    %v5164 = vpop.f32.mrf.mxu0
    %v5165 = vadd.f32 %v4297, %v5164
    %v5166 = vpop.f32.mrf.mxu0
    %v5167 = vadd.f32 %v4297, %v5166
    %5168 = vmatmul.bf16.gmra.mxu0 %v4148
    %v5169 = vpop.f32.mrf.mxu0
    %v5170 = vadd.f32 %v4297, %v5169
    %v5171 = vpop.f32.mrf.mxu0
    %v5172 = vadd.f32 %v4297, %v5171
    %5173 = vmatmul.bf16.gmra.mxu0 %v4152
    %v5174 = vpop.f32.mrf.mxu0
    %v5175 = vadd.f32 %v4297, %v5174
    %v5176 = vpop.f32.mrf.mxu0
    %v5177 = vadd.f32 %v4297, %v5176
    %5178 = vmatmul.bf16.gmra.mxu0 %v4156
    %v5179 = vpop.f32.mrf.mxu0
    %v5180 = vadd.f32 %v4297, %v5179
    %v5181 = vpop.f32.mrf.mxu0
    %v5182 = vadd.f32 %v4297, %v5181
    %5183 = vmatmul.bf16.gmra.mxu0 %v4160
    %v5184 = vpop.f32.mrf.mxu0
    %v5185 = vadd.f32 %v4297, %v5184
    %v5186 = vpop.f32.mrf.mxu0
    %v5187 = vadd.f32 %v4297, %v5186
    %5188 = vdwg.mxu0
    %5189 = vmatpush.bf16.msra.mxu0 %v4749
    %5190 = vmatpush.bf16.msra.mxu0 %v4745
    %5191 = vmatpush.bf16.msra.mxu0 %v4741
    %5192 = vmatpush.bf16.msra.mxu0 %v4737
    %5193 = vmatpush.bf16.msra.mxu0 %v4733
    %5194 = vmatpush.bf16.msra.mxu0 %v4729
    %5195 = vmatpush.bf16.msra.mxu0 %v4725
    %5196 = vmatpush.bf16.msra.mxu0 %v4721
    %5197 = vmatmul.bf16.gmra.mxu0 %v4133
    %v5198 = vpop.f32.mrf.mxu0
    %v5199 = vadd.f32 %v5150, %v5198
    %v5200 = vpop.f32.mrf.mxu0
    %v5201 = vadd.f32 %v5152, %v5200
    %5202 = vmatmul.bf16.gmra.mxu0 %v4137
    %v5203 = vpop.f32.mrf.mxu0
    %v5204 = vadd.f32 %v5155, %v5203
    %v5205 = vpop.f32.mrf.mxu0
    %v5206 = vadd.f32 %v5157, %v5205
    %5207 = vmatmul.bf16.gmra.mxu0 %v4141
    %v5208 = vpop.f32.mrf.mxu0
    %v5209 = vadd.f32 %v5160, %v5208
    %v5210 = vpop.f32.mrf.mxu0
    %v5211 = vadd.f32 %v5162, %v5210
    %5212 = vmatmul.bf16.gmra.mxu0 %v4145
    %v5213 = vpop.f32.mrf.mxu0
    %v5214 = vadd.f32 %v5165, %v5213
    %v5215 = vpop.f32.mrf.mxu0
    %v5216 = vadd.f32 %v5167, %v5215
    %5217 = vmatmul.bf16.gmra.mxu0 %v4149
    %v5218 = vpop.f32.mrf.mxu0
    %v5219 = vadd.f32 %v5170, %v5218
    %v5220 = vpop.f32.mrf.mxu0
    %v5221 = vadd.f32 %v5172, %v5220
    %5222 = vmatmul.bf16.gmra.mxu0 %v4153
    %v5223 = vpop.f32.mrf.mxu0
    %v5224 = vadd.f32 %v5175, %v5223
    %v5225 = vpop.f32.mrf.mxu0
    %v5226 = vadd.f32 %v5177, %v5225
    %5227 = vmatmul.bf16.gmra.mxu0 %v4157
    %v5228 = vpop.f32.mrf.mxu0
    %v5229 = vadd.f32 %v5180, %v5228
    %v5230 = vpop.f32.mrf.mxu0
    %v5231 = vadd.f32 %v5182, %v5230
    %5232 = vmatmul.bf16.gmra.mxu0 %v4161
    %v5233 = vpop.f32.mrf.mxu0
    %v5234 = vadd.f32 %v5185, %v5233
    %v5235 = vpop.f32.mrf.mxu0
    %v5236 = vadd.f32 %v5187, %v5235
    %5237 = vdwg.mxu0
    %5238 = vmatpush.bf16.msra.mxu0 %v4781
    %5239 = vmatpush.bf16.msra.mxu0 %v4777
    %5240 = vmatpush.bf16.msra.mxu0 %v4773
    %5241 = vmatpush.bf16.msra.mxu0 %v4769
    %5242 = vmatpush.bf16.msra.mxu0 %v4765
    %5243 = vmatpush.bf16.msra.mxu0 %v4761
    %5244 = vmatpush.bf16.msra.mxu0 %v4757
    %5245 = vmatpush.bf16.msra.mxu0 %v4753
    %5246 = vmatmul.bf16.gmra.mxu0 %v4134
    %v5247 = vpop.f32.mrf.mxu0
    %v5248 = vadd.f32 %v5199, %v5247
    %v5249 = vpop.f32.mrf.mxu0
    %v5250 = vadd.f32 %v5201, %v5249
    %5251 = vmatmul.bf16.gmra.mxu0 %v4138
    %v5252 = vpop.f32.mrf.mxu0
    %v5253 = vadd.f32 %v5204, %v5252
    %v5254 = vpop.f32.mrf.mxu0
    %v5255 = vadd.f32 %v5206, %v5254
    %5256 = vmatmul.bf16.gmra.mxu0 %v4142
    %v5257 = vpop.f32.mrf.mxu0
    %v5258 = vadd.f32 %v5209, %v5257
    %v5259 = vpop.f32.mrf.mxu0
    %v5260 = vadd.f32 %v5211, %v5259
    %5261 = vmatmul.bf16.gmra.mxu0 %v4146
    %v5262 = vpop.f32.mrf.mxu0
    %v5263 = vadd.f32 %v5214, %v5262
    %v5264 = vpop.f32.mrf.mxu0
    %v5265 = vadd.f32 %v5216, %v5264
    %5266 = vmatmul.bf16.gmra.mxu0 %v4150
    %v5267 = vpop.f32.mrf.mxu0
    %v5268 = vadd.f32 %v5219, %v5267
    %v5269 = vpop.f32.mrf.mxu0
    %v5270 = vadd.f32 %v5221, %v5269
    %5271 = vmatmul.bf16.gmra.mxu0 %v4154
    %v5272 = vpop.f32.mrf.mxu0
    %v5273 = vadd.f32 %v5224, %v5272
    %v5274 = vpop.f32.mrf.mxu0
    %v5275 = vadd.f32 %v5226, %v5274
    %5276 = vmatmul.bf16.gmra.mxu0 %v4158
    %v5277 = vpop.f32.mrf.mxu0
    %v5278 = vadd.f32 %v5229, %v5277
    %v5279 = vpop.f32.mrf.mxu0
    %v5280 = vadd.f32 %v5231, %v5279
    %5281 = vmatmul.bf16.gmra.mxu0 %v4162
    %v5282 = vpop.f32.mrf.mxu0
    %v5283 = vadd.f32 %v5234, %v5282
    %v5284 = vpop.f32.mrf.mxu0
    %v5285 = vadd.f32 %v5236, %v5284
    %5286 = vdwg.mxu0
    %5287 = vmatpush.bf16.msra.mxu0 %v4813
    %5288 = vmatpush.bf16.msra.mxu0 %v4809
    %5289 = vmatpush.bf16.msra.mxu0 %v4805
    %5290 = vmatpush.bf16.msra.mxu0 %v4801
    %5291 = vmatpush.bf16.msra.mxu0 %v4797
    %5292 = vmatpush.bf16.msra.mxu0 %v4793
    %5293 = vmatpush.bf16.msra.mxu0 %v4789
    %5294 = vmatpush.bf16.msra.mxu0 %v4785
    %5295 = vmatmul.bf16.gmra.mxu0 %v4135
    %v5296 = vpop.f32.mrf.mxu0
    %v5297 = vadd.f32 %v5248, %v5296
    %v5298 = vpop.f32.mrf.mxu0
    %v5299 = vadd.f32 %v5250, %v5298
    %5300 = vmatmul.bf16.gmra.mxu0 %v4139
    %v5301 = vpop.f32.mrf.mxu0
    %v5302 = vadd.f32 %v5253, %v5301
    %v5303 = vpop.f32.mrf.mxu0
    %v5304 = vadd.f32 %v5255, %v5303
    %5305 = vmatmul.bf16.gmra.mxu0 %v4143
    %v5306 = vpop.f32.mrf.mxu0
    %v5307 = vadd.f32 %v5258, %v5306
    %v5308 = vpop.f32.mrf.mxu0
    %v5309 = vadd.f32 %v5260, %v5308
    %5310 = vmatmul.bf16.gmra.mxu0 %v4147
    %v5311 = vpop.f32.mrf.mxu0
    %v5312 = vadd.f32 %v5263, %v5311
    %v5313 = vpop.f32.mrf.mxu0
    %v5314 = vadd.f32 %v5265, %v5313
    %5315 = vmatmul.bf16.gmra.mxu0 %v4151
    %v5316 = vpop.f32.mrf.mxu0
    %v5317 = vadd.f32 %v5268, %v5316
    %v5318 = vpop.f32.mrf.mxu0
    %v5319 = vadd.f32 %v5270, %v5318
    %5320 = vmatmul.bf16.gmra.mxu0 %v4155
    %v5321 = vpop.f32.mrf.mxu0
    %v5322 = vadd.f32 %v5273, %v5321
    %v5323 = vpop.f32.mrf.mxu0
    %v5324 = vadd.f32 %v5275, %v5323
    %5325 = vmatmul.bf16.gmra.mxu0 %v4159
    %v5326 = vpop.f32.mrf.mxu0
    %v5327 = vadd.f32 %v5278, %v5326
    %v5328 = vpop.f32.mrf.mxu0
    %v5329 = vadd.f32 %v5280, %v5328
    %5330 = vmatmul.bf16.gmra.mxu0 %v4163
    %v5331 = vpop.f32.mrf.mxu0
    %v5332 = vadd.f32 %v5283, %v5331
    %v5333 = vpop.f32.mrf.mxu0
    %v5334 = vadd.f32 %v5285, %v5333
    %5335 = vdwg.mxu0
    %5336 = vmatpush.bf16.msra.mxu0 %v4718
    %5337 = vmatpush.bf16.msra.mxu0 %v4714
    %5338 = vmatpush.bf16.msra.mxu0 %v4710
    %5339 = vmatpush.bf16.msra.mxu0 %v4706
    %5340 = vmatpush.bf16.msra.mxu0 %v4702
    %5341 = vmatpush.bf16.msra.mxu0 %v4698
    %5342 = vmatpush.bf16.msra.mxu0 %v4694
    %5343 = vmatpush.bf16.msra.mxu0 %v4690
    %5344 = vmatmul.bf16.gmra.mxu0 %v4132
    %v5345 = vpop.f32.mrf.mxu0
    %v5346 = vadd.f32 %v4298, %v5345
    %v5347 = vpop.f32.mrf.mxu0
    %v5348 = vadd.f32 %v4298, %v5347
    %5349 = vmatmul.bf16.gmra.mxu0 %v4136
    %v5350 = vpop.f32.mrf.mxu0
    %v5351 = vadd.f32 %v4298, %v5350
    %v5352 = vpop.f32.mrf.mxu0
    %v5353 = vadd.f32 %v4298, %v5352
    %5354 = vmatmul.bf16.gmra.mxu0 %v4140
    %v5355 = vpop.f32.mrf.mxu0
    %v5356 = vadd.f32 %v4298, %v5355
    %v5357 = vpop.f32.mrf.mxu0
    %v5358 = vadd.f32 %v4298, %v5357
    %5359 = vmatmul.bf16.gmra.mxu0 %v4144
    %v5360 = vpop.f32.mrf.mxu0
    %v5361 = vadd.f32 %v4298, %v5360
    %v5362 = vpop.f32.mrf.mxu0
    %v5363 = vadd.f32 %v4298, %v5362
    %5364 = vmatmul.bf16.gmra.mxu0 %v4148
    %v5365 = vpop.f32.mrf.mxu0
    %v5366 = vadd.f32 %v4298, %v5365
    %v5367 = vpop.f32.mrf.mxu0
    %v5368 = vadd.f32 %v4298, %v5367
    %5369 = vmatmul.bf16.gmra.mxu0 %v4152
    %v5370 = vpop.f32.mrf.mxu0
    %v5371 = vadd.f32 %v4298, %v5370
    %v5372 = vpop.f32.mrf.mxu0
    %v5373 = vadd.f32 %v4298, %v5372
    %5374 = vmatmul.bf16.gmra.mxu0 %v4156
    %v5375 = vpop.f32.mrf.mxu0
    %v5376 = vadd.f32 %v4298, %v5375
    %v5377 = vpop.f32.mrf.mxu0
    %v5378 = vadd.f32 %v4298, %v5377
    %5379 = vmatmul.bf16.gmra.mxu0 %v4160
    %v5380 = vpop.f32.mrf.mxu0
    %v5381 = vadd.f32 %v4298, %v5380
    %v5382 = vpop.f32.mrf.mxu0
    %v5383 = vadd.f32 %v4298, %v5382
    %5384 = vdwg.mxu0
    %5385 = vmatpush.bf16.msra.mxu0 %v4750
    %5386 = vmatpush.bf16.msra.mxu0 %v4746
    %5387 = vmatpush.bf16.msra.mxu0 %v4742
    %5388 = vmatpush.bf16.msra.mxu0 %v4738
    %5389 = vmatpush.bf16.msra.mxu0 %v4734
    %5390 = vmatpush.bf16.msra.mxu0 %v4730
    %5391 = vmatpush.bf16.msra.mxu0 %v4726
    %5392 = vmatpush.bf16.msra.mxu0 %v4722
    %5393 = vmatmul.bf16.gmra.mxu0 %v4133
    %v5394 = vpop.f32.mrf.mxu0
    %v5395 = vadd.f32 %v5346, %v5394
    %v5396 = vpop.f32.mrf.mxu0
    %v5397 = vadd.f32 %v5348, %v5396
    %5398 = vmatmul.bf16.gmra.mxu0 %v4137
    %v5399 = vpop.f32.mrf.mxu0
    %v5400 = vadd.f32 %v5351, %v5399
    %v5401 = vpop.f32.mrf.mxu0
    %v5402 = vadd.f32 %v5353, %v5401
    %5403 = vmatmul.bf16.gmra.mxu0 %v4141
    %v5404 = vpop.f32.mrf.mxu0
    %v5405 = vadd.f32 %v5356, %v5404
    %v5406 = vpop.f32.mrf.mxu0
    %v5407 = vadd.f32 %v5358, %v5406
    %5408 = vmatmul.bf16.gmra.mxu0 %v4145
    %v5409 = vpop.f32.mrf.mxu0
    %v5410 = vadd.f32 %v5361, %v5409
    %v5411 = vpop.f32.mrf.mxu0
    %v5412 = vadd.f32 %v5363, %v5411
    %5413 = vmatmul.bf16.gmra.mxu0 %v4149
    %v5414 = vpop.f32.mrf.mxu0
    %v5415 = vadd.f32 %v5366, %v5414
    %v5416 = vpop.f32.mrf.mxu0
    %v5417 = vadd.f32 %v5368, %v5416
    %5418 = vmatmul.bf16.gmra.mxu0 %v4153
    %v5419 = vpop.f32.mrf.mxu0
    %v5420 = vadd.f32 %v5371, %v5419
    %v5421 = vpop.f32.mrf.mxu0
    %v5422 = vadd.f32 %v5373, %v5421
    %5423 = vmatmul.bf16.gmra.mxu0 %v4157
    %v5424 = vpop.f32.mrf.mxu0
    %v5425 = vadd.f32 %v5376, %v5424
    %v5426 = vpop.f32.mrf.mxu0
    %v5427 = vadd.f32 %v5378, %v5426
    %5428 = vmatmul.bf16.gmra.mxu0 %v4161
    %v5429 = vpop.f32.mrf.mxu0
    %v5430 = vadd.f32 %v5381, %v5429
    %v5431 = vpop.f32.mrf.mxu0
    %v5432 = vadd.f32 %v5383, %v5431
    %5433 = vdwg.mxu0
    %5434 = vmatpush.bf16.msra.mxu0 %v4782
    %5435 = vmatpush.bf16.msra.mxu0 %v4778
    %5436 = vmatpush.bf16.msra.mxu0 %v4774
    %5437 = vmatpush.bf16.msra.mxu0 %v4770
    %5438 = vmatpush.bf16.msra.mxu0 %v4766
    %5439 = vmatpush.bf16.msra.mxu0 %v4762
    %5440 = vmatpush.bf16.msra.mxu0 %v4758
    %5441 = vmatpush.bf16.msra.mxu0 %v4754
    %5442 = vmatmul.bf16.gmra.mxu0 %v4134
    %v5443 = vpop.f32.mrf.mxu0
    %v5444 = vadd.f32 %v5395, %v5443
    %v5445 = vpop.f32.mrf.mxu0
    %v5446 = vadd.f32 %v5397, %v5445
    %5447 = vmatmul.bf16.gmra.mxu0 %v4138
    %v5448 = vpop.f32.mrf.mxu0
    %v5449 = vadd.f32 %v5400, %v5448
    %v5450 = vpop.f32.mrf.mxu0
    %v5451 = vadd.f32 %v5402, %v5450
    %5452 = vmatmul.bf16.gmra.mxu0 %v4142
    %v5453 = vpop.f32.mrf.mxu0
    %v5454 = vadd.f32 %v5405, %v5453
    %v5455 = vpop.f32.mrf.mxu0
    %v5456 = vadd.f32 %v5407, %v5455
    %5457 = vmatmul.bf16.gmra.mxu0 %v4146
    %v5458 = vpop.f32.mrf.mxu0
    %v5459 = vadd.f32 %v5410, %v5458
    %v5460 = vpop.f32.mrf.mxu0
    %v5461 = vadd.f32 %v5412, %v5460
    %5462 = vmatmul.bf16.gmra.mxu0 %v4150
    %v5463 = vpop.f32.mrf.mxu0
    %v5464 = vadd.f32 %v5415, %v5463
    %v5465 = vpop.f32.mrf.mxu0
    %v5466 = vadd.f32 %v5417, %v5465
    %5467 = vmatmul.bf16.gmra.mxu0 %v4154
    %v5468 = vpop.f32.mrf.mxu0
    %v5469 = vadd.f32 %v5420, %v5468
    %v5470 = vpop.f32.mrf.mxu0
    %v5471 = vadd.f32 %v5422, %v5470
    %5472 = vmatmul.bf16.gmra.mxu0 %v4158
    %v5473 = vpop.f32.mrf.mxu0
    %v5474 = vadd.f32 %v5425, %v5473
    %v5475 = vpop.f32.mrf.mxu0
    %v5476 = vadd.f32 %v5427, %v5475
    %5477 = vmatmul.bf16.gmra.mxu0 %v4162
    %v5478 = vpop.f32.mrf.mxu0
    %v5479 = vadd.f32 %v5430, %v5478
    %v5480 = vpop.f32.mrf.mxu0
    %v5481 = vadd.f32 %v5432, %v5480
    %5482 = vdwg.mxu0
    %5483 = vmatpush.bf16.msra.mxu0 %v4814
    %5484 = vmatpush.bf16.msra.mxu0 %v4810
    %5485 = vmatpush.bf16.msra.mxu0 %v4806
    %5486 = vmatpush.bf16.msra.mxu0 %v4802
    %5487 = vmatpush.bf16.msra.mxu0 %v4798
    %5488 = vmatpush.bf16.msra.mxu0 %v4794
    %5489 = vmatpush.bf16.msra.mxu0 %v4790
    %5490 = vmatpush.bf16.msra.mxu0 %v4786
    %5491 = vmatmul.bf16.gmra.mxu0 %v4135
    %v5492 = vpop.f32.mrf.mxu0
    %v5493 = vadd.f32 %v5444, %v5492
    %v5494 = vpop.f32.mrf.mxu0
    %v5495 = vadd.f32 %v5446, %v5494
    %5496 = vmatmul.bf16.gmra.mxu0 %v4139
    %v5497 = vpop.f32.mrf.mxu0
    %v5498 = vadd.f32 %v5449, %v5497
    %v5499 = vpop.f32.mrf.mxu0
    %v5500 = vadd.f32 %v5451, %v5499
    %5501 = vmatmul.bf16.gmra.mxu0 %v4143
    %v5502 = vpop.f32.mrf.mxu0
    %v5503 = vadd.f32 %v5454, %v5502
    %v5504 = vpop.f32.mrf.mxu0
    %v5505 = vadd.f32 %v5456, %v5504
    %5506 = vmatmul.bf16.gmra.mxu0 %v4147
    %v5507 = vpop.f32.mrf.mxu0
    %v5508 = vadd.f32 %v5459, %v5507
    %v5509 = vpop.f32.mrf.mxu0
    %v5510 = vadd.f32 %v5461, %v5509
    %5511 = vmatmul.bf16.gmra.mxu0 %v4151
    %v5512 = vpop.f32.mrf.mxu0
    %v5513 = vadd.f32 %v5464, %v5512
    %v5514 = vpop.f32.mrf.mxu0
    %v5515 = vadd.f32 %v5466, %v5514
    %5516 = vmatmul.bf16.gmra.mxu0 %v4155
    %v5517 = vpop.f32.mrf.mxu0
    %v5518 = vadd.f32 %v5469, %v5517
    %v5519 = vpop.f32.mrf.mxu0
    %v5520 = vadd.f32 %v5471, %v5519
    %5521 = vmatmul.bf16.gmra.mxu0 %v4159
    %v5522 = vpop.f32.mrf.mxu0
    %v5523 = vadd.f32 %v5474, %v5522
    %v5524 = vpop.f32.mrf.mxu0
    %v5525 = vadd.f32 %v5476, %v5524
    %5526 = vmatmul.bf16.gmra.mxu0 %v4163
    %v5527 = vpop.f32.mrf.mxu0
    %v5528 = vadd.f32 %v5479, %v5527
    %v5529 = vpop.f32.mrf.mxu0
    %v5530 = vadd.f32 %v5481, %v5529
    %5531 = vdwg.mxu0
    %5532 = vmatpush.bf16.msra.mxu0 %v4719
    %5533 = vmatpush.bf16.msra.mxu0 %v4715
    %5534 = vmatpush.bf16.msra.mxu0 %v4711
    %5535 = vmatpush.bf16.msra.mxu0 %v4707
    %5536 = vmatpush.bf16.msra.mxu0 %v4703
    %5537 = vmatpush.bf16.msra.mxu0 %v4699
    %5538 = vmatpush.bf16.msra.mxu0 %v4695
    %5539 = vmatpush.bf16.msra.mxu0 %v4691
    %5540 = vmatmul.bf16.gmra.mxu0 %v4132
    %v5541 = vpop.f32.mrf.mxu0
    %v5542 = vadd.f32 %v4299, %v5541
    %v5543 = vpop.f32.mrf.mxu0
    %v5544 = vadd.f32 %v4299, %v5543
    %5545 = vmatmul.bf16.gmra.mxu0 %v4136
    %v5546 = vpop.f32.mrf.mxu0
    %v5547 = vadd.f32 %v4299, %v5546
    %v5548 = vpop.f32.mrf.mxu0
    %v5549 = vadd.f32 %v4299, %v5548
    %5550 = vmatmul.bf16.gmra.mxu0 %v4140
    %v5551 = vpop.f32.mrf.mxu0
    %v5552 = vadd.f32 %v4299, %v5551
    %v5553 = vpop.f32.mrf.mxu0
    %v5554 = vadd.f32 %v4299, %v5553
    %5555 = vmatmul.bf16.gmra.mxu0 %v4144
    %v5556 = vpop.f32.mrf.mxu0
    %v5557 = vadd.f32 %v4299, %v5556
    %v5558 = vpop.f32.mrf.mxu0
    %v5559 = vadd.f32 %v4299, %v5558
    %5560 = vmatmul.bf16.gmra.mxu0 %v4148
    %v5561 = vpop.f32.mrf.mxu0
    %v5562 = vadd.f32 %v4299, %v5561
    %v5563 = vpop.f32.mrf.mxu0
    %v5564 = vadd.f32 %v4299, %v5563
    %5565 = vmatmul.bf16.gmra.mxu0 %v4152
    %v5566 = vpop.f32.mrf.mxu0
    %v5567 = vadd.f32 %v4299, %v5566
    %v5568 = vpop.f32.mrf.mxu0
    %v5569 = vadd.f32 %v4299, %v5568
    %5570 = vmatmul.bf16.gmra.mxu0 %v4156
    %v5571 = vpop.f32.mrf.mxu0
    %v5572 = vadd.f32 %v4299, %v5571
    %v5573 = vpop.f32.mrf.mxu0
    %v5574 = vadd.f32 %v4299, %v5573
    %5575 = vmatmul.bf16.gmra.mxu0 %v4160
    %v5576 = vpop.f32.mrf.mxu0
    %v5577 = vadd.f32 %v4299, %v5576
    %v5578 = vpop.f32.mrf.mxu0
    %v5579 = vadd.f32 %v4299, %v5578
    %5580 = vdwg.mxu0
    %5581 = vmatpush.bf16.msra.mxu0 %v4751
    %5582 = vmatpush.bf16.msra.mxu0 %v4747
    %5583 = vmatpush.bf16.msra.mxu0 %v4743
    %5584 = vmatpush.bf16.msra.mxu0 %v4739
    %5585 = vmatpush.bf16.msra.mxu0 %v4735
    %5586 = vmatpush.bf16.msra.mxu0 %v4731
    %5587 = vmatpush.bf16.msra.mxu0 %v4727
    %5588 = vmatpush.bf16.msra.mxu0 %v4723
    %5589 = vmatmul.bf16.gmra.mxu0 %v4133
    %v5590 = vpop.f32.mrf.mxu0
    %v5591 = vadd.f32 %v5542, %v5590
    %v5592 = vpop.f32.mrf.mxu0
    %v5593 = vadd.f32 %v5544, %v5592
    %5594 = vmatmul.bf16.gmra.mxu0 %v4137
    %v5595 = vpop.f32.mrf.mxu0
    %v5596 = vadd.f32 %v5547, %v5595
    %v5597 = vpop.f32.mrf.mxu0
    %v5598 = vadd.f32 %v5549, %v5597
    %5599 = vmatmul.bf16.gmra.mxu0 %v4141
    %v5600 = vpop.f32.mrf.mxu0
    %v5601 = vadd.f32 %v5552, %v5600
    %v5602 = vpop.f32.mrf.mxu0
    %v5603 = vadd.f32 %v5554, %v5602
    %5604 = vmatmul.bf16.gmra.mxu0 %v4145
    %v5605 = vpop.f32.mrf.mxu0
    %v5606 = vadd.f32 %v5557, %v5605
    %v5607 = vpop.f32.mrf.mxu0
    %v5608 = vadd.f32 %v5559, %v5607
    %5609 = vmatmul.bf16.gmra.mxu0 %v4149
    %v5610 = vpop.f32.mrf.mxu0
    %v5611 = vadd.f32 %v5562, %v5610
    %v5612 = vpop.f32.mrf.mxu0
    %v5613 = vadd.f32 %v5564, %v5612
    %5614 = vmatmul.bf16.gmra.mxu0 %v4153
    %v5615 = vpop.f32.mrf.mxu0
    %v5616 = vadd.f32 %v5567, %v5615
    %v5617 = vpop.f32.mrf.mxu0
    %v5618 = vadd.f32 %v5569, %v5617
    %5619 = vmatmul.bf16.gmra.mxu0 %v4157
    %v5620 = vpop.f32.mrf.mxu0
    %v5621 = vadd.f32 %v5572, %v5620
    %v5622 = vpop.f32.mrf.mxu0
    %v5623 = vadd.f32 %v5574, %v5622
    %5624 = vmatmul.bf16.gmra.mxu0 %v4161
    %v5625 = vpop.f32.mrf.mxu0
    %v5626 = vadd.f32 %v5577, %v5625
    %v5627 = vpop.f32.mrf.mxu0
    %v5628 = vadd.f32 %v5579, %v5627
    %5629 = vdwg.mxu0
    %5630 = vmatpush.bf16.msra.mxu0 %v4783
    %5631 = vmatpush.bf16.msra.mxu0 %v4779
    %5632 = vmatpush.bf16.msra.mxu0 %v4775
    %5633 = vmatpush.bf16.msra.mxu0 %v4771
    %5634 = vmatpush.bf16.msra.mxu0 %v4767
    %5635 = vmatpush.bf16.msra.mxu0 %v4763
    %5636 = vmatpush.bf16.msra.mxu0 %v4759
    %5637 = vmatpush.bf16.msra.mxu0 %v4755
    %5638 = vmatmul.bf16.gmra.mxu0 %v4134
    %v5639 = vpop.f32.mrf.mxu0
    %v5640 = vadd.f32 %v5591, %v5639
    %v5641 = vpop.f32.mrf.mxu0
    %v5642 = vadd.f32 %v5593, %v5641
    %5643 = vmatmul.bf16.gmra.mxu0 %v4138
    %v5644 = vpop.f32.mrf.mxu0
    %v5645 = vadd.f32 %v5596, %v5644
    %v5646 = vpop.f32.mrf.mxu0
    %v5647 = vadd.f32 %v5598, %v5646
    %5648 = vmatmul.bf16.gmra.mxu0 %v4142
    %v5649 = vpop.f32.mrf.mxu0
    %v5650 = vadd.f32 %v5601, %v5649
    %v5651 = vpop.f32.mrf.mxu0
    %v5652 = vadd.f32 %v5603, %v5651
    %5653 = vmatmul.bf16.gmra.mxu0 %v4146
    %v5654 = vpop.f32.mrf.mxu0
    %v5655 = vadd.f32 %v5606, %v5654
    %v5656 = vpop.f32.mrf.mxu0
    %v5657 = vadd.f32 %v5608, %v5656
    %5658 = vmatmul.bf16.gmra.mxu0 %v4150
    %v5659 = vpop.f32.mrf.mxu0
    %v5660 = vadd.f32 %v5611, %v5659
    %v5661 = vpop.f32.mrf.mxu0
    %v5662 = vadd.f32 %v5613, %v5661
    %5663 = vmatmul.bf16.gmra.mxu0 %v4154
    %v5664 = vpop.f32.mrf.mxu0
    %v5665 = vadd.f32 %v5616, %v5664
    %v5666 = vpop.f32.mrf.mxu0
    %v5667 = vadd.f32 %v5618, %v5666
    %5668 = vmatmul.bf16.gmra.mxu0 %v4158
    %v5669 = vpop.f32.mrf.mxu0
    %v5670 = vadd.f32 %v5621, %v5669
    %v5671 = vpop.f32.mrf.mxu0
    %v5672 = vadd.f32 %v5623, %v5671
    %5673 = vmatmul.bf16.gmra.mxu0 %v4162
    %v5674 = vpop.f32.mrf.mxu0
    %v5675 = vadd.f32 %v5626, %v5674
    %v5676 = vpop.f32.mrf.mxu0
    %v5677 = vadd.f32 %v5628, %v5676
    %5678 = vdwg.mxu0
    %5679 = vmatpush.bf16.msra.mxu0 %v4815
    %5680 = vmatpush.bf16.msra.mxu0 %v4811
    %5681 = vmatpush.bf16.msra.mxu0 %v4807
    %5682 = vmatpush.bf16.msra.mxu0 %v4803
    %5683 = vmatpush.bf16.msra.mxu0 %v4799
    %5684 = vmatpush.bf16.msra.mxu0 %v4795
    %5685 = vmatpush.bf16.msra.mxu0 %v4791
    %5686 = vmatpush.bf16.msra.mxu0 %v4787
    %5687 = vmatmul.bf16.gmra.mxu0 %v4135
    %v5688 = vpop.f32.mrf.mxu0
    %v5689 = vadd.f32 %v5640, %v5688
    %v5690 = vpop.f32.mrf.mxu0
    %v5691 = vadd.f32 %v5642, %v5690
    %5692 = vmatmul.bf16.gmra.mxu0 %v4139
    %v5693 = vpop.f32.mrf.mxu0
    %v5694 = vadd.f32 %v5645, %v5693
    %v5695 = vpop.f32.mrf.mxu0
    %v5696 = vadd.f32 %v5647, %v5695
    %5697 = vmatmul.bf16.gmra.mxu0 %v4143
    %v5698 = vpop.f32.mrf.mxu0
    %v5699 = vadd.f32 %v5650, %v5698
    %v5700 = vpop.f32.mrf.mxu0
    %v5701 = vadd.f32 %v5652, %v5700
    %5702 = vmatmul.bf16.gmra.mxu0 %v4147
    %v5703 = vpop.f32.mrf.mxu0
    %v5704 = vadd.f32 %v5655, %v5703
    %v5705 = vpop.f32.mrf.mxu0
    %v5706 = vadd.f32 %v5657, %v5705
    %5707 = vmatmul.bf16.gmra.mxu0 %v4151
    %v5708 = vpop.f32.mrf.mxu0
    %v5709 = vadd.f32 %v5660, %v5708
    %v5710 = vpop.f32.mrf.mxu0
    %v5711 = vadd.f32 %v5662, %v5710
    %5712 = vmatmul.bf16.gmra.mxu0 %v4155
    %v5713 = vpop.f32.mrf.mxu0
    %v5714 = vadd.f32 %v5665, %v5713
    %v5715 = vpop.f32.mrf.mxu0
    %v5716 = vadd.f32 %v5667, %v5715
    %5717 = vmatmul.bf16.gmra.mxu0 %v4159
    %v5718 = vpop.f32.mrf.mxu0
    %v5719 = vadd.f32 %v5670, %v5718
    %v5720 = vpop.f32.mrf.mxu0
    %v5721 = vadd.f32 %v5672, %v5720
    %5722 = vmatmul.bf16.gmra.mxu0 %v4163
    %v5723 = vpop.f32.mrf.mxu0
    %v5724 = vadd.f32 %v5675, %v5723
    %v5725 = vpop.f32.mrf.mxu0
    %v5726 = vadd.f32 %v5677, %v5725
    %5727 = vdwg.mxu0
    %v5728 = vtanh.pop %v5101
    %v5729 = vtanh.pop %v5297
    %v5730 = vtanh.pop %v5493
    %v5731 = vtanh.pop %v5689
    %v5732 = vtanh.pop %v5103
    %v5733 = vtanh.pop %v5299
    %v5734 = vtanh.pop %v5495
    %v5735 = vtanh.pop %v5691
    %v5736 = vtanh.pop %v5106
    %v5737 = vtanh.pop %v5302
    %v5738 = vtanh.pop %v5498
    %v5739 = vtanh.pop %v5694
    %v5740 = vtanh.pop %v5108
    %v5741 = vtanh.pop %v5304
    %v5742 = vtanh.pop %v5500
    %v5743 = vtanh.pop %v5696
    %v5744 = vtanh.pop %v5111
    %v5745 = vtanh.pop %v5307
    %v5746 = vtanh.pop %v5503
    %v5747 = vtanh.pop %v5699
    %v5748 = vtanh.pop %v5113
    %v5749 = vtanh.pop %v5309
    %v5750 = vtanh.pop %v5505
    %v5751 = vtanh.pop %v5701
    %v5752 = vtanh.pop %v5116
    %v5753 = vtanh.pop %v5312
    %v5754 = vtanh.pop %v5508
    %v5755 = vtanh.pop %v5704
    %v5756 = vtanh.pop %v5118
    %v5757 = vtanh.pop %v5314
    %v5758 = vtanh.pop %v5510
    %v5759 = vtanh.pop %v5706
    %v5760 = vtanh.pop %v5121
    %v5761 = vtanh.pop %v5317
    %v5762 = vtanh.pop %v5513
    %v5763 = vtanh.pop %v5709
    %v5764 = vtanh.pop %v5123
    %v5765 = vtanh.pop %v5319
    %v5766 = vtanh.pop %v5515
    %v5767 = vtanh.pop %v5711
    %v5768 = vtanh.pop %v5126
    %v5769 = vtanh.pop %v5322
    %v5770 = vtanh.pop %v5518
    %v5771 = vtanh.pop %v5714
    %v5772 = vtanh.pop %v5128
    %v5773 = vtanh.pop %v5324
    %v5774 = vtanh.pop %v5520
    %v5775 = vtanh.pop %v5716
    %v5776 = vtanh.pop %v5131
    %v5777 = vtanh.pop %v5327
    %v5778 = vtanh.pop %v5523
    %v5779 = vtanh.pop %v5719
    %v5780 = vtanh.pop %v5133
    %v5781 = vtanh.pop %v5329
    %v5782 = vtanh.pop %v5525
    %v5783 = vtanh.pop %v5721
    %v5784 = vtanh.pop %v5136
    %v5785 = vtanh.pop %v5332
    %v5786 = vtanh.pop %v5528
    %v5787 = vtanh.pop %v5724
    %v5788 = vtanh.pop %v5138
    %v5789 = vtanh.pop %v5334
    %v5790 = vtanh.pop %v5530
    %v5791 = vtanh.pop %v5726
    %v5792 = vld [vmem:[#allocation10] sm:$0xf]
    %v5794 = vperm.slane %v5792, 0
    %v5795 = vperm.slane %v5792, 1
    %v5796 = vperm.slane %v5792, 2
    %v5797 = vperm.slane %v5792, 3
    %v5802 = vmul.f32 %v5728, %v5794
    %v5803 = vmul.f32 %v5729, %v5795
    %v5804 = vmul.f32 %v5730, %v5796
    %v5805 = vmul.f32 %v5731, %v5797
    %v5806 = vmul.f32 %v5732, %v5794
    %v5807 = vmul.f32 %v5733, %v5795
    %v5808 = vmul.f32 %v5734, %v5796
    %v5809 = vmul.f32 %v5735, %v5797
    %v5810 = vmul.f32 %v5736, %v5794
    %v5811 = vmul.f32 %v5737, %v5795
    %v5812 = vmul.f32 %v5738, %v5796
    %v5813 = vmul.f32 %v5739, %v5797
    %v5814 = vmul.f32 %v5740, %v5794
    %v5815 = vmul.f32 %v5741, %v5795
    %v5816 = vmul.f32 %v5742, %v5796
    %v5817 = vmul.f32 %v5743, %v5797
    %v5818 = vmul.f32 %v5744, %v5794
    %v5819 = vmul.f32 %v5745, %v5795
    %v5820 = vmul.f32 %v5746, %v5796
    %v5821 = vmul.f32 %v5747, %v5797
    %v5822 = vmul.f32 %v5748, %v5794
    %v5823 = vmul.f32 %v5749, %v5795
    %v5824 = vmul.f32 %v5750, %v5796
    %v5825 = vmul.f32 %v5751, %v5797
    %v5826 = vmul.f32 %v5752, %v5794
    %v5827 = vmul.f32 %v5753, %v5795
    %v5828 = vmul.f32 %v5754, %v5796
    %v5829 = vmul.f32 %v5755, %v5797
    %v5830 = vmul.f32 %v5756, %v5794
    %v5831 = vmul.f32 %v5757, %v5795
    %v5832 = vmul.f32 %v5758, %v5796
    %v5833 = vmul.f32 %v5759, %v5797
    %v5834 = vmul.f32 %v5760, %v5794
    %v5835 = vmul.f32 %v5761, %v5795
    %v5836 = vmul.f32 %v5762, %v5796
    %v5837 = vmul.f32 %v5763, %v5797
    %v5838 = vmul.f32 %v5764, %v5794
    %v5839 = vmul.f32 %v5765, %v5795
    %v5840 = vmul.f32 %v5766, %v5796
    %v5841 = vmul.f32 %v5767, %v5797
    %v5842 = vmul.f32 %v5768, %v5794
    %v5843 = vmul.f32 %v5769, %v5795
    %v5844 = vmul.f32 %v5770, %v5796
    %v5845 = vmul.f32 %v5771, %v5797
    %v5846 = vmul.f32 %v5772, %v5794
    %v5847 = vmul.f32 %v5773, %v5795
    %v5848 = vmul.f32 %v5774, %v5796
    %v5849 = vmul.f32 %v5775, %v5797
    %v5850 = vmul.f32 %v5776, %v5794
    %v5851 = vmul.f32 %v5777, %v5795
    %v5852 = vmul.f32 %v5778, %v5796
    %v5853 = vmul.f32 %v5779, %v5797
    %v5854 = vmul.f32 %v5780, %v5794
    %v5855 = vmul.f32 %v5781, %v5795
    %v5856 = vmul.f32 %v5782, %v5796
    %v5857 = vmul.f32 %v5783, %v5797
    %v5858 = vmul.f32 %v5784, %v5794
    %v5859 = vmul.f32 %v5785, %v5795
    %v5860 = vmul.f32 %v5786, %v5796
    %v5861 = vmul.f32 %v5787, %v5797
    %v5862 = vmul.f32 %v5788, %v5794
    %v5863 = vmul.f32 %v5789, %v5795
    %v5864 = vmul.f32 %v5790, %v5796
    %v5865 = vmul.f32 %v5791, %v5797
    %v5866 = vadd.f32 %v5802, %v5803
    %v5867 = vadd.f32 %v5866, %v5804
    %v5868 = vadd.f32 %v5867, %v5805
    %5869 = vadd.xlane.f32.xlu0 %v5868
    %v5870 = vpop.xlane.xlu0 %5869
    %v5871 = vadd.f32 %v5806, %v5807
    %v5872 = vadd.f32 %v5871, %v5808
    %v5873 = vadd.f32 %v5872, %v5809
    %5874 = vadd.xlane.f32.xlu0 %v5873
    %v5875 = vpop.xlane.xlu0 %5874
    %v5876 = vadd.f32 %v5810, %v5811
    %v5877 = vadd.f32 %v5876, %v5812
    %v5878 = vadd.f32 %v5877, %v5813
    %5879 = vadd.xlane.f32.xlu0 %v5878
    %v5880 = vpop.xlane.xlu0 %5879
    %v5881 = vadd.f32 %v5814, %v5815
    %v5882 = vadd.f32 %v5881, %v5816
    %v5883 = vadd.f32 %v5882, %v5817
    %5884 = vadd.xlane.f32.xlu0 %v5883
    %v5885 = vpop.xlane.xlu0 %5884
    %v5886 = vadd.f32 %v5818, %v5819
    %v5887 = vadd.f32 %v5886, %v5820
    %v5888 = vadd.f32 %v5887, %v5821
    %5889 = vadd.xlane.f32.xlu0 %v5888
    %v5890 = vpop.xlane.xlu0 %5889
    %v5891 = vadd.f32 %v5822, %v5823
    %v5892 = vadd.f32 %v5891, %v5824
    %v5893 = vadd.f32 %v5892, %v5825
    %5894 = vadd.xlane.f32.xlu0 %v5893
    %v5895 = vpop.xlane.xlu0 %5894
    %v5896 = vadd.f32 %v5826, %v5827
    %v5897 = vadd.f32 %v5896, %v5828
    %v5898 = vadd.f32 %v5897, %v5829
    %5899 = vadd.xlane.f32.xlu0 %v5898
    %v5900 = vpop.xlane.xlu0 %5899
    %v5901 = vadd.f32 %v5830, %v5831
    %v5902 = vadd.f32 %v5901, %v5832
    %v5903 = vadd.f32 %v5902, %v5833
    %5904 = vadd.xlane.f32.xlu0 %v5903
    %v5905 = vpop.xlane.xlu0 %5904
    %v5906 = vadd.f32 %v5834, %v5835
    %v5907 = vadd.f32 %v5906, %v5836
    %v5908 = vadd.f32 %v5907, %v5837
    %5909 = vadd.xlane.f32.xlu0 %v5908
    %v5910 = vpop.xlane.xlu0 %5909
    %v5911 = vadd.f32 %v5838, %v5839
    %v5912 = vadd.f32 %v5911, %v5840
    %v5913 = vadd.f32 %v5912, %v5841
    %5914 = vadd.xlane.f32.xlu0 %v5913
    %v5915 = vpop.xlane.xlu0 %5914
    %v5916 = vadd.f32 %v5842, %v5843
    %v5917 = vadd.f32 %v5916, %v5844
    %v5918 = vadd.f32 %v5917, %v5845
    %5919 = vadd.xlane.f32.xlu0 %v5918
    %v5920 = vpop.xlane.xlu0 %5919
    %v5921 = vadd.f32 %v5846, %v5847
    %v5922 = vadd.f32 %v5921, %v5848
    %v5923 = vadd.f32 %v5922, %v5849
    %5924 = vadd.xlane.f32.xlu0 %v5923
    %v5925 = vpop.xlane.xlu0 %5924
    %v5926 = vadd.f32 %v5850, %v5851
    %v5927 = vadd.f32 %v5926, %v5852
    %v5928 = vadd.f32 %v5927, %v5853
    %5929 = vadd.xlane.f32.xlu0 %v5928
    %v5930 = vpop.xlane.xlu0 %5929
    %v5931 = vadd.f32 %v5854, %v5855
    %v5932 = vadd.f32 %v5931, %v5856
    %v5933 = vadd.f32 %v5932, %v5857
    %5934 = vadd.xlane.f32.xlu0 %v5933
    %v5935 = vpop.xlane.xlu0 %5934
    %v5936 = vadd.f32 %v5858, %v5859
    %v5937 = vadd.f32 %v5936, %v5860
    %v5938 = vadd.f32 %v5937, %v5861
    %5939 = vadd.xlane.f32.xlu0 %v5938
    %v5940 = vpop.xlane.xlu0 %5939
    %v5941 = vadd.f32 %v5862, %v5863
    %v5942 = vadd.f32 %v5941, %v5864
    %v5943 = vadd.f32 %v5942, %v5865
    %5944 = vadd.xlane.f32.xlu0 %v5943
    %v5945 = vpop.xlane.xlu0 %5944
    %v5946 = vld [vmem:[#allocation2] sm:$0x1]
    %v5948 = vperm.slane %v5946, 0
    %v5950 = vadd.f32 %v5870, %v5948
    %v5951 = vadd.f32 %v5875, %v5948
    %v5952 = vadd.f32 %v5880, %v5948
    %v5953 = vadd.f32 %v5885, %v5948
    %v5954 = vadd.f32 %v5890, %v5948
    %v5955 = vadd.f32 %v5895, %v5948
    %v5956 = vadd.f32 %v5900, %v5948
    %v5957 = vadd.f32 %v5905, %v5948
    %v5958 = vadd.f32 %v5910, %v5948
    %v5959 = vadd.f32 %v5915, %v5948
    %v5960 = vadd.f32 %v5920, %v5948
    %v5961 = vadd.f32 %v5925, %v5948
    %v5962 = vadd.f32 %v5930, %v5948
    %v5963 = vadd.f32 %v5935, %v5948
    %v5964 = vadd.f32 %v5940, %v5948
    %v5965 = vadd.f32 %v5945, %v5948
    %vm5966 = vcmask 7168
    %5967 = vst.msk [vmem:[%s7] sm:$0xff] %vm5966, %v5950
    %5968 = vst.msk [vmem:[%s7 + $0x8] sm:$0xff] %vm5966, %v5951
    %5969 = vst.msk [vmem:[%s7 + $0x10] sm:$0xff] %vm5966, %v5952
    %5970 = vst.msk [vmem:[%s7 + $0x18] sm:$0xff] %vm5966, %v5953
    %5971 = vst.msk [vmem:[%s7 + $0x20] sm:$0xff] %vm5966, %v5954
    %5972 = vst.msk [vmem:[%s7 + $0x28] sm:$0xff] %vm5966, %v5955
    %5973 = vst.msk [vmem:[%s7 + $0x30] sm:$0xff] %vm5966, %v5956
    %5974 = vst.msk [vmem:[%s7 + $0x38] sm:$0xff] %vm5966, %v5957
    %5975 = vst.msk [vmem:[%s7 + $0x40] sm:$0xff] %vm5966, %v5958
    %5976 = vst.msk [vmem:[%s7 + $0x48] sm:$0xff] %vm5966, %v5959
    %5977 = vst.msk [vmem:[%s7 + $0x50] sm:$0xff] %vm5966, %v5960
    %5978 = vst.msk [vmem:[%s7 + $0x58] sm:$0xff] %vm5966, %v5961
    %5979 = vst.msk [vmem:[%s7 + $0x60] sm:$0xff] %vm5966, %v5962
    %5980 = vst.msk [vmem:[%s7 + $0x68] sm:$0xff] %vm5966, %v5963
    %5981 = vst.msk [vmem:[%s7 + $0x70] sm:$0xff] %vm5966, %v5964
    %5982 = vst.msk [vmem:[%s7 + $0x78] sm:$0xff] %vm5966, %v5965
    // Predicated region
    $region50: #{tpu_custom_call.1} parent=1 // pred_check
      _
    $region51: #{tpu_custom_call.1} parent=1 // pred_check_branch
      %5984 = sbr.rel (0) target = $region53
    $region52: #{tpu_custom_call.1} parent=1 // pred_region
      _
    $region53: #{tpu_custom_call.1} parent=1 // pred_fallthru
      _
    // Predicated region
    $region54: #{tpu_custom_call.1} parent=1 // pred_check
      _
    $region55: #{tpu_custom_call.1} parent=1 // pred_check_branch
      %5986 = sbr.rel (0) target = $region57
    $region56: #{tpu_custom_call.1} parent=1 // pred_region
      _
    $region57: #{tpu_custom_call.1} parent=1 // pred_fallthru
      _
    %5987 = vsyncpa [#allocation4], 1
    %5988 = vsyncpa [#allocation6], 1
    %5989 = vsyncpa [#allocation9], 1

</llo_original>
